<compile_context>
chip_gen: v7x
topology: tpu7x:2x2x1
jax: 0.10.0
libtpu: 0.0.40
codegen_flags: <defaults>
</compile_context>

<pallas_src>
import functools

import jax
import jax.numpy as jnp
from jax import lax
from jax.experimental import pallas as pl
from jax.experimental.pallas import tpu as pltpu

_MM_DTYPE = jnp.float32    # jnp.bfloat16 on v6e/v7x for ~2x MXU throughput


# ---------------------------------------------------------------------------
# Wrapper-side helpers (plain JAX, traced once under jit)
# ---------------------------------------------------------------------------
def _round_up(x, m):
    return (x + m - 1) // m * m


def _interp_matrix(out_size, in_size):
    """Row-stochastic bilinear interpolation matrix, align_corners=True."""
    if in_size == 1:
        return jnp.ones((out_size, 1), jnp.float32)
    src = jnp.arange(out_size, dtype=jnp.float32) * (in_size - 1) / (out_size - 1)
    lo = jnp.clip(jnp.floor(src).astype(jnp.int32), 0, in_size - 2)
    frac = src - lo.astype(jnp.float32)
    rows = jnp.arange(out_size)
    m = jnp.zeros((out_size, in_size), jnp.float32)
    m = m.at[rows, lo].set(1.0 - frac)
    m = m.at[rows, lo + 1].add(frac)
    return m


def _upsample_operator(H1, W1, H2, W2):
    """(H1*W1, H2*W2) operator: bilinear 2x upsample (align_corners=True)
    followed by F.pad placement into the (H2, W2) canvas."""
    Ho, Wo = 2 * H1, 2 * W1
    dy0, dx0 = (H2 - Ho) // 2, (W2 - Wo) // 2
    a = jnp.pad(_interp_matrix(Ho, H1), ((dy0, H2 - Ho - dy0), (0, 0)))   # (H2, H1)
    b = jnp.pad(_interp_matrix(Wo, W1), ((dx0, W2 - Wo - dx0), (0, 0)))   # (W2, W1)
    k = jnp.einsum("yh,xw->hwyx", a, b)              # K[h,w,y,x] = a[y,h]*b[x,w]
    return k.reshape(H1 * W1, H2 * W2)


def _prep_weight(w_oihw, cout_pad, cin_pad=None):
    """(O, I, 3, 3) -> (9, cout_pad, cin_pad), tap-major (t = kh*3 + kw)."""
    O, I, KH, KW = w_oihw.shape
    cin_pad = I if cin_pad is None else cin_pad
    wp = jnp.pad(w_oihw.astype(jnp.float32),
                 ((0, cout_pad - O), (0, cin_pad - I), (0, 0), (0, 0)))
    return jnp.transpose(wp, (2, 3, 0, 1)).reshape(KH * KW, cout_pad, cin_pad) \
              .astype(_MM_DTYPE)


def _prep_affine(v, c_pad, fill):
    c = v.shape[0]
    return jnp.pad(v.astype(jnp.float32), (0, c_pad - c),
                   constant_values=fill).reshape(c_pad, 1)


def _tap_masks(N, H, W):
    """(9, N*H*W) {0,1} masks: tap (kh,kw) contributes at output (i,j) only
    when the source pixel (i+kh-1, j+kw-1) is inside the image."""
    ii = jnp.arange(H).reshape(H, 1)
    jj = jnp.arange(W).reshape(1, W)
    rows = []
    for kh in range(3):
        for kw in range(3):
            dh, dw = kh - 1, kw - 1
            ok = ((ii + dh >= 0) & (ii + dh < H) &
                  (jj + dw >= 0) & (jj + dw < W)).astype(jnp.float32)
            rows.append(jnp.tile(ok.reshape(-1), N))
    return jnp.stack(rows, axis=0)


def _full_spec(shape):
    nd = len(shape)
    return pl.BlockSpec(shape, lambda i, _nd=nd: (0,) * _nd)


# ---------------------------------------------------------------------------
# Fused Pallas kernel
# ---------------------------------------------------------------------------
def _shift_cols(x, off):
    """s[:, p] = x[:, p + off] when 0 <= p + off < ncols, else 0 (lane shift)."""
    if off == 0:
        return x
    c, ncols = x.shape
    z = jnp.zeros((c, abs(off)), x.dtype)
    if off > 0:
        return jnp.concatenate([x[:, off:], z], axis=1)
    return jnp.concatenate([z, x[:, :ncols + off]], axis=1)


def _up_fused_kernel(x1_ref, x2_ref, up_ref, masks_ref,
                     w1a_ref, w1b_ref, g1_ref, b1_ref,
                     w2_ref, g2_ref, b2_ref, o_ref, *, width):
    N, C1, _ = x1_ref.shape
    _, _, HW = x2_ref.shape
    NHW = N * HW
    Cout = o_ref.shape[1]
    eps = 1e-5
    inv_cnt = 1.0 / float(NHW)

    masks = masks_ref[...]                                           # (9, NHW)

    # ---- stage 1: bilinear upsample + F.pad as ONE matmul per image,
    # batched over all C1 channels; lane concat over images (HW-aligned).
    up_cm = jnp.concatenate(
        [jnp.dot(x1_ref[n], up_ref[...],
                 preferred_element_type=jnp.float32).astype(_MM_DTYPE)
         for n in range(N)], axis=1)                                 # (C1, NHW)
    x2_cm = jnp.concatenate([x2_ref[n] for n in range(N)], axis=1)   # (C2, NHW)

    # ---- 3x3 conv = 9 accumulated tap matmuls on the unshifted activation;
    # the tap offset is applied to the output contribution via a lane shift
    # plus boundary mask (implicit zero padding).  No im2col, no padded 4D
    # buffer, single f32 accumulator.
    def conv3x3(parts, w_refs):
        acc = None
        for kh in range(3):
            for kw in range(3):
                t = kh * 3 + kw
                off = (kh - 1) * width + (kw - 1)
                c = None
                for xp, wr in zip(parts, w_refs):
                    d = jnp.dot(wr[t], xp, preferred_element_type=jnp.float32)
                    c = d if c is None else c + d
                if off != 0:
                    c = _shift_cols(c, off) * masks[t:t + 1, :]
                acc = c if acc is None else acc + c
        return acc                                       # (Cout_p, NHW) f32

    # ---- single-pass BatchNorm (training-mode batch stats) + ReLU.
    def bn_relu(y, g_ref, b_ref):
        mean = jnp.sum(y, axis=1, keepdims=True) * inv_cnt
        ex2 = jnp.sum(y * y, axis=1, keepdims=True) * inv_cnt
        var = jnp.maximum(ex2 - mean * mean, 0.0)
        scale = lax.rsqrt(var + eps) * g_ref[...]
        shift = b_ref[...] - mean * scale
        return jnp.maximum(y * scale + shift, 0.0)

    # conv1 input channels are [x2, upsampled x1] (torch.cat order); the two
    # groups stay separate so the concat never materializes.
    h1 = bn_relu(conv3x3([x2_cm, up_cm], [w1a_ref, w1b_ref]),
                 g1_ref, b1_ref).astype(_MM_DTYPE)
    h2 = bn_relu(conv3x3([h1], [w2_ref]), g2_ref, b2_ref)

    # ---- lane-dense stores: (Cout, HW) per image, HW a multiple of 128 here.
    for n in range(N):
        o_ref[n] = h2[:Cout, n * HW:(n + 1) * HW]


# ---------------------------------------------------------------------------
# Up.forward (bilinear=True)
# ---------------------------------------------------------------------------
@jax.jit
def up_forward(x1, x2, params):
    """Up(bilinear=True).forward(x1, x2); BatchNorm in training mode."""
    N, C1, H1, W1 = x1.shape
    _, C2, H2, W2 = x2.shape
    Cmid = params["w1"].shape[0]
    Cout = params["w2"].shape[0]
    Cmid_p = _round_up(Cmid, 8)
    Cout_p = _round_up(Cout, 8)
    HW = H2 * W2

    up_op = _upsample_operator(H1, W1, H2, W2).astype(_MM_DTYPE)   # (H1W1, H2W2)
    masks = _tap_masks(N, H2, W2)                                  # (9, N*HW)
    w1a = _prep_weight(params["w1"][:, :C2], Cmid_p)               # (9, Cmid_p, C2)
    w1b = _prep_weight(params["w1"][:, C2:], Cmid_p)               # (9, Cmid_p, C1)
    w2m = _prep_weight(params["w2"], Cout_p, Cmid_p)               # (9, Cout_p, Cmid_p)
    g1 = _prep_affine(params["g1"], Cmid_p, 1.0)
    b1 = _prep_affine(params["b1"], Cmid_p, 0.0)
    g2 = _prep_affine(params["g2"], Cout_p, 1.0)
    b2 = _prep_affine(params["b2"], Cout_p, 0.0)

    x1_r = x1.astype(_MM_DTYPE).reshape(N, C1, H1 * W1)
    x2_r = x2.astype(_MM_DTYPE).reshape(N, C2, HW)

    kernel = functools.partial(_up_fused_kernel, width=W2)
    out = pl.pallas_call(
        kernel,
        out_shape=jax.ShapeDtypeStruct((N, Cout, HW), jnp.float32),
        grid=(1,),
        in_specs=[_full_spec(x1_r.shape), _full_spec(x2_r.shape),
                  _full_spec(up_op.shape), _full_spec(masks.shape),
                  _full_spec(w1a.shape), _full_spec(w1b.shape),
                  _full_spec(g1.shape), _full_spec(b1.shape),
                  _full_spec(w2m.shape), _full_spec(g2.shape), _full_spec(b2.shape)],
        out_specs=_full_spec((N, Cout, HW)),
        # TODO(synk): for production UNet shapes (v7x 64 MiB VMEM) tile the
        # N*H*W axis with BN sum/sum-sq accumulators, mark that axis parallel,
        # and raise vmem_limit_bytes; the toy shapes fit a single block.
        compiler_params=pltpu.CompilerParams(dimension_semantics=("arbitrary",)),
    )(x1_r, x2_r, up_op, masks, w1a, w1b, g1, b1, w2m, g2, b2)

    return out.reshape(N, Cout, H2, W2)                  # contiguous (free)


# ---------------------------------------------------------------------------
# Pure-JAX reference (sanity check)
# ---------------------------------------------------------------------------
def _ref_forward(x1, x2, params):
    A = _interp_matrix(2 * x1.shape[2], x1.shape[2])
    B = _interp_matrix(2 * x1.shape[3], x1.shape[3])
    x1u = jnp.einsum("ph,qw,nchw->ncpq", A, B, x1,
                     precision=lax.Precision.HIGHEST)
    diff_y = x2.shape[2] - x1u.shape[2]
    diff_x = x2.shape[3] - x1u.shape[3]
    x1u = jnp.pad(x1u, ((0, 0), (0, 0),
                        (diff_y // 2, diff_y - diff_y // 2),
                        (diff_x // 2, diff_x - diff_x // 2)))
    x = jnp.concatenate([x2, x1u], axis=1)

    def conv(xx, w):
        return lax.conv_general_dilated(
            xx, w, (1, 1), "SAME",
            dimension_numbers=("NCHW", "OIHW", "NCHW"),
            precision=lax.Precision.HIGHEST)

    def bn_relu(xx, g, b):
        mean = jnp.mean(xx, axis=(0, 2, 3), keepdims=True)
        var = jnp.mean((xx - mean) ** 2, axis=(0, 2, 3), keepdims=True)
        y = (xx - mean) * lax.rsqrt(var + 1e-5)
        y = y * g.reshape(1, -1, 1, 1) + b.reshape(1, -1, 1, 1)
        return jnp.maximum(y, 0.0)

    h = bn_relu(conv(x, params["w1"]), params["g1"], params["b1"])
    return bn_relu(conv(h, params["w2"]), params["g2"], params["b2"])


# ---------------------------------------------------------------------------
if __name__ == "__main__":
    key = jax.random.PRNGKey(0)
    k1, k2, kw1, kw2, kg1, kb1, kg2, kb2 = jax.random.split(key, 8)

    # Up(in_channels=8, out_channels=4, bilinear=True):
    #   x1: (N, in/2, H/2, W/2), x2: (N, in/2, H, W); concat -> in_channels=8
    #   DoubleConv(8, 4, mid=4)
    N = 2
    in_channels, out_channels = 8, 4
    mid_channels = in_channels // 2
    H2, W2 = 16, 16
    H1, W1 = 8, 8
    c_skip = in_channels // 2

    x1 = jax.random.normal(k1, (N, c_skip, H1, W1), jnp.float32)
    x2 = jax.random.normal(k2, (N, c_skip, H2, W2), jnp.float32)

    params = dict(
        w1=0.3 * jax.random.normal(kw1, (mid_channels, in_channels, 3, 3), jnp.float32),
        g1=1.0 + 0.1 * jax.random.normal(kg1, (mid_channels,), jnp.float32),
        b1=0.1 * jax.random.normal(kb1, (mid_channels,), jnp.float32),
        w2=0.3 * jax.random.normal(kw2, (out_channels, mid_channels, 3, 3), jnp.float32),
        g2=1.0 + 0.1 * jax.random.normal(kg2, (out_channels,), jnp.float32),
        b2=0.1 * jax.random.normal(kb2, (out_channels,), jnp.float32),
    )

    out = jax.block_until_ready(up_forward(x1, x2, params))
    assert out.shape == (N, out_channels, H2, W2), out.shape
    assert bool(jnp.all(jnp.isfinite(out)))

    ref = _ref_forward(x1, x2, params)
    err = float(jnp.max(jnp.abs(out - ref)))
    assert err < 1e-2, f"max abs err vs reference: {err}"

    print("KERNEL_OK")
</pallas_src>

<mosaic_0001>
module attributes {stable_mosaic.version = 11 : i64} {
  func.func private @main(%arg0: i32) attributes {dimension_semantics = [#tpu.dimension_semantics<core_parallel>], iteration_bounds = array<i64: 2>, tpu.core_type = #tpu.core_type<sc_scalar_subcore>, window_params = []} {
    return
  }
}

module attributes {stable_mosaic.version = 11 : i64} {
  func.func private @main(%arg0: i32) attributes {dimension_semantics = [#tpu.dimension_semantics<core_parallel>], iteration_bounds = array<i64: 2>, tpu.core_type = #tpu.core_type<sc_scalar_subcore>, window_params = []} {
    return
  }
}

module attributes {stable_mosaic.version = 11 : i64} {
  func.func @_up_fused_kernel(%arg0: i32, %arg1: memref<2x4x64xf32, #tpu.memory_space<vmem>>, %arg2: memref<2x4x256xf32, #tpu.memory_space<vmem>>, %arg3: memref<64x256xf32, #tpu.memory_space<vmem>>, %arg4: memref<9x512xf32, #tpu.memory_space<vmem>>, %arg5: memref<9x8x4xf32, #tpu.memory_space<vmem>>, %arg6: memref<9x8x4xf32, #tpu.memory_space<vmem>>, %arg7: memref<8x1xf32, #tpu.memory_space<vmem>>, %arg8: memref<8x1xf32, #tpu.memory_space<vmem>>, %arg9: memref<9x8x8xf32, #tpu.memory_space<vmem>>, %arg10: memref<8x1xf32, #tpu.memory_space<vmem>>, %arg11: memref<8x1xf32, #tpu.memory_space<vmem>>, %arg12: memref<2x4x256xf32, #tpu.memory_space<vmem>>) attributes {dimension_semantics = [#tpu.dimension_semantics<arbitrary>], iteration_bounds = array<i64: 1>, scalar_prefetch = 0 : i64, scratch_operands = 0 : i64, tpu.core_type = #tpu.core_type<tc>, window_params = [{pipeline_mode = #tpu.pipeline_mode<synchronous>, transform_indices = @transform_0, window_bounds = array<i64: 2, 4, 64>}, {pipeline_mode = #tpu.pipeline_mode<synchronous>, transform_indices = @transform_1, window_bounds = array<i64: 2, 4, 256>}, {pipeline_mode = #tpu.pipeline_mode<synchronous>, transform_indices = @transform_2, window_bounds = array<i64: 64, 256>}, {pipeline_mode = #tpu.pipeline_mode<synchronous>, transform_indices = @transform_3, window_bounds = array<i64: 9, 512>}, {pipeline_mode = #tpu.pipeline_mode<synchronous>, transform_indices = @transform_4, window_bounds = array<i64: 9, 8, 4>}, {pipeline_mode = #tpu.pipeline_mode<synchronous>, transform_indices = @transform_5, window_bounds = array<i64: 9, 8, 4>}, {pipeline_mode = #tpu.pipeline_mode<synchronous>, transform_indices = @transform_6, window_bounds = array<i64: 8, 1>}, {pipeline_mode = #tpu.pipeline_mode<synchronous>, transform_indices = @transform_7, window_bounds = array<i64: 8, 1>}, {pipeline_mode = #tpu.pipeline_mode<synchronous>, transform_indices = @transform_8, window_bounds = array<i64: 9, 8, 8>}, {pipeline_mode = #tpu.pipeline_mode<synchronous>, transform_indices = @transform_9, window_bounds = array<i64: 8, 1>}, {pipeline_mode = #tpu.pipeline_mode<synchronous>, transform_indices = @transform_10, window_bounds = array<i64: 8, 1>}, {pipeline_mode = #tpu.pipeline_mode<synchronous>, transform_indices = @transform_11, window_bounds = array<i64: 2, 4, 256>}]} {
    %c0 = arith.constant 0 : index
    %c0_0 = arith.constant 0 : index
    %0 = vector.load %arg4[%c0, %c0_0] : memref<9x512xf32, #tpu.memory_space<vmem>>, vector<9x512xf32>
    %c0_1 = arith.constant 0 : index
    %c0_2 = arith.constant 0 : index
    %c0_3 = arith.constant 0 : index
    %1 = vector.load %arg1[%c0_1, %c0_2, %c0_3] : memref<2x4x64xf32, #tpu.memory_space<vmem>>, vector<1x4x64xf32>
    %2 = vector.shape_cast %1 : vector<1x4x64xf32> to vector<4x64xf32>
    %c0_4 = arith.constant 0 : index
    %c0_5 = arith.constant 0 : index
    %3 = vector.load %arg3[%c0_4, %c0_5] : memref<64x256xf32, #tpu.memory_space<vmem>>, vector<64x256xf32>
    %cst = arith.constant dense<0.000000e+00> : vector<4x256xf32>
    %4 = tpu.matmul %2, %3, %cst {dimension_numbers = #tpu.dot_dimension_numbers<[1], [0], [0], [1], [0, 0, 1, 1], [], []>} : vector<4x64xf32>, vector<64x256xf32>, vector<4x256xf32> -> vector<4x256xf32>
    %c1 = arith.constant 1 : index
    %c0_6 = arith.constant 0 : index
    %c0_7 = arith.constant 0 : index
    %5 = vector.load %arg1[%c1, %c0_6, %c0_7] : memref<2x4x64xf32, #tpu.memory_space<vmem>>, vector<1x4x64xf32>
    %6 = vector.shape_cast %5 : vector<1x4x64xf32> to vector<4x64xf32>
    %c0_8 = arith.constant 0 : index
    %c0_9 = arith.constant 0 : index
    %7 = vector.load %arg3[%c0_8, %c0_9] : memref<64x256xf32, #tpu.memory_space<vmem>>, vector<64x256xf32>
    %cst_10 = arith.constant dense<0.000000e+00> : vector<4x256xf32>
    %8 = tpu.matmul %6, %7, %cst_10 {dimension_numbers = #tpu.dot_dimension_numbers<[1], [0], [0], [1], [0, 0, 1, 1], [], []>} : vector<4x64xf32>, vector<64x256xf32>, vector<4x256xf32> -> vector<4x256xf32>
    %9 = tpu.concatenate %4, %8 in 1 : vector<4x256xf32>, vector<4x256xf32> -> vector<4x512xf32>
    %c0_11 = arith.constant 0 : index
    %c0_12 = arith.constant 0 : index
    %c0_13 = arith.constant 0 : index
    %10 = vector.load %arg2[%c0_11, %c0_12, %c0_13] : memref<2x4x256xf32, #tpu.memory_space<vmem>>, vector<1x4x256xf32>
    %11 = vector.shape_cast %10 : vector<1x4x256xf32> to vector<4x256xf32>
    %c1_14 = arith.constant 1 : index
    %c0_15 = arith.constant 0 : index
    %c0_16 = arith.constant 0 : index
    %12 = vector.load %arg2[%c1_14, %c0_15, %c0_16] : memref<2x4x256xf32, #tpu.memory_space<vmem>>, vector<1x4x256xf32>
    %13 = vector.shape_cast %12 : vector<1x4x256xf32> to vector<4x256xf32>
    %14 = tpu.concatenate %11, %13 in 1 : vector<4x256xf32>, vector<4x256xf32> -> vector<4x512xf32>
    %c0_17 = arith.constant 0 : index
    %c0_18 = arith.constant 0 : index
    %c0_19 = arith.constant 0 : index
    %15 = vector.load %arg5[%c0_17, %c0_18, %c0_19] : memref<9x8x4xf32, #tpu.memory_space<vmem>>, vector<1x8x4xf32>
    %16 = vector.shape_cast %15 : vector<1x8x4xf32> to vector<8x4xf32>
    %cst_20 = arith.constant dense<0.000000e+00> : vector<8x512xf32>
    %17 = tpu.matmul %16, %14, %cst_20 {dimension_numbers = #tpu.dot_dimension_numbers<[1], [0], [0], [1], [0, 0, 1, 1], [], []>} : vector<8x4xf32>, vector<4x512xf32>, vector<8x512xf32> -> vector<8x512xf32>
    %c0_21 = arith.constant 0 : index
    %c0_22 = arith.constant 0 : index
    %c0_23 = arith.constant 0 : index
    %18 = vector.load %arg6[%c0_21, %c0_22, %c0_23] : memref<9x8x4xf32, #tpu.memory_space<vmem>>, vector<1x8x4xf32>
    %19 = vector.shape_cast %18 : vector<1x8x4xf32> to vector<8x4xf32>
    %cst_24 = arith.constant dense<0.000000e+00> : vector<8x512xf32>
    %20 = tpu.matmul %19, %9, %cst_24 {dimension_numbers = #tpu.dot_dimension_numbers<[1], [0], [0], [1], [0, 0, 1, 1], [], []>} : vector<8x4xf32>, vector<4x512xf32>, vector<8x512xf32> -> vector<8x512xf32>
    %21 = arith.addf %17, %20 : vector<8x512xf32>
    %cst_25 = arith.constant 0.000000e+00 : f32
    %22 = vector.broadcast %cst_25 : f32 to vector<8x17xf32>
    %23 = vector.extract_strided_slice %21 {offsets = [0, 0], sizes = [8, 495], strides = [1, 1]} : vector<8x512xf32> to vector<8x495xf32>
    %24 = tpu.concatenate %22, %23 in 1 : vector<8x17xf32>, vector<8x495xf32> -> vector<8x512xf32>
    %25 = vector.extract_strided_slice %0 {offsets = [0, 0], sizes = [1, 512], strides = [1, 1]} : vector<9x512xf32> to vector<1x512xf32>
    %26 = vector.broadcast %25 : vector<1x512xf32> to vector<8x512xf32>
    %27 = arith.mulf %24, %26 : vector<8x512xf32>
    %c1_26 = arith.constant 1 : index
    %c0_27 = arith.constant 0 : index
    %c0_28 = arith.constant 0 : index
    %28 = vector.load %arg5[%c1_26, %c0_27, %c0_28] : memref<9x8x4xf32, #tpu.memory_space<vmem>>, vector<1x8x4xf32>
    %29 = vector.shape_cast %28 : vector<1x8x4xf32> to vector<8x4xf32>
    %cst_29 = arith.constant dense<0.000000e+00> : vector<8x512xf32>
    %30 = tpu.matmul %29, %14, %cst_29 {dimension_numbers = #tpu.dot_dimension_numbers<[1], [0], [0], [1], [0, 0, 1, 1], [], []>} : vector<8x4xf32>, vector<4x512xf32>, vector<8x512xf32> -> vector<8x512xf32>
    %c1_30 = arith.constant 1 : index
    %c0_31 = arith.constant 0 : index
    %c0_32 = arith.constant 0 : index
    %31 = vector.load %arg6[%c1_30, %c0_31, %c0_32] : memref<9x8x4xf32, #tpu.memory_space<vmem>>, vector<1x8x4xf32>
    %32 = vector.shape_cast %31 : vector<1x8x4xf32> to vector<8x4xf32>
    %cst_33 = arith.constant dense<0.000000e+00> : vector<8x512xf32>
    %33 = tpu.matmul %32, %9, %cst_33 {dimension_numbers = #tpu.dot_dimension_numbers<[1], [0], [0], [1], [0, 0, 1, 1], [], []>} : vector<8x4xf32>, vector<4x512xf32>, vector<8x512xf32> -> vector<8x512xf32>
    %34 = arith.addf %30, %33 : vector<8x512xf32>
    %cst_34 = arith.constant 0.000000e+00 : f32
    %35 = vector.broadcast %cst_34 : f32 to vector<8x16xf32>
    %36 = vector.extract_strided_slice %34 {offsets = [0, 0], sizes = [8, 496], strides = [1, 1]} : vector<8x512xf32> to vector<8x496xf32>
    %37 = tpu.concatenate %35, %36 in 1 : vector<8x16xf32>, vector<8x496xf32> -> vector<8x512xf32>
    %38 = vector.extract_strided_slice %0 {offsets = [1, 0], sizes = [1, 512], strides = [1, 1]} : vector<9x512xf32> to vector<1x512xf32>
    %39 = vector.broadcast %38 : vector<1x512xf32> to vector<8x512xf32>
    %40 = arith.mulf %37, %39 : vector<8x512xf32>
    %41 = arith.addf %27, %40 : vector<8x512xf32>
    %c2 = arith.constant 2 : index
    %c0_35 = arith.constant 0 : index
    %c0_36 = arith.constant 0 : index
    %42 = vector.load %arg5[%c2, %c0_35, %c0_36] : memref<9x8x4xf32, #tpu.memory_space<vmem>>, vector<1x8x4xf32>
    %43 = vector.shape_cast %42 : vector<1x8x4xf32> to vector<8x4xf32>
    %cst_37 = arith.constant dense<0.000000e+00> : vector<8x512xf32>
    %44 = tpu.matmul %43, %14, %cst_37 {dimension_numbers = #tpu.dot_dimension_numbers<[1], [0], [0], [1], [0, 0, 1, 1], [], []>} : vector<8x4xf32>, vector<4x512xf32>, vector<8x512xf32> -> vector<8x512xf32>
    %c2_38 = arith.constant 2 : index
    %c0_39 = arith.constant 0 : index
    %c0_40 = arith.constant 0 : index
    %45 = vector.load %arg6[%c2_38, %c0_39, %c0_40] : memref<9x8x4xf32, #tpu.memory_space<vmem>>, vector<1x8x4xf32>
    %46 = vector.shape_cast %45 : vector<1x8x4xf32> to vector<8x4xf32>
    %cst_41 = arith.constant dense<0.000000e+00> : vector<8x512xf32>
    %47 = tpu.matmul %46, %9, %cst_41 {dimension_numbers = #tpu.dot_dimension_numbers<[1], [0], [0], [1], [0, 0, 1, 1], [], []>} : vector<8x4xf32>, vector<4x512xf32>, vector<8x512xf32> -> vector<8x512xf32>
    %48 = arith.addf %44, %47 : vector<8x512xf32>
    %cst_42 = arith.constant 0.000000e+00 : f32
    %49 = vector.broadcast %cst_42 : f32 to vector<8x15xf32>
    %50 = vector.extract_strided_slice %48 {offsets = [0, 0], sizes = [8, 497], strides = [1, 1]} : vector<8x512xf32> to vector<8x497xf32>
    %51 = tpu.concatenate %49, %50 in 1 : vector<8x15xf32>, vector<8x497xf32> -> vector<8x512xf32>
    %52 = vector.extract_strided_slice %0 {offsets = [2, 0], sizes = [1, 512], strides = [1, 1]} : vector<9x512xf32> to vector<1x512xf32>
    %53 = vector.broadcast %52 : vector<1x512xf32> to vector<8x512xf32>
    %54 = arith.mulf %51, %53 : vector<8x512xf32>
    %55 = arith.addf %41, %54 : vector<8x512xf32>
    %c3 = arith.constant 3 : index
    %c0_43 = arith.constant 0 : index
    %c0_44 = arith.constant 0 : index
    %56 = vector.load %arg5[%c3, %c0_43, %c0_44] : memref<9x8x4xf32, #tpu.memory_space<vmem>>, vector<1x8x4xf32>
    %57 = vector.shape_cast %56 : vector<1x8x4xf32> to vector<8x4xf32>
    %cst_45 = arith.constant dense<0.000000e+00> : vector<8x512xf32>
    %58 = tpu.matmul %57, %14, %cst_45 {dimension_numbers = #tpu.dot_dimension_numbers<[1], [0], [0], [1], [0, 0, 1, 1], [], []>} : vector<8x4xf32>, vector<4x512xf32>, vector<8x512xf32> -> vector<8x512xf32>
    %c3_46 = arith.constant 3 : index
    %c0_47 = arith.constant 0 : index
    %c0_48 = arith.constant 0 : index
    %59 = vector.load %arg6[%c3_46, %c0_47, %c0_48] : memref<9x8x4xf32, #tpu.memory_space<vmem>>, vector<1x8x4xf32>
    %60 = vector.shape_cast %59 : vector<1x8x4xf32> to vector<8x4xf32>
    %cst_49 = arith.constant dense<0.000000e+00> : vector<8x512xf32>
    %61 = tpu.matmul %60, %9, %cst_49 {dimension_numbers = #tpu.dot_dimension_numbers<[1], [0], [0], [1], [0, 0, 1, 1], [], []>} : vector<8x4xf32>, vector<4x512xf32>, vector<8x512xf32> -> vector<8x512xf32>
    %62 = arith.addf %58, %61 : vector<8x512xf32>
    %cst_50 = arith.constant 0.000000e+00 : f32
    %63 = vector.broadcast %cst_50 : f32 to vector<8x1xf32>
    %64 = vector.extract_strided_slice %62 {offsets = [0, 0], sizes = [8, 511], strides = [1, 1]} : vector<8x512xf32> to vector<8x511xf32>
    %65 = tpu.concatenate %63, %64 in 1 : vector<8x1xf32>, vector<8x511xf32> -> vector<8x512xf32>
    %66 = vector.extract_strided_slice %0 {offsets = [3, 0], sizes = [1, 512], strides = [1, 1]} : vector<9x512xf32> to vector<1x512xf32>
    %67 = vector.broadcast %66 : vector<1x512xf32> to vector<8x512xf32>
    %68 = arith.mulf %65, %67 : vector<8x512xf32>
    %69 = arith.addf %55, %68 : vector<8x512xf32>
    %c4 = arith.constant 4 : index
    %c0_51 = arith.constant 0 : index
    %c0_52 = arith.constant 0 : index
    %70 = vector.load %arg5[%c4, %c0_51, %c0_52] : memref<9x8x4xf32, #tpu.memory_space<vmem>>, vector<1x8x4xf32>
    %71 = vector.shape_cast %70 : vector<1x8x4xf32> to vector<8x4xf32>
    %cst_53 = arith.constant dense<0.000000e+00> : vector<8x512xf32>
    %72 = tpu.matmul %71, %14, %cst_53 {dimension_numbers = #tpu.dot_dimension_numbers<[1], [0], [0], [1], [0, 0, 1, 1], [], []>} : vector<8x4xf32>, vector<4x512xf32>, vector<8x512xf32> -> vector<8x512xf32>
    %c4_54 = arith.constant 4 : index
    %c0_55 = arith.constant 0 : index
    %c0_56 = arith.constant 0 : index
    %73 = vector.load %arg6[%c4_54, %c0_55, %c0_56] : memref<9x8x4xf32, #tpu.memory_space<vmem>>, vector<1x8x4xf32>
    %74 = vector.shape_cast %73 : vector<1x8x4xf32> to vector<8x4xf32>
    %cst_57 = arith.constant dense<0.000000e+00> : vector<8x512xf32>
    %75 = tpu.matmul %74, %9, %cst_57 {dimension_numbers = #tpu.dot_dimension_numbers<[1], [0], [0], [1], [0, 0, 1, 1], [], []>} : vector<8x4xf32>, vector<4x512xf32>, vector<8x512xf32> -> vector<8x512xf32>
    %76 = arith.addf %72, %75 : vector<8x512xf32>
    %77 = arith.addf %69, %76 : vector<8x512xf32>
    %c5 = arith.constant 5 : index
    %c0_58 = arith.constant 0 : index
    %c0_59 = arith.constant 0 : index
    %78 = vector.load %arg5[%c5, %c0_58, %c0_59] : memref<9x8x4xf32, #tpu.memory_space<vmem>>, vector<1x8x4xf32>
    %79 = vector.shape_cast %78 : vector<1x8x4xf32> to vector<8x4xf32>
    %cst_60 = arith.constant dense<0.000000e+00> : vector<8x512xf32>
    %80 = tpu.matmul %79, %14, %cst_60 {dimension_numbers = #tpu.dot_dimension_numbers<[1], [0], [0], [1], [0, 0, 1, 1], [], []>} : vector<8x4xf32>, vector<4x512xf32>, vector<8x512xf32> -> vector<8x512xf32>
    %c5_61 = arith.constant 5 : index
    %c0_62 = arith.constant 0 : index
    %c0_63 = arith.constant 0 : index
    %81 = vector.load %arg6[%c5_61, %c0_62, %c0_63] : memref<9x8x4xf32, #tpu.memory_space<vmem>>, vector<1x8x4xf32>
    %82 = vector.shape_cast %81 : vector<1x8x4xf32> to vector<8x4xf32>
    %cst_64 = arith.constant dense<0.000000e+00> : vector<8x512xf32>
    %83 = tpu.matmul %82, %9, %cst_64 {dimension_numbers = #tpu.dot_dimension_numbers<[1], [0], [0], [1], [0, 0, 1, 1], [], []>} : vector<8x4xf32>, vector<4x512xf32>, vector<8x512xf32> -> vector<8x512xf32>
    %84 = arith.addf %80, %83 : vector<8x512xf32>
    %cst_65 = arith.constant 0.000000e+00 : f32
    %85 = vector.broadcast %cst_65 : f32 to vector<8x1xf32>
    %86 = vector.extract_strided_slice %84 {offsets = [0, 1], sizes = [8, 511], strides = [1, 1]} : vector<8x512xf32> to vector<8x511xf32>
    %87 = tpu.concatenate %86, %85 in 1 : vector<8x511xf32>, vector<8x1xf32> -> vector<8x512xf32>
    %88 = vector.extract_strided_slice %0 {offsets = [5, 0], sizes = [1, 512], strides = [1, 1]} : vector<9x512xf32> to vector<1x512xf32>
    %89 = vector.broadcast %88 : vector<1x512xf32> to vector<8x512xf32>
    %90 = arith.mulf %87, %89 : vector<8x512xf32>
    %91 = arith.addf %77, %90 : vector<8x512xf32>
    %c6 = arith.constant 6 : index
    %c0_66 = arith.constant 0 : index
    %c0_67 = arith.constant 0 : index
    %92 = vector.load %arg5[%c6, %c0_66, %c0_67] : memref<9x8x4xf32, #tpu.memory_space<vmem>>, vector<1x8x4xf32>
    %93 = vector.shape_cast %92 : vector<1x8x4xf32> to vector<8x4xf32>
    %cst_68 = arith.constant dense<0.000000e+00> : vector<8x512xf32>
    %94 = tpu.matmul %93, %14, %cst_68 {dimension_numbers = #tpu.dot_dimension_numbers<[1], [0], [0], [1], [0, 0, 1, 1], [], []>} : vector<8x4xf32>, vector<4x512xf32>, vector<8x512xf32> -> vector<8x512xf32>
    %c6_69 = arith.constant 6 : index
    %c0_70 = arith.constant 0 : index
    %c0_71 = arith.constant 0 : index
    %95 = vector.load %arg6[%c6_69, %c0_70, %c0_71] : memref<9x8x4xf32, #tpu.memory_space<vmem>>, vector<1x8x4xf32>
    %96 = vector.shape_cast %95 : vector<1x8x4xf32> to vector<8x4xf32>
    %cst_72 = arith.constant dense<0.000000e+00> : vector<8x512xf32>
    %97 = tpu.matmul %96, %9, %cst_72 {dimension_numbers = #tpu.dot_dimension_numbers<[1], [0], [0], [1], [0, 0, 1, 1], [], []>} : vector<8x4xf32>, vector<4x512xf32>, vector<8x512xf32> -> vector<8x512xf32>
    %98 = arith.addf %94, %97 : vector<8x512xf32>
    %cst_73 = arith.constant 0.000000e+00 : f32
    %99 = vector.broadcast %cst_73 : f32 to vector<8x15xf32>
    %100 = vector.extract_strided_slice %98 {offsets = [0, 15], sizes = [8, 497], strides = [1, 1]} : vector<8x512xf32> to vector<8x497xf32>
    %101 = tpu.concatenate %100, %99 in 1 : vector<8x497xf32>, vector<8x15xf32> -> vector<8x512xf32>
    %102 = vector.extract_strided_slice %0 {offsets = [6, 0], sizes = [1, 512], strides = [1, 1]} : vector<9x512xf32> to vector<1x512xf32>
    %103 = vector.broadcast %102 : vector<1x512xf32> to vector<8x512xf32>
    %104 = arith.mulf %101, %103 : vector<8x512xf32>
    %105 = arith.addf %91, %104 : vector<8x512xf32>
    %c7 = arith.constant 7 : index
    %c0_74 = arith.constant 0 : index
    %c0_75 = arith.constant 0 : index
    %106 = vector.load %arg5[%c7, %c0_74, %c0_75] : memref<9x8x4xf32, #tpu.memory_space<vmem>>, vector<1x8x4xf32>
    %107 = vector.shape_cast %106 : vector<1x8x4xf32> to vector<8x4xf32>
    %cst_76 = arith.constant dense<0.000000e+00> : vector<8x512xf32>
    %108 = tpu.matmul %107, %14, %cst_76 {dimension_numbers = #tpu.dot_dimension_numbers<[1], [0], [0], [1], [0, 0, 1, 1], [], []>} : vector<8x4xf32>, vector<4x512xf32>, vector<8x512xf32> -> vector<8x512xf32>
    %c7_77 = arith.constant 7 : index
    %c0_78 = arith.constant 0 : index
    %c0_79 = arith.constant 0 : index
    %109 = vector.load %arg6[%c7_77, %c0_78, %c0_79] : memref<9x8x4xf32, #tpu.memory_space<vmem>>, vector<1x8x4xf32>
    %110 = vector.shape_cast %109 : vector<1x8x4xf32> to vector<8x4xf32>
    %cst_80 = arith.constant dense<0.000000e+00> : vector<8x512xf32>
    %111 = tpu.matmul %110, %9, %cst_80 {dimension_numbers = #tpu.dot_dimension_numbers<[1], [0], [0], [1], [0, 0, 1, 1], [], []>} : vector<8x4xf32>, vector<4x512xf32>, vector<8x512xf32> -> vector<8x512xf32>
    %112 = arith.addf %108, %111 : vector<8x512xf32>
    %cst_81 = arith.constant 0.000000e+00 : f32
    %113 = vector.broadcast %cst_81 : f32 to vector<8x16xf32>
    %114 = vector.extract_strided_slice %112 {offsets = [0, 16], sizes = [8, 496], strides = [1, 1]} : vector<8x512xf32> to vector<8x496xf32>
    %115 = tpu.concatenate %114, %113 in 1 : vector<8x496xf32>, vector<8x16xf32> -> vector<8x512xf32>
    %116 = vector.extract_strided_slice %0 {offsets = [7, 0], sizes = [1, 512], strides = [1, 1]} : vector<9x512xf32> to vector<1x512xf32>
    %117 = vector.broadcast %116 : vector<1x512xf32> to vector<8x512xf32>
    %118 = arith.mulf %115, %117 : vector<8x512xf32>
    %119 = arith.addf %105, %118 : vector<8x512xf32>
    %c8 = arith.constant 8 : index
    %c0_82 = arith.constant 0 : index
    %c0_83 = arith.constant 0 : index
    %120 = vector.load %arg5[%c8, %c0_82, %c0_83] : memref<9x8x4xf32, #tpu.memory_space<vmem>>, vector<1x8x4xf32>
    %121 = vector.shape_cast %120 : vector<1x8x4xf32> to vector<8x4xf32>
    %cst_84 = arith.constant dense<0.000000e+00> : vector<8x512xf32>
    %122 = tpu.matmul %121, %14, %cst_84 {dimension_numbers = #tpu.dot_dimension_numbers<[1], [0], [0], [1], [0, 0, 1, 1], [], []>} : vector<8x4xf32>, vector<4x512xf32>, vector<8x512xf32> -> vector<8x512xf32>
    %c8_85 = arith.constant 8 : index
    %c0_86 = arith.constant 0 : index
    %c0_87 = arith.constant 0 : index
    %123 = vector.load %arg6[%c8_85, %c0_86, %c0_87] : memref<9x8x4xf32, #tpu.memory_space<vmem>>, vector<1x8x4xf32>
    %124 = vector.shape_cast %123 : vector<1x8x4xf32> to vector<8x4xf32>
    %cst_88 = arith.constant dense<0.000000e+00> : vector<8x512xf32>
    %125 = tpu.matmul %124, %9, %cst_88 {dimension_numbers = #tpu.dot_dimension_numbers<[1], [0], [0], [1], [0, 0, 1, 1], [], []>} : vector<8x4xf32>, vector<4x512xf32>, vector<8x512xf32> -> vector<8x512xf32>
    %126 = arith.addf %122, %125 : vector<8x512xf32>
    %cst_89 = arith.constant 0.000000e+00 : f32
    %127 = vector.broadcast %cst_89 : f32 to vector<8x17xf32>
    %128 = vector.extract_strided_slice %126 {offsets = [0, 17], sizes = [8, 495], strides = [1, 1]} : vector<8x512xf32> to vector<8x495xf32>
    %129 = tpu.concatenate %128, %127 in 1 : vector<8x495xf32>, vector<8x17xf32> -> vector<8x512xf32>
    %130 = vector.extract_strided_slice %0 {offsets = [8, 0], sizes = [1, 512], strides = [1, 1]} : vector<9x512xf32> to vector<1x512xf32>
    %131 = vector.broadcast %130 : vector<1x512xf32> to vector<8x512xf32>
    %132 = arith.mulf %129, %131 : vector<8x512xf32>
    %133 = arith.addf %119, %132 : vector<8x512xf32>
    %cst_90 = arith.constant dense<0.000000e+00> : vector<8xf32>
    %134 = vector.multi_reduction <add>, %133, %cst_90 [1] : vector<8x512xf32> to vector<8xf32>
    %135 = vector.shape_cast %134 : vector<8xf32> to vector<8x1xf32>
    %cst_91 = arith.constant 0.001953125 : f32
    %136 = vector.broadcast %cst_91 : f32 to vector<8x1xf32>
    %137 = arith.mulf %135, %136 : vector<8x1xf32>
    %138 = arith.mulf %133, %133 : vector<8x512xf32>
    %cst_92 = arith.constant dense<0.000000e+00> : vector<8xf32>
    %139 = vector.multi_reduction <add>, %138, %cst_92 [1] : vector<8x512xf32> to vector<8xf32>
    %140 = vector.shape_cast %139 : vector<8xf32> to vector<8x1xf32>
    %cst_93 = arith.constant 0.001953125 : f32
    %141 = vector.broadcast %cst_93 : f32 to vector<8x1xf32>
    %142 = arith.mulf %140, %141 : vector<8x1xf32>
    %143 = arith.mulf %137, %137 : vector<8x1xf32>
    %144 = arith.subf %142, %143 : vector<8x1xf32>
    %cst_94 = arith.constant 0.000000e+00 : f32
    %145 = vector.broadcast %cst_94 : f32 to vector<8x1xf32>
    %146 = arith.maximumf %144, %145 : vector<8x1xf32>
    %cst_95 = arith.constant 9.99999974E-6 : f32
    %147 = vector.broadcast %cst_95 : f32 to vector<8x1xf32>
    %148 = arith.addf %146, %147 : vector<8x1xf32>
    %149 = math.rsqrt %148 : vector<8x1xf32>
    %c0_96 = arith.constant 0 : index
    %c0_97 = arith.constant 0 : index
    %150 = vector.load %arg7[%c0_96, %c0_97] : memref<8x1xf32, #tpu.memory_space<vmem>>, vector<8x1xf32>
    %151 = arith.mulf %149, %150 : vector<8x1xf32>
    %c0_98 = arith.constant 0 : index
    %c0_99 = arith.constant 0 : index
    %152 = vector.load %arg8[%c0_98, %c0_99] : memref<8x1xf32, #tpu.memory_space<vmem>>, vector<8x1xf32>
    %153 = arith.mulf %137, %151 : vector<8x1xf32>
    %154 = arith.subf %152, %153 : vector<8x1xf32>
    %155 = vector.broadcast %151 : vector<8x1xf32> to vector<8x512xf32>
    %156 = arith.mulf %133, %155 : vector<8x512xf32>
    %157 = vector.broadcast %154 : vector<8x1xf32> to vector<8x512xf32>
    %158 = arith.addf %156, %157 : vector<8x512xf32>
    %cst_100 = arith.constant 0.000000e+00 : f32
    %159 = vector.broadcast %cst_100 : f32 to vector<8x512xf32>
    %160 = arith.maximumf %158, %159 : vector<8x512xf32>
    %c0_101 = arith.constant 0 : index
    %c0_102 = arith.constant 0 : index
    %c0_103 = arith.constant 0 : index
    %161 = vector.load %arg9[%c0_101, %c0_102, %c0_103] : memref<9x8x8xf32, #tpu.memory_space<vmem>>, vector<1x8x8xf32>
    %162 = vector.shape_cast %161 : vector<1x8x8xf32> to vector<8x8xf32>
    %cst_104 = arith.constant dense<0.000000e+00> : vector<8x512xf32>
    %163 = tpu.matmul %162, %160, %cst_104 {dimension_numbers = #tpu.dot_dimension_numbers<[1], [0], [0], [1], [0, 0, 1, 1], [], []>} : vector<8x8xf32>, vector<8x512xf32>, vector<8x512xf32> -> vector<8x512xf32>
    %cst_105 = arith.constant 0.000000e+00 : f32
    %164 = vector.broadcast %cst_105 : f32 to vector<8x17xf32>
    %165 = vector.extract_strided_slice %163 {offsets = [0, 0], sizes = [8, 495], strides = [1, 1]} : vector<8x512xf32> to vector<8x495xf32>
    %166 = tpu.concatenate %164, %165 in 1 : vector<8x17xf32>, vector<8x495xf32> -> vector<8x512xf32>
    %167 = vector.extract_strided_slice %0 {offsets = [0, 0], sizes = [1, 512], strides = [1, 1]} : vector<9x512xf32> to vector<1x512xf32>
    %168 = vector.broadcast %167 : vector<1x512xf32> to vector<8x512xf32>
    %169 = arith.mulf %166, %168 : vector<8x512xf32>
    %c1_106 = arith.constant 1 : index
    %c0_107 = arith.constant 0 : index
    %c0_108 = arith.constant 0 : index
    %170 = vector.load %arg9[%c1_106, %c0_107, %c0_108] : memref<9x8x8xf32, #tpu.memory_space<vmem>>, vector<1x8x8xf32>
    %171 = vector.shape_cast %170 : vector<1x8x8xf32> to vector<8x8xf32>
    %cst_109 = arith.constant dense<0.000000e+00> : vector<8x512xf32>
    %172 = tpu.matmul %171, %160, %cst_109 {dimension_numbers = #tpu.dot_dimension_numbers<[1], [0], [0], [1], [0, 0, 1, 1], [], []>} : vector<8x8xf32>, vector<8x512xf32>, vector<8x512xf32> -> vector<8x512xf32>
    %cst_110 = arith.constant 0.000000e+00 : f32
    %173 = vector.broadcast %cst_110 : f32 to vector<8x16xf32>
    %174 = vector.extract_strided_slice %172 {offsets = [0, 0], sizes = [8, 496], strides = [1, 1]} : vector<8x512xf32> to vector<8x496xf32>
    %175 = tpu.concatenate %173, %174 in 1 : vector<8x16xf32>, vector<8x496xf32> -> vector<8x512xf32>
    %176 = vector.extract_strided_slice %0 {offsets = [1, 0], sizes = [1, 512], strides = [1, 1]} : vector<9x512xf32> to vector<1x512xf32>
    %177 = vector.broadcast %176 : vector<1x512xf32> to vector<8x512xf32>
    %178 = arith.mulf %175, %177 : vector<8x512xf32>
    %179 = arith.addf %169, %178 : vector<8x512xf32>
    %c2_111 = arith.constant 2 : index
    %c0_112 = arith.constant 0 : index
    %c0_113 = arith.constant 0 : index
    %180 = vector.load %arg9[%c2_111, %c0_112, %c0_113] : memref<9x8x8xf32, #tpu.memory_space<vmem>>, vector<1x8x8xf32>
    %181 = vector.shape_cast %180 : vector<1x8x8xf32> to vector<8x8xf32>
    %cst_114 = arith.constant dense<0.000000e+00> : vector<8x512xf32>
    %182 = tpu.matmul %181, %160, %cst_114 {dimension_numbers = #tpu.dot_dimension_numbers<[1], [0], [0], [1], [0, 0, 1, 1], [], []>} : vector<8x8xf32>, vector<8x512xf32>, vector<8x512xf32> -> vector<8x512xf32>
    %cst_115 = arith.constant 0.000000e+00 : f32
    %183 = vector.broadcast %cst_115 : f32 to vector<8x15xf32>
    %184 = vector.extract_strided_slice %182 {offsets = [0, 0], sizes = [8, 497], strides = [1, 1]} : vector<8x512xf32> to vector<8x497xf32>
    %185 = tpu.concatenate %183, %184 in 1 : vector<8x15xf32>, vector<8x497xf32> -> vector<8x512xf32>
    %186 = vector.extract_strided_slice %0 {offsets = [2, 0], sizes = [1, 512], strides = [1, 1]} : vector<9x512xf32> to vector<1x512xf32>
    %187 = vector.broadcast %186 : vector<1x512xf32> to vector<8x512xf32>
    %188 = arith.mulf %185, %187 : vector<8x512xf32>
    %189 = arith.addf %179, %188 : vector<8x512xf32>
    %c3_116 = arith.constant 3 : index
    %c0_117 = arith.constant 0 : index
    %c0_118 = arith.constant 0 : index
    %190 = vector.load %arg9[%c3_116, %c0_117, %c0_118] : memref<9x8x8xf32, #tpu.memory_space<vmem>>, vector<1x8x8xf32>
    %191 = vector.shape_cast %190 : vector<1x8x8xf32> to vector<8x8xf32>
    %cst_119 = arith.constant dense<0.000000e+00> : vector<8x512xf32>
    %192 = tpu.matmul %191, %160, %cst_119 {dimension_numbers = #tpu.dot_dimension_numbers<[1], [0], [0], [1], [0, 0, 1, 1], [], []>} : vector<8x8xf32>, vector<8x512xf32>, vector<8x512xf32> -> vector<8x512xf32>
    %cst_120 = arith.constant 0.000000e+00 : f32
    %193 = vector.broadcast %cst_120 : f32 to vector<8x1xf32>
    %194 = vector.extract_strided_slice %192 {offsets = [0, 0], sizes = [8, 511], strides = [1, 1]} : vector<8x512xf32> to vector<8x511xf32>
    %195 = tpu.concatenate %193, %194 in 1 : vector<8x1xf32>, vector<8x511xf32> -> vector<8x512xf32>
    %196 = vector.extract_strided_slice %0 {offsets = [3, 0], sizes = [1, 512], strides = [1, 1]} : vector<9x512xf32> to vector<1x512xf32>
    %197 = vector.broadcast %196 : vector<1x512xf32> to vector<8x512xf32>
    %198 = arith.mulf %195, %197 : vector<8x512xf32>
    %199 = arith.addf %189, %198 : vector<8x512xf32>
    %c4_121 = arith.constant 4 : index
    %c0_122 = arith.constant 0 : index
    %c0_123 = arith.constant 0 : index
    %200 = vector.load %arg9[%c4_121, %c0_122, %c0_123] : memref<9x8x8xf32, #tpu.memory_space<vmem>>, vector<1x8x8xf32>
    %201 = vector.shape_cast %200 : vector<1x8x8xf32> to vector<8x8xf32>
    %cst_124 = arith.constant dense<0.000000e+00> : vector<8x512xf32>
    %202 = tpu.matmul %201, %160, %cst_124 {dimension_numbers = #tpu.dot_dimension_numbers<[1], [0], [0], [1], [0, 0, 1, 1], [], []>} : vector<8x8xf32>, vector<8x512xf32>, vector<8x512xf32> -> vector<8x512xf32>
    %203 = arith.addf %199, %202 : vector<8x512xf32>
    %c5_125 = arith.constant 5 : index
    %c0_126 = arith.constant 0 : index
    %c0_127 = arith.constant 0 : index
    %204 = vector.load %arg9[%c5_125, %c0_126, %c0_127] : memref<9x8x8xf32, #tpu.memory_space<vmem>>, vector<1x8x8xf32>
    %205 = vector.shape_cast %204 : vector<1x8x8xf32> to vector<8x8xf32>
    %cst_128 = arith.constant dense<0.000000e+00> : vector<8x512xf32>
    %206 = tpu.matmul %205, %160, %cst_128 {dimension_numbers = #tpu.dot_dimension_numbers<[1], [0], [0], [1], [0, 0, 1, 1], [], []>} : vector<8x8xf32>, vector<8x512xf32>, vector<8x512xf32> -> vector<8x512xf32>
    %cst_129 = arith.constant 0.000000e+00 : f32
    %207 = vector.broadcast %cst_129 : f32 to vector<8x1xf32>
    %208 = vector.extract_strided_slice %206 {offsets = [0, 1], sizes = [8, 511], strides = [1, 1]} : vector<8x512xf32> to vector<8x511xf32>
    %209 = tpu.concatenate %208, %207 in 1 : vector<8x511xf32>, vector<8x1xf32> -> vector<8x512xf32>
    %210 = vector.extract_strided_slice %0 {offsets = [5, 0], sizes = [1, 512], strides = [1, 1]} : vector<9x512xf32> to vector<1x512xf32>
    %211 = vector.broadcast %210 : vector<1x512xf32> to vector<8x512xf32>
    %212 = arith.mulf %209, %211 : vector<8x512xf32>
    %213 = arith.addf %203, %212 : vector<8x512xf32>
    %c6_130 = arith.constant 6 : index
    %c0_131 = arith.constant 0 : index
    %c0_132 = arith.constant 0 : index
    %214 = vector.load %arg9[%c6_130, %c0_131, %c0_132] : memref<9x8x8xf32, #tpu.memory_space<vmem>>, vector<1x8x8xf32>
    %215 = vector.shape_cast %214 : vector<1x8x8xf32> to vector<8x8xf32>
    %cst_133 = arith.constant dense<0.000000e+00> : vector<8x512xf32>
    %216 = tpu.matmul %215, %160, %cst_133 {dimension_numbers = #tpu.dot_dimension_numbers<[1], [0], [0], [1], [0, 0, 1, 1], [], []>} : vector<8x8xf32>, vector<8x512xf32>, vector<8x512xf32> -> vector<8x512xf32>
    %cst_134 = arith.constant 0.000000e+00 : f32
    %217 = vector.broadcast %cst_134 : f32 to vector<8x15xf32>
    %218 = vector.extract_strided_slice %216 {offsets = [0, 15], sizes = [8, 497], strides = [1, 1]} : vector<8x512xf32> to vector<8x497xf32>
    %219 = tpu.concatenate %218, %217 in 1 : vector<8x497xf32>, vector<8x15xf32> -> vector<8x512xf32>
    %220 = vector.extract_strided_slice %0 {offsets = [6, 0], sizes = [1, 512], strides = [1, 1]} : vector<9x512xf32> to vector<1x512xf32>
    %221 = vector.broadcast %220 : vector<1x512xf32> to vector<8x512xf32>
    %222 = arith.mulf %219, %221 : vector<8x512xf32>
    %223 = arith.addf %213, %222 : vector<8x512xf32>
    %c7_135 = arith.constant 7 : index
    %c0_136 = arith.constant 0 : index
    %c0_137 = arith.constant 0 : index
    %224 = vector.load %arg9[%c7_135, %c0_136, %c0_137] : memref<9x8x8xf32, #tpu.memory_space<vmem>>, vector<1x8x8xf32>
    %225 = vector.shape_cast %224 : vector<1x8x8xf32> to vector<8x8xf32>
    %cst_138 = arith.constant dense<0.000000e+00> : vector<8x512xf32>
    %226 = tpu.matmul %225, %160, %cst_138 {dimension_numbers = #tpu.dot_dimension_numbers<[1], [0], [0], [1], [0, 0, 1, 1], [], []>} : vector<8x8xf32>, vector<8x512xf32>, vector<8x512xf32> -> vector<8x512xf32>
    %cst_139 = arith.constant 0.000000e+00 : f32
    %227 = vector.broadcast %cst_139 : f32 to vector<8x16xf32>
    %228 = vector.extract_strided_slice %226 {offsets = [0, 16], sizes = [8, 496], strides = [1, 1]} : vector<8x512xf32> to vector<8x496xf32>
    %229 = tpu.concatenate %228, %227 in 1 : vector<8x496xf32>, vector<8x16xf32> -> vector<8x512xf32>
    %230 = vector.extract_strided_slice %0 {offsets = [7, 0], sizes = [1, 512], strides = [1, 1]} : vector<9x512xf32> to vector<1x512xf32>
    %231 = vector.broadcast %230 : vector<1x512xf32> to vector<8x512xf32>
    %232 = arith.mulf %229, %231 : vector<8x512xf32>
    %233 = arith.addf %223, %232 : vector<8x512xf32>
    %c8_140 = arith.constant 8 : index
    %c0_141 = arith.constant 0 : index
    %c0_142 = arith.constant 0 : index
    %234 = vector.load %arg9[%c8_140, %c0_141, %c0_142] : memref<9x8x8xf32, #tpu.memory_space<vmem>>, vector<1x8x8xf32>
    %235 = vector.shape_cast %234 : vector<1x8x8xf32> to vector<8x8xf32>
    %cst_143 = arith.constant dense<0.000000e+00> : vector<8x512xf32>
    %236 = tpu.matmul %235, %160, %cst_143 {dimension_numbers = #tpu.dot_dimension_numbers<[1], [0], [0], [1], [0, 0, 1, 1], [], []>} : vector<8x8xf32>, vector<8x512xf32>, vector<8x512xf32> -> vector<8x512xf32>
    %cst_144 = arith.constant 0.000000e+00 : f32
    %237 = vector.broadcast %cst_144 : f32 to vector<8x17xf32>
    %238 = vector.extract_strided_slice %236 {offsets = [0, 17], sizes = [8, 495], strides = [1, 1]} : vector<8x512xf32> to vector<8x495xf32>
    %239 = tpu.concatenate %238, %237 in 1 : vector<8x495xf32>, vector<8x17xf32> -> vector<8x512xf32>
    %240 = vector.extract_strided_slice %0 {offsets = [8, 0], sizes = [1, 512], strides = [1, 1]} : vector<9x512xf32> to vector<1x512xf32>
    %241 = vector.broadcast %240 : vector<1x512xf32> to vector<8x512xf32>
    %242 = arith.mulf %239, %241 : vector<8x512xf32>
    %243 = arith.addf %233, %242 : vector<8x512xf32>
    %cst_145 = arith.constant dense<0.000000e+00> : vector<8xf32>
    %244 = vector.multi_reduction <add>, %243, %cst_145 [1] : vector<8x512xf32> to vector<8xf32>
    %245 = vector.shape_cast %244 : vector<8xf32> to vector<8x1xf32>
    %cst_146 = arith.constant 0.001953125 : f32
    %246 = vector.broadcast %cst_146 : f32 to vector<8x1xf32>
    %247 = arith.mulf %245, %246 : vector<8x1xf32>
    %248 = arith.mulf %243, %243 : vector<8x512xf32>
    %cst_147 = arith.constant dense<0.000000e+00> : vector<8xf32>
    %249 = vector.multi_reduction <add>, %248, %cst_147 [1] : vector<8x512xf32> to vector<8xf32>
    %250 = vector.shape_cast %249 : vector<8xf32> to vector<8x1xf32>
    %cst_148 = arith.constant 0.001953125 : f32
    %251 = vector.broadcast %cst_148 : f32 to vector<8x1xf32>
    %252 = arith.mulf %250, %251 : vector<8x1xf32>
    %253 = arith.mulf %247, %247 : vector<8x1xf32>
    %254 = arith.subf %252, %253 : vector<8x1xf32>
    %cst_149 = arith.constant 0.000000e+00 : f32
    %255 = vector.broadcast %cst_149 : f32 to vector<8x1xf32>
    %256 = arith.maximumf %254, %255 : vector<8x1xf32>
    %cst_150 = arith.constant 9.99999974E-6 : f32
    %257 = vector.broadcast %cst_150 : f32 to vector<8x1xf32>
    %258 = arith.addf %256, %257 : vector<8x1xf32>
    %259 = math.rsqrt %258 : vector<8x1xf32>
    %c0_151 = arith.constant 0 : index
    %c0_152 = arith.constant 0 : index
    %260 = vector.load %arg10[%c0_151, %c0_152] : memref<8x1xf32, #tpu.memory_space<vmem>>, vector<8x1xf32>
    %261 = arith.mulf %259, %260 : vector<8x1xf32>
    %c0_153 = arith.constant 0 : index
    %c0_154 = arith.constant 0 : index
    %262 = vector.load %arg11[%c0_153, %c0_154] : memref<8x1xf32, #tpu.memory_space<vmem>>, vector<8x1xf32>
    %263 = arith.mulf %247, %261 : vector<8x1xf32>
    %264 = arith.subf %262, %263 : vector<8x1xf32>
    %265 = vector.broadcast %261 : vector<8x1xf32> to vector<8x512xf32>
    %266 = arith.mulf %243, %265 : vector<8x512xf32>
    %267 = vector.broadcast %264 : vector<8x1xf32> to vector<8x512xf32>
    %268 = arith.addf %266, %267 : vector<8x512xf32>
    %cst_155 = arith.constant 0.000000e+00 : f32
    %269 = vector.broadcast %cst_155 : f32 to vector<8x512xf32>
    %270 = arith.maximumf %268, %269 : vector<8x512xf32>
    %271 = vector.extract_strided_slice %270 {offsets = [0, 0], sizes = [4, 256], strides = [1, 1]} : vector<8x512xf32> to vector<4x256xf32>
    %c0_156 = arith.constant 0 : index
    %c0_157 = arith.constant 0 : index
    %c0_158 = arith.constant 0 : index
    %272 = vector.load %arg12[%c0_156, %c0_157, %c0_158] : memref<2x4x256xf32, #tpu.memory_space<vmem>>, vector<1x4x256xf32>
    %273 = vector.shape_cast %272 : vector<1x4x256xf32> to vector<4x256xf32>
    %274 = vector.shape_cast %271 : vector<4x256xf32> to vector<1x4x256xf32>
    tpu.vector_store %arg12[%c0_156, %c0_157, %c0_158], %274 {strides = array<i32>} : memref<2x4x256xf32, #tpu.memory_space<vmem>>, vector<1x4x256xf32>,
    %275 = vector.extract_strided_slice %270 {offsets = [0, 256], sizes = [4, 256], strides = [1, 1]} : vector<8x512xf32> to vector<4x256xf32>
    %c1_159 = arith.constant 1 : index
    %c0_160 = arith.constant 0 : index
    %c0_161 = arith.constant 0 : index
    %276 = vector.load %arg12[%c1_159, %c0_160, %c0_161] : memref<2x4x256xf32, #tpu.memory_space<vmem>>, vector<1x4x256xf32>
    %277 = vector.shape_cast %276 : vector<1x4x256xf32> to vector<4x256xf32>
    %278 = vector.shape_cast %275 : vector<4x256xf32> to vector<1x4x256xf32>
    tpu.vector_store %arg12[%c1_159, %c0_160, %c0_161], %278 {strides = array<i32>} : memref<2x4x256xf32, #tpu.memory_space<vmem>>, vector<1x4x256xf32>,
    return
  }
  func.func @transform_0(%arg0: i32) -> (i32, i32, i32) {
    %c0_i32 = arith.constant 0 : i32
    %c0_i32_0 = arith.constant 0 : i32
    %c0_i32_1 = arith.constant 0 : i32
    %c0_i32_2 = arith.constant 0 : i32
    return %c0_i32, %c0_i32_0, %c0_i32_1 : i32, i32, i32
  }
  func.func @transform_1(%arg0: i32) -> (i32, i32, i32) {
    %c0_i32 = arith.constant 0 : i32
    %c0_i32_0 = arith.constant 0 : i32
    %c0_i32_1 = arith.constant 0 : i32
    %c0_i32_2 = arith.constant 0 : i32
    return %c0_i32, %c0_i32_0, %c0_i32_1 : i32, i32, i32
  }
  func.func @transform_2(%arg0: i32) -> (i32, i32) {
    %c0_i32 = arith.constant 0 : i32
    %c0_i32_0 = arith.constant 0 : i32
    %c0_i32_1 = arith.constant 0 : i32
    return %c0_i32, %c0_i32_0 : i32, i32
  }
  func.func @transform_3(%arg0: i32) -> (i32, i32) {
    %c0_i32 = arith.constant 0 : i32
    %c0_i32_0 = arith.constant 0 : i32
    %c0_i32_1 = arith.constant 0 : i32
    return %c0_i32, %c0_i32_0 : i32, i32
  }
  func.func @transform_4(%arg0: i32) -> (i32, i32, i32) {
    %c0_i32 = arith.constant 0 : i32
    %c0_i32_0 = arith.constant 0 : i32
    %c0_i32_1 = arith.constant 0 : i32
    %c0_i32_2 = arith.constant 0 : i32
    return %c0_i32, %c0_i32_0, %c0_i32_1 : i32, i32, i32
  }
  func.func @transform_5(%arg0: i32) -> (i32, i32, i32) {
    %c0_i32 = arith.constant 0 : i32
    %c0_i32_0 = arith.constant 0 : i32
    %c0_i32_1 = arith.constant 0 : i32
    %c0_i32_2 = arith.constant 0 : i32
    return %c0_i32, %c0_i32_0, %c0_i32_1 : i32, i32, i32
  }
  func.func @transform_6(%arg0: i32) -> (i32, i32) {
    %c0_i32 = arith.constant 0 : i32
    %c0_i32_0 = arith.constant 0 : i32
    %c0_i32_1 = arith.constant 0 : i32
    return %c0_i32, %c0_i32_0 : i32, i32
  }
  func.func @transform_7(%arg0: i32) -> (i32, i32) {
    %c0_i32 = arith.constant 0 : i32
    %c0_i32_0 = arith.constant 0 : i32
    %c0_i32_1 = arith.constant 0 : i32
    return %c0_i32, %c0_i32_0 : i32, i32
  }
  func.func @transform_8(%arg0: i32) -> (i32, i32, i32) {
    %c0_i32 = arith.constant 0 : i32
    %c0_i32_0 = arith.constant 0 : i32
    %c0_i32_1 = arith.constant 0 : i32
    %c0_i32_2 = arith.constant 0 : i32
    return %c0_i32, %c0_i32_0, %c0_i32_1 : i32, i32, i32
  }
  func.func @transform_9(%arg0: i32) -> (i32, i32) {
    %c0_i32 = arith.constant 0 : i32
    %c0_i32_0 = arith.constant 0 : i32
    %c0_i32_1 = arith.constant 0 : i32
    return %c0_i32, %c0_i32_0 : i32, i32
  }
  func.func @transform_10(%arg0: i32) -> (i32, i32) {
    %c0_i32 = arith.constant 0 : i32
    %c0_i32_0 = arith.constant 0 : i32
    %c0_i32_1 = arith.constant 0 : i32
    return %c0_i32, %c0_i32_0 : i32, i32
  }
  func.func @transform_11(%arg0: i32) -> (i32, i32, i32) {
    %c0_i32 = arith.constant 0 : i32
    %c0_i32_0 = arith.constant 0 : i32
    %c0_i32_1 = arith.constant 0 : i32
    %c0_i32_2 = arith.constant 0 : i32
    return %c0_i32, %c0_i32_0, %c0_i32_1 : i32, i32, i32
  }
}

</mosaic_0001>

<llo_original>
// kernel: up_forward.1
$region0: #{up_forward.1}
  #allocation0 [shape = 'u32[]', space=smem, size = 0x4, offset = 0x4, fixed_abs, tag = 'smem constant byte address 0x4 - core index']
  #allocation1 [shape = 'u32[144,128]{1,0:T(1,128)}', space=vmem, size = 0x12000, scoped, tag = 'internal scratch']
  %s0 = inlined_call_operand.vmem [shape: f32[2,4,64], index: 0, kind: input, shape index: {}]
  %s1 = inlined_call_operand.vmem [shape: f32[2,4,256], index: 1, kind: input, shape index: {}]
  %s2 = inlined_call_operand.vmem [shape: f32[64,256], index: 2, kind: input, shape index: {}]
  %s3 = inlined_call_operand.vmem [shape: f32[9,512], index: 3, kind: input, shape index: {}]
  %s4 = inlined_call_operand.vmem [shape: f32[9,8,4], index: 4, kind: input, shape index: {}]
  %s5 = inlined_call_operand.vmem [shape: f32[9,8,4], index: 5, kind: input, shape index: {}]
  %s6 = inlined_call_operand.vmem [shape: f32[8,1], index: 6, kind: input, shape index: {}]
  %s7 = inlined_call_operand.vmem [shape: f32[8,1], index: 7, kind: input, shape index: {}]
  %s8 = inlined_call_operand.vmem [shape: f32[9,8,8], index: 8, kind: input, shape index: {}]
  %s9 = inlined_call_operand.vmem [shape: f32[8,1], index: 9, kind: input, shape index: {}]
  %s10 = inlined_call_operand.vmem [shape: f32[8,1], index: 10, kind: input, shape index: {}]
  %s11 = inlined_call_operand.vmem [shape: f32[2,4,256], index: 11, kind: output, shape index: {}]
  %s12 = sld [smem:[#allocation0]]
  $region54: #{up_forward.1} parent=0
    _
  %s14 = ssub.s32 1, %s12
  %s15 = scalar_select 0, %s14, %s12
  // Predicated region
  $region2: #{up_forward.1} parent=0 // pred_check
    _
  $region3: #{up_forward.1} parent=0 // pred_check_branch
    %17 = sbr.rel (0) target = $region5
  $region4: #{up_forward.1} parent=0 // pred_region
    _
  $region5: #{up_forward.1} parent=0 // pred_fallthru
    _
  // Predicated region
  $region6: #{up_forward.1} parent=0 // pred_check
    _
  $region7: #{up_forward.1} parent=0 // pred_check_branch
    %19 = sbr.rel (0) target = $region9
  $region8: #{up_forward.1} parent=0 // pred_region
    _
  $region9: #{up_forward.1} parent=0 // pred_fallthru
    _
  // Predicated region
  $region10: #{up_forward.1} parent=0 // pred_check
    _
  $region11: #{up_forward.1} parent=0 // pred_check_branch
    %21 = sbr.rel (0) target = $region13
  $region12: #{up_forward.1} parent=0 // pred_region
    _
  $region13: #{up_forward.1} parent=0 // pred_fallthru
    _
  // Predicated region
  $region14: #{up_forward.1} parent=0 // pred_check
    _
  $region15: #{up_forward.1} parent=0 // pred_check_branch
    %23 = sbr.rel (0) target = $region17
  $region16: #{up_forward.1} parent=0 // pred_region
    _
  $region17: #{up_forward.1} parent=0 // pred_fallthru
    _
  // Predicated region
  $region18: #{up_forward.1} parent=0 // pred_check
    _
  $region19: #{up_forward.1} parent=0 // pred_check_branch
    %25 = sbr.rel (0) target = $region21
  $region20: #{up_forward.1} parent=0 // pred_region
    _
  $region21: #{up_forward.1} parent=0 // pred_fallthru
    _
  // Predicated region
  $region22: #{up_forward.1} parent=0 // pred_check
    _
  $region23: #{up_forward.1} parent=0 // pred_check_branch
    %27 = sbr.rel (0) target = $region25
  $region24: #{up_forward.1} parent=0 // pred_region
    _
  $region25: #{up_forward.1} parent=0 // pred_fallthru
    _
  // Predicated region
  $region26: #{up_forward.1} parent=0 // pred_check
    _
  $region27: #{up_forward.1} parent=0 // pred_check_branch
    %29 = sbr.rel (0) target = $region29
  $region28: #{up_forward.1} parent=0 // pred_region
    _
  $region29: #{up_forward.1} parent=0 // pred_fallthru
    _
  // Predicated region
  $region30: #{up_forward.1} parent=0 // pred_check
    _
  $region31: #{up_forward.1} parent=0 // pred_check_branch
    %31 = sbr.rel (0) target = $region33
  $region32: #{up_forward.1} parent=0 // pred_region
    _
  $region33: #{up_forward.1} parent=0 // pred_fallthru
    _
  // Predicated region
  $region34: #{up_forward.1} parent=0 // pred_check
    _
  $region35: #{up_forward.1} parent=0 // pred_check_branch
    %33 = sbr.rel (0) target = $region37
  $region36: #{up_forward.1} parent=0 // pred_region
    _
  $region37: #{up_forward.1} parent=0 // pred_fallthru
    _
  // Predicated region
  $region38: #{up_forward.1} parent=0 // pred_check
    _
  $region39: #{up_forward.1} parent=0 // pred_check_branch
    %35 = sbr.rel (0) target = $region41
  $region40: #{up_forward.1} parent=0 // pred_region
    _
  $region41: #{up_forward.1} parent=0 // pred_fallthru
    _
  // Predicated region
  $region42: #{up_forward.1} parent=0 // pred_check
    _
  $region43: #{up_forward.1} parent=0 // pred_check_branch
    %37 = sbr.rel (0) target = $region45
  $region44: #{up_forward.1} parent=0 // pred_region
    _
  $region45: #{up_forward.1} parent=0 // pred_fallthru
    _
  %v38 = vld [vmem:[%s3] sm:$0xff]
  %v39 = vld [vmem:[%s3 + $0x8] sm:$0xff]
  %v40 = vld [vmem:[%s3 + $0x10] sm:$0xff]
  %v41 = vld [vmem:[%s3 + $0x18] sm:$0xff]
  %v42 = vld [vmem:[%s3 + $0x20] sm:$0x1]
  %v43 = vld [vmem:[%s3 + $0x28] sm:$0x1]
  %v44 = vld [vmem:[%s3 + $0x30] sm:$0x1]
  %v45 = vld [vmem:[%s3 + $0x38] sm:$0x1]
  %v46 = vld [vmem:[%s0] sm:$0xf]
  %v47 = vld [vmem:[%s2] sm:$0xff]
  %v48 = vld [vmem:[%s2 + $0x8] sm:$0xff]
  %v49 = vld [vmem:[%s2 + $0x10] sm:$0xff]
  %v50 = vld [vmem:[%s2 + $0x18] sm:$0xff]
  %v51 = vld [vmem:[%s2 + $0x20] sm:$0xff]
  %v52 = vld [vmem:[%s2 + $0x28] sm:$0xff]
  %v53 = vld [vmem:[%s2 + $0x30] sm:$0xff]
  %v54 = vld [vmem:[%s2 + $0x38] sm:$0xff]
  %v55 = vld [vmem:[%s2 + $0x40] sm:$0xff]
  %v56 = vld [vmem:[%s2 + $0x48] sm:$0xff]
  %v57 = vld [vmem:[%s2 + $0x50] sm:$0xff]
  %v58 = vld [vmem:[%s2 + $0x58] sm:$0xff]
  %v59 = vld [vmem:[%s2 + $0x60] sm:$0xff]
  %v60 = vld [vmem:[%s2 + $0x68] sm:$0xff]
  %v61 = vld [vmem:[%s2 + $0x70] sm:$0xff]
  %v62 = vld [vmem:[%s2 + $0x78] sm:$0xff]
  %vm63 = vcmask 523264
  %v65 = vsel %vm63, %v46, 0
  %67 = vmatprep.subr.mxu0 %v48
  %68 = vmatpush1.msra.mxu0 %v47
  %69 = vmatprep.subr.mxu0 %v50
  %70 = vmatpush1.msra.mxu0 %v49
  %71 = vmatprep.subr.mxu0 %v52
  %72 = vmatpush1.msra.mxu0 %v51
  %73 = vmatprep.subr.mxu0 %v54
  %74 = vmatpush1.msra.mxu0 %v53
  %75 = vmatprep.subr.mxu0 %v56
  %76 = vmatpush1.msra.mxu0 %v55
  %77 = vmatprep.subr.mxu0 %v58
  %78 = vmatpush1.msra.mxu0 %v57
  %79 = vmatprep.subr.mxu0 %v60
  %80 = vmatpush1.msra.mxu0 %v59
  %81 = vmatprep.subr.mxu0 %v62
  %82 = vmatpush1.msra.mxu0 %v61
  %83 = vmatprep.subr.mxu0 0.0
  %84 = vmatpush1.msra.mxu0 0.0
  %85 = vmatprep.subr.mxu0 0.0
  %86 = vmatpush1.msra.mxu0 0.0
  %87 = vmatprep.subr.mxu0 0.0
  %88 = vmatpush1.msra.mxu0 0.0
  %89 = vmatprep.subr.mxu0 0.0
  %90 = vmatpush1.msra.mxu0 0.0
  %91 = vmatprep.subr.mxu0 0.0
  %92 = vmatpush1.msra.mxu0 0.0
  %93 = vmatprep.subr.mxu0 0.0
  %94 = vmatpush1.msra.mxu0 0.0
  %95 = vmatprep.subr.mxu0 0.0
  %96 = vmatpush1.msra.mxu0 0.0
  %97 = vmatprep.subr.mxu0 0.0
  %98 = vmatpush1.msra.mxu0 0.0
  %99 = vmatprep.subr.mxu0 0.0
  %100 = vmatpush1.msra.mxu0 0.0
  %101 = vmatprep.subr.mxu0 0.0
  %102 = vmatpush1.msra.mxu0 0.0
  %103 = vmatprep.subr.mxu0 0.0
  %104 = vmatpush1.msra.mxu0 0.0
  %105 = vmatprep.subr.mxu0 0.0
  %106 = vmatpush1.msra.mxu0 0.0
  %107 = vmatprep.subr.mxu0 0.0
  %108 = vmatpush1.msra.mxu0 0.0
  %109 = vmatprep.subr.mxu0 0.0
  %110 = vmatpush1.msra.mxu0 0.0
  %111 = vmatprep.subr.mxu0 0.0
  %112 = vmatpush1.msra.mxu0 0.0
  %113 = vmatprep.subr.mxu0 0.0
  %114 = vmatpush1.msra.mxu0 0.0
  %115 = vmatprep.subr.mxu0 0.0
  %116 = vmatpush1.msra.mxu0 0.0
  %117 = vmatprep.subr.mxu0 0.0
  %118 = vmatpush1.msra.mxu0 0.0
  %119 = vmatprep.subr.mxu0 0.0
  %120 = vmatpush1.msra.mxu0 0.0
  %121 = vmatprep.subr.mxu0 0.0
  %122 = vmatpush1.msra.mxu0 0.0
  %123 = vmatprep.subr.mxu0 0.0
  %124 = vmatpush1.msra.mxu0 0.0
  %125 = vmatprep.subr.mxu0 0.0
  %126 = vmatpush1.msra.mxu0 0.0
  %127 = vmatprep.subr.mxu0 0.0
  %128 = vmatpush1.msra.mxu0 0.0
  %129 = vmatprep.subr.mxu0 0.0
  %130 = vmatpush1.msra.mxu0 0.0
  %131 = vmatprep.mubr.f32.mxu0 0.0
  %132 = vmatmul.mubr.f32.gmra.mrb[0].mxu0 %v65
  %v133 = vpop.f32.mrb[0].mxu0
  %v134 = vadd.f32 0.0, %v133
  %v135 = vpop.f32.mrb[0].mxu0
  %v136 = vadd.f32 0.0, %v135
  %137 = vdwg.mxu0
  %s138 = scalar_lea.vmem %s0, 4
  %v139 = vld [vmem:[%s138] sm:$0xf]
  %v141 = vsel %vm63, %v139, 0
  %143 = vmatprep.subr.mxu0 %v48
  %144 = vmatpush1.msra.mxu0 %v47
  %145 = vmatprep.subr.mxu0 %v50
  %146 = vmatpush1.msra.mxu0 %v49
  %147 = vmatprep.subr.mxu0 %v52
  %148 = vmatpush1.msra.mxu0 %v51
  %149 = vmatprep.subr.mxu0 %v54
  %150 = vmatpush1.msra.mxu0 %v53
  %151 = vmatprep.subr.mxu0 %v56
  %152 = vmatpush1.msra.mxu0 %v55
  %153 = vmatprep.subr.mxu0 %v58
  %154 = vmatpush1.msra.mxu0 %v57
  %155 = vmatprep.subr.mxu0 %v60
  %156 = vmatpush1.msra.mxu0 %v59
  %157 = vmatprep.subr.mxu0 %v62
  %158 = vmatpush1.msra.mxu0 %v61
  %159 = vmatprep.subr.mxu0 0.0
  %160 = vmatpush1.msra.mxu0 0.0
  %161 = vmatprep.subr.mxu0 0.0
  %162 = vmatpush1.msra.mxu0 0.0
  %163 = vmatprep.subr.mxu0 0.0
  %164 = vmatpush1.msra.mxu0 0.0
  %165 = vmatprep.subr.mxu0 0.0
  %166 = vmatpush1.msra.mxu0 0.0
  %167 = vmatprep.subr.mxu0 0.0
  %168 = vmatpush1.msra.mxu0 0.0
  %169 = vmatprep.subr.mxu0 0.0
  %170 = vmatpush1.msra.mxu0 0.0
  %171 = vmatprep.subr.mxu0 0.0
  %172 = vmatpush1.msra.mxu0 0.0
  %173 = vmatprep.subr.mxu0 0.0
  %174 = vmatpush1.msra.mxu0 0.0
  %175 = vmatprep.subr.mxu0 0.0
  %176 = vmatpush1.msra.mxu0 0.0
  %177 = vmatprep.subr.mxu0 0.0
  %178 = vmatpush1.msra.mxu0 0.0
  %179 = vmatprep.subr.mxu0 0.0
  %180 = vmatpush1.msra.mxu0 0.0
  %181 = vmatprep.subr.mxu0 0.0
  %182 = vmatpush1.msra.mxu0 0.0
  %183 = vmatprep.subr.mxu0 0.0
  %184 = vmatpush1.msra.mxu0 0.0
  %185 = vmatprep.subr.mxu0 0.0
  %186 = vmatpush1.msra.mxu0 0.0
  %187 = vmatprep.subr.mxu0 0.0
  %188 = vmatpush1.msra.mxu0 0.0
  %189 = vmatprep.subr.mxu0 0.0
  %190 = vmatpush1.msra.mxu0 0.0
  %191 = vmatprep.subr.mxu0 0.0
  %192 = vmatpush1.msra.mxu0 0.0
  %193 = vmatprep.subr.mxu0 0.0
  %194 = vmatpush1.msra.mxu0 0.0
  %195 = vmatprep.subr.mxu0 0.0
  %196 = vmatpush1.msra.mxu0 0.0
  %197 = vmatprep.subr.mxu0 0.0
  %198 = vmatpush1.msra.mxu0 0.0
  %199 = vmatprep.subr.mxu0 0.0
  %200 = vmatpush1.msra.mxu0 0.0
  %201 = vmatprep.subr.mxu0 0.0
  %202 = vmatpush1.msra.mxu0 0.0
  %203 = vmatprep.subr.mxu0 0.0
  %204 = vmatpush1.msra.mxu0 0.0
  %205 = vmatprep.subr.mxu0 0.0
  %206 = vmatpush1.msra.mxu0 0.0
  %207 = vmatprep.mubr.f32.mxu0 0.0
  %208 = vmatmul.mubr.f32.gmra.mrb[0].mxu0 %v141
  %v209 = vpop.f32.mrb[0].mxu0
  %v210 = vadd.f32 0.0, %v209
  %v211 = vpop.f32.mrb[0].mxu0
  %v212 = vadd.f32 0.0, %v211
  %213 = vdwg.mxu0
  %v214 = vld [vmem:[%s1] sm:$0xff]
  %s215 = scalar_lea.vmem %s1, 8
  %v216 = vld [vmem:[%s215] sm:$0xff]
  %v218 = vcombine.high %v214, %v214
  %v220 = vcombine.high %v216, %v216
  %v221 = vld [vmem:[%s4] sm:$0xff]
  %v222 = vld [vmem:[%s5] sm:$0xff]
  %vm223 = vcmask 31744
  %v225 = vsel %vm223, %v222, 0
  %vm227 = vcmask 1043456
  %v229 = vsel %vm227, %v134, 0
  %v232 = vsel %vm227, %v136, 0
  %v235 = vsel %vm227, %v210, 0
  %v238 = vsel %vm227, %v212, 0
  %240 = vmatprep.subr.mxu0 %v232
  %241 = vmatpush1.msra.mxu0 %v229
  %242 = vmatprep.subr.mxu0 0.0
  %243 = vmatpush1.msra.mxu0 0.0
  %244 = vmatprep.subr.mxu0 0.0
  %245 = vmatpush1.msra.mxu0 0.0
  %246 = vmatprep.subr.mxu0 0.0
  %247 = vmatpush1.msra.mxu0 0.0
  %248 = vmatprep.subr.mxu0 0.0
  %249 = vmatpush1.msra.mxu0 0.0
  %250 = vmatprep.subr.mxu0 0.0
  %251 = vmatpush1.msra.mxu0 0.0
  %252 = vmatprep.subr.mxu0 0.0
  %253 = vmatpush1.msra.mxu0 0.0
  %254 = vmatprep.subr.mxu0 0.0
  %255 = vmatpush1.msra.mxu0 0.0
  %256 = vmatprep.subr.mxu0 0.0
  %257 = vmatpush1.msra.mxu0 0.0
  %258 = vmatprep.subr.mxu0 0.0
  %259 = vmatpush1.msra.mxu0 0.0
  %260 = vmatprep.subr.mxu0 0.0
  %261 = vmatpush1.msra.mxu0 0.0
  %262 = vmatprep.subr.mxu0 0.0
  %263 = vmatpush1.msra.mxu0 0.0
  %264 = vmatprep.subr.mxu0 0.0
  %265 = vmatpush1.msra.mxu0 0.0
  %266 = vmatprep.subr.mxu0 0.0
  %267 = vmatpush1.msra.mxu0 0.0
  %268 = vmatprep.subr.mxu0 0.0
  %269 = vmatpush1.msra.mxu0 0.0
  %270 = vmatprep.subr.mxu0 0.0
  %271 = vmatpush1.msra.mxu0 0.0
  %272 = vmatprep.subr.mxu0 0.0
  %273 = vmatpush1.msra.mxu0 0.0
  %274 = vmatprep.subr.mxu0 0.0
  %275 = vmatpush1.msra.mxu0 0.0
  %276 = vmatprep.subr.mxu0 0.0
  %277 = vmatpush1.msra.mxu0 0.0
  %278 = vmatprep.subr.mxu0 0.0
  %279 = vmatpush1.msra.mxu0 0.0
  %280 = vmatprep.subr.mxu0 0.0
  %281 = vmatpush1.msra.mxu0 0.0
  %282 = vmatprep.subr.mxu0 0.0
  %283 = vmatpush1.msra.mxu0 0.0
  %284 = vmatprep.subr.mxu0 0.0
  %285 = vmatpush1.msra.mxu0 0.0
  %286 = vmatprep.subr.mxu0 0.0
  %287 = vmatpush1.msra.mxu0 0.0
  %288 = vmatprep.subr.mxu0 0.0
  %289 = vmatpush1.msra.mxu0 0.0
  %290 = vmatprep.subr.mxu0 0.0
  %291 = vmatpush1.msra.mxu0 0.0
  %292 = vmatprep.subr.mxu0 0.0
  %293 = vmatpush1.msra.mxu0 0.0
  %294 = vmatprep.subr.mxu0 0.0
  %295 = vmatpush1.msra.mxu0 0.0
  %296 = vmatprep.subr.mxu0 0.0
  %297 = vmatpush1.msra.mxu0 0.0
  %298 = vmatprep.subr.mxu0 0.0
  %299 = vmatpush1.msra.mxu0 0.0
  %300 = vmatprep.subr.mxu0 0.0
  %301 = vmatpush1.msra.mxu0 0.0
  %302 = vmatprep.subr.mxu0 0.0
  %303 = vmatpush1.msra.mxu0 0.0
  %304 = vmatprep.mubr.f32.mxu0 0.0
  %305 = vmatmul.mubr.f32.gmra.mrb[0].mxu0 %v225
  %v306 = vpop.f32.mrb[0].mxu0
  %v307 = vadd.f32 0.0, %v306
  %v308 = vpop.f32.mrb[0].mxu0
  %v309 = vadd.f32 0.0, %v308
  %310 = vdwg.mxu0
  %311 = vmatprep.subr.mxu0 %v238
  %312 = vmatpush1.msra.mxu0 %v235
  %313 = vmatprep.subr.mxu0 0.0
  %314 = vmatpush1.msra.mxu0 0.0
  %315 = vmatprep.subr.mxu0 0.0
  %316 = vmatpush1.msra.mxu0 0.0
  %317 = vmatprep.subr.mxu0 0.0
  %318 = vmatpush1.msra.mxu0 0.0
  %319 = vmatprep.subr.mxu0 0.0
  %320 = vmatpush1.msra.mxu0 0.0
  %321 = vmatprep.subr.mxu0 0.0
  %322 = vmatpush1.msra.mxu0 0.0
  %323 = vmatprep.subr.mxu0 0.0
  %324 = vmatpush1.msra.mxu0 0.0
  %325 = vmatprep.subr.mxu0 0.0
  %326 = vmatpush1.msra.mxu0 0.0
  %327 = vmatprep.subr.mxu0 0.0
  %328 = vmatpush1.msra.mxu0 0.0
  %329 = vmatprep.subr.mxu0 0.0
  %330 = vmatpush1.msra.mxu0 0.0
  %331 = vmatprep.subr.mxu0 0.0
  %332 = vmatpush1.msra.mxu0 0.0
  %333 = vmatprep.subr.mxu0 0.0
  %334 = vmatpush1.msra.mxu0 0.0
  %335 = vmatprep.subr.mxu0 0.0
  %336 = vmatpush1.msra.mxu0 0.0
  %337 = vmatprep.subr.mxu0 0.0
  %338 = vmatpush1.msra.mxu0 0.0
  %339 = vmatprep.subr.mxu0 0.0
  %340 = vmatpush1.msra.mxu0 0.0
  %341 = vmatprep.subr.mxu0 0.0
  %342 = vmatpush1.msra.mxu0 0.0
  %343 = vmatprep.subr.mxu0 0.0
  %344 = vmatpush1.msra.mxu0 0.0
  %345 = vmatprep.subr.mxu0 0.0
  %346 = vmatpush1.msra.mxu0 0.0
  %347 = vmatprep.subr.mxu0 0.0
  %348 = vmatpush1.msra.mxu0 0.0
  %349 = vmatprep.subr.mxu0 0.0
  %350 = vmatpush1.msra.mxu0 0.0
  %351 = vmatprep.subr.mxu0 0.0
  %352 = vmatpush1.msra.mxu0 0.0
  %353 = vmatprep.subr.mxu0 0.0
  %354 = vmatpush1.msra.mxu0 0.0
  %355 = vmatprep.subr.mxu0 0.0
  %356 = vmatpush1.msra.mxu0 0.0
  %357 = vmatprep.subr.mxu0 0.0
  %358 = vmatpush1.msra.mxu0 0.0
  %359 = vmatprep.subr.mxu0 0.0
  %360 = vmatpush1.msra.mxu0 0.0
  %361 = vmatprep.subr.mxu0 0.0
  %362 = vmatpush1.msra.mxu0 0.0
  %363 = vmatprep.subr.mxu0 0.0
  %364 = vmatpush1.msra.mxu0 0.0
  %365 = vmatprep.subr.mxu0 0.0
  %366 = vmatpush1.msra.mxu0 0.0
  %367 = vmatprep.subr.mxu0 0.0
  %368 = vmatpush1.msra.mxu0 0.0
  %369 = vmatprep.subr.mxu0 0.0
  %370 = vmatpush1.msra.mxu0 0.0
  %371 = vmatprep.subr.mxu0 0.0
  %372 = vmatpush1.msra.mxu0 0.0
  %373 = vmatprep.subr.mxu0 0.0
  %374 = vmatpush1.msra.mxu0 0.0
  %375 = vmatprep.mubr.f32.mxu0 0.0
  %376 = vmatmul.mubr.f32.gmra.mrb[0].mxu0 %v225
  %v377 = vpop.f32.mrb[0].mxu0
  %v378 = vadd.f32 0.0, %v377
  %v379 = vpop.f32.mrb[0].mxu0
  %v380 = vadd.f32 0.0, %v379
  %381 = vdwg.mxu0
  %v383 = vsel %vm223, %v221, 0
  %v385 = vsel %vm227, %v214, 0
  %v387 = vsel %vm227, %v218, 0
  %v389 = vsel %vm227, %v216, 0
  %v391 = vsel %vm227, %v220, 0
  %393 = vmatprep.subr.mxu0 %v387
  %394 = vmatpush1.msra.mxu0 %v385
  %395 = vmatprep.subr.mxu0 0.0
  %396 = vmatpush1.msra.mxu0 0.0
  %397 = vmatprep.subr.mxu0 0.0
  %398 = vmatpush1.msra.mxu0 0.0
  %399 = vmatprep.subr.mxu0 0.0
  %400 = vmatpush1.msra.mxu0 0.0
  %401 = vmatprep.subr.mxu0 0.0
  %402 = vmatpush1.msra.mxu0 0.0
  %403 = vmatprep.subr.mxu0 0.0
  %404 = vmatpush1.msra.mxu0 0.0
  %405 = vmatprep.subr.mxu0 0.0
  %406 = vmatpush1.msra.mxu0 0.0
  %407 = vmatprep.subr.mxu0 0.0
  %408 = vmatpush1.msra.mxu0 0.0
  %409 = vmatprep.subr.mxu0 0.0
  %410 = vmatpush1.msra.mxu0 0.0
  %411 = vmatprep.subr.mxu0 0.0
  %412 = vmatpush1.msra.mxu0 0.0
  %413 = vmatprep.subr.mxu0 0.0
  %414 = vmatpush1.msra.mxu0 0.0
  %415 = vmatprep.subr.mxu0 0.0
  %416 = vmatpush1.msra.mxu0 0.0
  %417 = vmatprep.subr.mxu0 0.0
  %418 = vmatpush1.msra.mxu0 0.0
  %419 = vmatprep.subr.mxu0 0.0
  %420 = vmatpush1.msra.mxu0 0.0
  %421 = vmatprep.subr.mxu0 0.0
  %422 = vmatpush1.msra.mxu0 0.0
  %423 = vmatprep.subr.mxu0 0.0
  %424 = vmatpush1.msra.mxu0 0.0
  %425 = vmatprep.subr.mxu0 0.0
  %426 = vmatpush1.msra.mxu0 0.0
  %427 = vmatprep.subr.mxu0 0.0
  %428 = vmatpush1.msra.mxu0 0.0
  %429 = vmatprep.subr.mxu0 0.0
  %430 = vmatpush1.msra.mxu0 0.0
  %431 = vmatprep.subr.mxu0 0.0
  %432 = vmatpush1.msra.mxu0 0.0
  %433 = vmatprep.subr.mxu0 0.0
  %434 = vmatpush1.msra.mxu0 0.0
  %435 = vmatprep.subr.mxu0 0.0
  %436 = vmatpush1.msra.mxu0 0.0
  %437 = vmatprep.subr.mxu0 0.0
  %438 = vmatpush1.msra.mxu0 0.0
  %439 = vmatprep.subr.mxu0 0.0
  %440 = vmatpush1.msra.mxu0 0.0
  %441 = vmatprep.subr.mxu0 0.0
  %442 = vmatpush1.msra.mxu0 0.0
  %443 = vmatprep.subr.mxu0 0.0
  %444 = vmatpush1.msra.mxu0 0.0
  %445 = vmatprep.subr.mxu0 0.0
  %446 = vmatpush1.msra.mxu0 0.0
  %447 = vmatprep.subr.mxu0 0.0
  %448 = vmatpush1.msra.mxu0 0.0
  %449 = vmatprep.subr.mxu0 0.0
  %450 = vmatpush1.msra.mxu0 0.0
  %451 = vmatprep.subr.mxu0 0.0
  %452 = vmatpush1.msra.mxu0 0.0
  %453 = vmatprep.subr.mxu0 0.0
  %454 = vmatpush1.msra.mxu0 0.0
  %455 = vmatprep.subr.mxu0 0.0
  %456 = vmatpush1.msra.mxu0 0.0
  %457 = vmatprep.mubr.f32.mxu0 0.0
  %458 = vmatmul.mubr.f32.gmra.mrb[0].mxu0 %v383
  %v459 = vpop.f32.mrb[0].mxu0
  %v460 = vadd.f32 %v307, %v459
  %v461 = vpop.f32.mrb[0].mxu0
  %v462 = vadd.f32 %v309, %v461
  %463 = vdwg.mxu0
  %464 = vmatprep.subr.mxu0 %v391
  %465 = vmatpush1.msra.mxu0 %v389
  %466 = vmatprep.subr.mxu0 0.0
  %467 = vmatpush1.msra.mxu0 0.0
  %468 = vmatprep.subr.mxu0 0.0
  %469 = vmatpush1.msra.mxu0 0.0
  %470 = vmatprep.subr.mxu0 0.0
  %471 = vmatpush1.msra.mxu0 0.0
  %472 = vmatprep.subr.mxu0 0.0
  %473 = vmatpush1.msra.mxu0 0.0
  %474 = vmatprep.subr.mxu0 0.0
  %475 = vmatpush1.msra.mxu0 0.0
  %476 = vmatprep.subr.mxu0 0.0
  %477 = vmatpush1.msra.mxu0 0.0
  %478 = vmatprep.subr.mxu0 0.0
  %479 = vmatpush1.msra.mxu0 0.0
  %480 = vmatprep.subr.mxu0 0.0
  %481 = vmatpush1.msra.mxu0 0.0
  %482 = vmatprep.subr.mxu0 0.0
  %483 = vmatpush1.msra.mxu0 0.0
  %484 = vmatprep.subr.mxu0 0.0
  %485 = vmatpush1.msra.mxu0 0.0
  %486 = vmatprep.subr.mxu0 0.0
  %487 = vmatpush1.msra.mxu0 0.0
  %488 = vmatprep.subr.mxu0 0.0
  %489 = vmatpush1.msra.mxu0 0.0
  %490 = vmatprep.subr.mxu0 0.0
  %491 = vmatpush1.msra.mxu0 0.0
  %492 = vmatprep.subr.mxu0 0.0
  %493 = vmatpush1.msra.mxu0 0.0
  %494 = vmatprep.subr.mxu0 0.0
  %495 = vmatpush1.msra.mxu0 0.0
  %496 = vmatprep.subr.mxu0 0.0
  %497 = vmatpush1.msra.mxu0 0.0
  %498 = vmatprep.subr.mxu0 0.0
  %499 = vmatpush1.msra.mxu0 0.0
  %500 = vmatprep.subr.mxu0 0.0
  %501 = vmatpush1.msra.mxu0 0.0
  %502 = vmatprep.subr.mxu0 0.0
  %503 = vmatpush1.msra.mxu0 0.0
  %504 = vmatprep.subr.mxu0 0.0
  %505 = vmatpush1.msra.mxu0 0.0
  %506 = vmatprep.subr.mxu0 0.0
  %507 = vmatpush1.msra.mxu0 0.0
  %508 = vmatprep.subr.mxu0 0.0
  %509 = vmatpush1.msra.mxu0 0.0
  %510 = vmatprep.subr.mxu0 0.0
  %511 = vmatpush1.msra.mxu0 0.0
  %512 = vmatprep.subr.mxu0 0.0
  %513 = vmatpush1.msra.mxu0 0.0
  %514 = vmatprep.subr.mxu0 0.0
  %515 = vmatpush1.msra.mxu0 0.0
  %516 = vmatprep.subr.mxu0 0.0
  %517 = vmatpush1.msra.mxu0 0.0
  %518 = vmatprep.subr.mxu0 0.0
  %519 = vmatpush1.msra.mxu0 0.0
  %520 = vmatprep.subr.mxu0 0.0
  %521 = vmatpush1.msra.mxu0 0.0
  %522 = vmatprep.subr.mxu0 0.0
  %523 = vmatpush1.msra.mxu0 0.0
  %524 = vmatprep.subr.mxu0 0.0
  %525 = vmatpush1.msra.mxu0 0.0
  %526 = vmatprep.subr.mxu0 0.0
  %527 = vmatpush1.msra.mxu0 0.0
  %528 = vmatprep.mubr.f32.mxu0 0.0
  %529 = vmatmul.mubr.f32.gmra.mrb[0].mxu0 %v383
  %v530 = vpop.f32.mrb[0].mxu0
  %v531 = vadd.f32 %v378, %v530
  %v532 = vpop.f32.mrb[0].mxu0
  %v533 = vadd.f32 %v380, %v532
  %534 = vdwg.mxu0
  %539 = vrot.lane.b32.xlu0 %v460, 17
  %v540 = vpop.permute.xlu0 %539
  %541 = vrot.lane.b32.xlu0 %v462, 17
  %v542 = vpop.permute.xlu0 %541
  %543 = vrot.lane.b32.xlu0 %v531, 17
  %v544 = vpop.permute.xlu0 %543
  %545 = vrot.lane.b32.xlu0 %v533, 17
  %v546 = vpop.permute.xlu0 %545
  %vm547 = vcmask 138240
  %v548 = vsel %vm547, %v540, %v542
  %v549 = vsel %vm547, %v542, %v544
  %v550 = vsel %vm547, %v544, %v546
  %v555 = vsel %vm547, 0.0, %v540
  %v556 = vlaneseq
  %v557 = vshrl.u32 %v556, 7
  %v558 = vsub.s32 0, %v557
  %v559 = vrot.slane %v38, %v558
  %v560 = vlaneseq
  %v561 = vshrl.u32 %v560, 7
  %v562 = vsub.s32 0, %v561
  %v563 = vrot.slane %v39, %v562
  %v564 = vlaneseq
  %v565 = vshrl.u32 %v564, 7
  %v566 = vsub.s32 0, %v565
  %v567 = vrot.slane %v40, %v566
  %v568 = vlaneseq
  %v569 = vshrl.u32 %v568, 7
  %v570 = vsub.s32 0, %v569
  %v571 = vrot.slane %v41, %v570
  %v572 = vmul.f32 %v555, %v559
  %v573 = vmul.f32 %v548, %v563
  %v574 = vmul.f32 %v549, %v567
  %v575 = vmul.f32 %v550, %v571
  %s576 = scalar_lea.vmem %s4, 8
  %v577 = vld [vmem:[%s576] sm:$0xff]
  %s578 = scalar_lea.vmem %s5, 8
  %v579 = vld [vmem:[%s578] sm:$0xff]
  %v581 = vsel %vm223, %v579, 0
  %583 = vmatprep.subr.mxu0 %v232
  %584 = vmatpush1.msra.mxu0 %v229
  %585 = vmatprep.subr.mxu0 0.0
  %586 = vmatpush1.msra.mxu0 0.0
  %587 = vmatprep.subr.mxu0 0.0
  %588 = vmatpush1.msra.mxu0 0.0
  %589 = vmatprep.subr.mxu0 0.0
  %590 = vmatpush1.msra.mxu0 0.0
  %591 = vmatprep.subr.mxu0 0.0
  %592 = vmatpush1.msra.mxu0 0.0
  %593 = vmatprep.subr.mxu0 0.0
  %594 = vmatpush1.msra.mxu0 0.0
  %595 = vmatprep.subr.mxu0 0.0
  %596 = vmatpush1.msra.mxu0 0.0
  %597 = vmatprep.subr.mxu0 0.0
  %598 = vmatpush1.msra.mxu0 0.0
  %599 = vmatprep.subr.mxu0 0.0
  %600 = vmatpush1.msra.mxu0 0.0
  %601 = vmatprep.subr.mxu0 0.0
  %602 = vmatpush1.msra.mxu0 0.0
  %603 = vmatprep.subr.mxu0 0.0
  %604 = vmatpush1.msra.mxu0 0.0
  %605 = vmatprep.subr.mxu0 0.0
  %606 = vmatpush1.msra.mxu0 0.0
  %607 = vmatprep.subr.mxu0 0.0
  %608 = vmatpush1.msra.mxu0 0.0
  %609 = vmatprep.subr.mxu0 0.0
  %610 = vmatpush1.msra.mxu0 0.0
  %611 = vmatprep.subr.mxu0 0.0
  %612 = vmatpush1.msra.mxu0 0.0
  %613 = vmatprep.subr.mxu0 0.0
  %614 = vmatpush1.msra.mxu0 0.0
  %615 = vmatprep.subr.mxu0 0.0
  %616 = vmatpush1.msra.mxu0 0.0
  %617 = vmatprep.subr.mxu0 0.0
  %618 = vmatpush1.msra.mxu0 0.0
  %619 = vmatprep.subr.mxu0 0.0
  %620 = vmatpush1.msra.mxu0 0.0
  %621 = vmatprep.subr.mxu0 0.0
  %622 = vmatpush1.msra.mxu0 0.0
  %623 = vmatprep.subr.mxu0 0.0
  %624 = vmatpush1.msra.mxu0 0.0
  %625 = vmatprep.subr.mxu0 0.0
  %626 = vmatpush1.msra.mxu0 0.0
  %627 = vmatprep.subr.mxu0 0.0
  %628 = vmatpush1.msra.mxu0 0.0
  %629 = vmatprep.subr.mxu0 0.0
  %630 = vmatpush1.msra.mxu0 0.0
  %631 = vmatprep.subr.mxu0 0.0
  %632 = vmatpush1.msra.mxu0 0.0
  %633 = vmatprep.subr.mxu0 0.0
  %634 = vmatpush1.msra.mxu0 0.0
  %635 = vmatprep.subr.mxu0 0.0
  %636 = vmatpush1.msra.mxu0 0.0
  %637 = vmatprep.subr.mxu0 0.0
  %638 = vmatpush1.msra.mxu0 0.0
  %639 = vmatprep.subr.mxu0 0.0
  %640 = vmatpush1.msra.mxu0 0.0
  %641 = vmatprep.subr.mxu0 0.0
  %642 = vmatpush1.msra.mxu0 0.0
  %643 = vmatprep.subr.mxu0 0.0
  %644 = vmatpush1.msra.mxu0 0.0
  %645 = vmatprep.subr.mxu0 0.0
  %646 = vmatpush1.msra.mxu0 0.0
  %647 = vmatprep.mubr.f32.mxu0 0.0
  %648 = vmatmul.mubr.f32.gmra.mrb[0].mxu0 %v581
  %v649 = vpop.f32.mrb[0].mxu0
  %v650 = vadd.f32 0.0, %v649
  %v651 = vpop.f32.mrb[0].mxu0
  %v652 = vadd.f32 0.0, %v651
  %653 = vdwg.mxu0
  %654 = vmatprep.subr.mxu0 %v238
  %655 = vmatpush1.msra.mxu0 %v235
  %656 = vmatprep.subr.mxu0 0.0
  %657 = vmatpush1.msra.mxu0 0.0
  %658 = vmatprep.subr.mxu0 0.0
  %659 = vmatpush1.msra.mxu0 0.0
  %660 = vmatprep.subr.mxu0 0.0
  %661 = vmatpush1.msra.mxu0 0.0
  %662 = vmatprep.subr.mxu0 0.0
  %663 = vmatpush1.msra.mxu0 0.0
  %664 = vmatprep.subr.mxu0 0.0
  %665 = vmatpush1.msra.mxu0 0.0
  %666 = vmatprep.subr.mxu0 0.0
  %667 = vmatpush1.msra.mxu0 0.0
  %668 = vmatprep.subr.mxu0 0.0
  %669 = vmatpush1.msra.mxu0 0.0
  %670 = vmatprep.subr.mxu0 0.0
  %671 = vmatpush1.msra.mxu0 0.0
  %672 = vmatprep.subr.mxu0 0.0
  %673 = vmatpush1.msra.mxu0 0.0
  %674 = vmatprep.subr.mxu0 0.0
  %675 = vmatpush1.msra.mxu0 0.0
  %676 = vmatprep.subr.mxu0 0.0
  %677 = vmatpush1.msra.mxu0 0.0
  %678 = vmatprep.subr.mxu0 0.0
  %679 = vmatpush1.msra.mxu0 0.0
  %680 = vmatprep.subr.mxu0 0.0
  %681 = vmatpush1.msra.mxu0 0.0
  %682 = vmatprep.subr.mxu0 0.0
  %683 = vmatpush1.msra.mxu0 0.0
  %684 = vmatprep.subr.mxu0 0.0
  %685 = vmatpush1.msra.mxu0 0.0
  %686 = vmatprep.subr.mxu0 0.0
  %687 = vmatpush1.msra.mxu0 0.0
  %688 = vmatprep.subr.mxu0 0.0
  %689 = vmatpush1.msra.mxu0 0.0
  %690 = vmatprep.subr.mxu0 0.0
  %691 = vmatpush1.msra.mxu0 0.0
  %692 = vmatprep.subr.mxu0 0.0
  %693 = vmatpush1.msra.mxu0 0.0
  %694 = vmatprep.subr.mxu0 0.0
  %695 = vmatpush1.msra.mxu0 0.0
  %696 = vmatprep.subr.mxu0 0.0
  %697 = vmatpush1.msra.mxu0 0.0
  %698 = vmatprep.subr.mxu0 0.0
  %699 = vmatpush1.msra.mxu0 0.0
  %700 = vmatprep.subr.mxu0 0.0
  %701 = vmatpush1.msra.mxu0 0.0
  %702 = vmatprep.subr.mxu0 0.0
  %703 = vmatpush1.msra.mxu0 0.0
  %704 = vmatprep.subr.mxu0 0.0
  %705 = vmatpush1.msra.mxu0 0.0
  %706 = vmatprep.subr.mxu0 0.0
  %707 = vmatpush1.msra.mxu0 0.0
  %708 = vmatprep.subr.mxu0 0.0
  %709 = vmatpush1.msra.mxu0 0.0
  %710 = vmatprep.subr.mxu0 0.0
  %711 = vmatpush1.msra.mxu0 0.0
  %712 = vmatprep.subr.mxu0 0.0
  %713 = vmatpush1.msra.mxu0 0.0
  %714 = vmatprep.subr.mxu0 0.0
  %715 = vmatpush1.msra.mxu0 0.0
  %716 = vmatprep.subr.mxu0 0.0
  %717 = vmatpush1.msra.mxu0 0.0
  %718 = vmatprep.mubr.f32.mxu0 0.0
  %719 = vmatmul.mubr.f32.gmra.mrb[0].mxu0 %v581
  %v720 = vpop.f32.mrb[0].mxu0
  %v721 = vadd.f32 0.0, %v720
  %v722 = vpop.f32.mrb[0].mxu0
  %v723 = vadd.f32 0.0, %v722
  %724 = vdwg.mxu0
  %v726 = vsel %vm223, %v577, 0
  %728 = vmatprep.subr.mxu0 %v387
  %729 = vmatpush1.msra.mxu0 %v385
  %730 = vmatprep.subr.mxu0 0.0
  %731 = vmatpush1.msra.mxu0 0.0
  %732 = vmatprep.subr.mxu0 0.0
  %733 = vmatpush1.msra.mxu0 0.0
  %734 = vmatprep.subr.mxu0 0.0
  %735 = vmatpush1.msra.mxu0 0.0
  %736 = vmatprep.subr.mxu0 0.0
  %737 = vmatpush1.msra.mxu0 0.0
  %738 = vmatprep.subr.mxu0 0.0
  %739 = vmatpush1.msra.mxu0 0.0
  %740 = vmatprep.subr.mxu0 0.0
  %741 = vmatpush1.msra.mxu0 0.0
  %742 = vmatprep.subr.mxu0 0.0
  %743 = vmatpush1.msra.mxu0 0.0
  %744 = vmatprep.subr.mxu0 0.0
  %745 = vmatpush1.msra.mxu0 0.0
  %746 = vmatprep.subr.mxu0 0.0
  %747 = vmatpush1.msra.mxu0 0.0
  %748 = vmatprep.subr.mxu0 0.0
  %749 = vmatpush1.msra.mxu0 0.0
  %750 = vmatprep.subr.mxu0 0.0
  %751 = vmatpush1.msra.mxu0 0.0
  %752 = vmatprep.subr.mxu0 0.0
  %753 = vmatpush1.msra.mxu0 0.0
  %754 = vmatprep.subr.mxu0 0.0
  %755 = vmatpush1.msra.mxu0 0.0
  %756 = vmatprep.subr.mxu0 0.0
  %757 = vmatpush1.msra.mxu0 0.0
  %758 = vmatprep.subr.mxu0 0.0
  %759 = vmatpush1.msra.mxu0 0.0
  %760 = vmatprep.subr.mxu0 0.0
  %761 = vmatpush1.msra.mxu0 0.0
  %762 = vmatprep.subr.mxu0 0.0
  %763 = vmatpush1.msra.mxu0 0.0
  %764 = vmatprep.subr.mxu0 0.0
  %765 = vmatpush1.msra.mxu0 0.0
  %766 = vmatprep.subr.mxu0 0.0
  %767 = vmatpush1.msra.mxu0 0.0
  %768 = vmatprep.subr.mxu0 0.0
  %769 = vmatpush1.msra.mxu0 0.0
  %770 = vmatprep.subr.mxu0 0.0
  %771 = vmatpush1.msra.mxu0 0.0
  %772 = vmatprep.subr.mxu0 0.0
  %773 = vmatpush1.msra.mxu0 0.0
  %774 = vmatprep.subr.mxu0 0.0
  %775 = vmatpush1.msra.mxu0 0.0
  %776 = vmatprep.subr.mxu0 0.0
  %777 = vmatpush1.msra.mxu0 0.0
  %778 = vmatprep.subr.mxu0 0.0
  %779 = vmatpush1.msra.mxu0 0.0
  %780 = vmatprep.subr.mxu0 0.0
  %781 = vmatpush1.msra.mxu0 0.0
  %782 = vmatprep.subr.mxu0 0.0
  %783 = vmatpush1.msra.mxu0 0.0
  %784 = vmatprep.subr.mxu0 0.0
  %785 = vmatpush1.msra.mxu0 0.0
  %786 = vmatprep.subr.mxu0 0.0
  %787 = vmatpush1.msra.mxu0 0.0
  %788 = vmatprep.subr.mxu0 0.0
  %789 = vmatpush1.msra.mxu0 0.0
  %790 = vmatprep.subr.mxu0 0.0
  %791 = vmatpush1.msra.mxu0 0.0
  %792 = vmatprep.mubr.f32.mxu0 0.0
  %793 = vmatmul.mubr.f32.gmra.mrb[0].mxu0 %v726
  %v794 = vpop.f32.mrb[0].mxu0
  %v795 = vadd.f32 %v650, %v794
  %v796 = vpop.f32.mrb[0].mxu0
  %v797 = vadd.f32 %v652, %v796
  %798 = vdwg.mxu0
  %799 = vmatprep.subr.mxu0 %v391
  %800 = vmatpush1.msra.mxu0 %v389
  %801 = vmatprep.subr.mxu0 0.0
  %802 = vmatpush1.msra.mxu0 0.0
  %803 = vmatprep.subr.mxu0 0.0
  %804 = vmatpush1.msra.mxu0 0.0
  %805 = vmatprep.subr.mxu0 0.0
  %806 = vmatpush1.msra.mxu0 0.0
  %807 = vmatprep.subr.mxu0 0.0
  %808 = vmatpush1.msra.mxu0 0.0
  %809 = vmatprep.subr.mxu0 0.0
  %810 = vmatpush1.msra.mxu0 0.0
  %811 = vmatprep.subr.mxu0 0.0
  %812 = vmatpush1.msra.mxu0 0.0
  %813 = vmatprep.subr.mxu0 0.0
  %814 = vmatpush1.msra.mxu0 0.0
  %815 = vmatprep.subr.mxu0 0.0
  %816 = vmatpush1.msra.mxu0 0.0
  %817 = vmatprep.subr.mxu0 0.0
  %818 = vmatpush1.msra.mxu0 0.0
  %819 = vmatprep.subr.mxu0 0.0
  %820 = vmatpush1.msra.mxu0 0.0
  %821 = vmatprep.subr.mxu0 0.0
  %822 = vmatpush1.msra.mxu0 0.0
  %823 = vmatprep.subr.mxu0 0.0
  %824 = vmatpush1.msra.mxu0 0.0
  %825 = vmatprep.subr.mxu0 0.0
  %826 = vmatpush1.msra.mxu0 0.0
  %827 = vmatprep.subr.mxu0 0.0
  %828 = vmatpush1.msra.mxu0 0.0
  %829 = vmatprep.subr.mxu0 0.0
  %830 = vmatpush1.msra.mxu0 0.0
  %831 = vmatprep.subr.mxu0 0.0
  %832 = vmatpush1.msra.mxu0 0.0
  %833 = vmatprep.subr.mxu0 0.0
  %834 = vmatpush1.msra.mxu0 0.0
  %835 = vmatprep.subr.mxu0 0.0
  %836 = vmatpush1.msra.mxu0 0.0
  %837 = vmatprep.subr.mxu0 0.0
  %838 = vmatpush1.msra.mxu0 0.0
  %839 = vmatprep.subr.mxu0 0.0
  %840 = vmatpush1.msra.mxu0 0.0
  %841 = vmatprep.subr.mxu0 0.0
  %842 = vmatpush1.msra.mxu0 0.0
  %843 = vmatprep.subr.mxu0 0.0
  %844 = vmatpush1.msra.mxu0 0.0
  %845 = vmatprep.subr.mxu0 0.0
  %846 = vmatpush1.msra.mxu0 0.0
  %847 = vmatprep.subr.mxu0 0.0
  %848 = vmatpush1.msra.mxu0 0.0
  %849 = vmatprep.subr.mxu0 0.0
  %850 = vmatpush1.msra.mxu0 0.0
  %851 = vmatprep.subr.mxu0 0.0
  %852 = vmatpush1.msra.mxu0 0.0
  %853 = vmatprep.subr.mxu0 0.0
  %854 = vmatpush1.msra.mxu0 0.0
  %855 = vmatprep.subr.mxu0 0.0
  %856 = vmatpush1.msra.mxu0 0.0
  %857 = vmatprep.subr.mxu0 0.0
  %858 = vmatpush1.msra.mxu0 0.0
  %859 = vmatprep.subr.mxu0 0.0
  %860 = vmatpush1.msra.mxu0 0.0
  %861 = vmatprep.subr.mxu0 0.0
  %862 = vmatpush1.msra.mxu0 0.0
  %863 = vmatprep.mubr.f32.mxu0 0.0
  %864 = vmatmul.mubr.f32.gmra.mrb[0].mxu0 %v726
  %v865 = vpop.f32.mrb[0].mxu0
  %v866 = vadd.f32 %v721, %v865
  %v867 = vpop.f32.mrb[0].mxu0
  %v868 = vadd.f32 %v723, %v867
  %869 = vdwg.mxu0
  %874 = vrot.lane.b32.xlu0 %v795, 16
  %v875 = vpop.permute.xlu0 %874
  %876 = vrot.lane.b32.xlu0 %v797, 16
  %v877 = vpop.permute.xlu0 %876
  %878 = vrot.lane.b32.xlu0 %v866, 16
  %v879 = vpop.permute.xlu0 %878
  %880 = vrot.lane.b32.xlu0 %v868, 16
  %v881 = vpop.permute.xlu0 %880
  %vm882 = vcmask 130048
  %v883 = vsel %vm882, %v875, %v877
  %v884 = vsel %vm882, %v877, %v879
  %v885 = vsel %vm882, %v879, %v881
  %v890 = vsel %vm882, 0.0, %v875
  %v891 = vlaneseq
  %v892 = vshrl.u32 %v891, 7
  %v893 = vsub.s32 1, %v892
  %v894 = vrot.slane %v38, %v893
  %v895 = vlaneseq
  %v896 = vshrl.u32 %v895, 7
  %v897 = vsub.s32 1, %v896
  %v898 = vrot.slane %v39, %v897
  %v899 = vlaneseq
  %v900 = vshrl.u32 %v899, 7
  %v901 = vsub.s32 1, %v900
  %v902 = vrot.slane %v40, %v901
  %v903 = vlaneseq
  %v904 = vshrl.u32 %v903, 7
  %v905 = vsub.s32 1, %v904
  %v906 = vrot.slane %v41, %v905
  %v907 = vmul.f32 %v890, %v894
  %v908 = vmul.f32 %v883, %v898
  %v909 = vmul.f32 %v884, %v902
  %v910 = vmul.f32 %v885, %v906
  %v911 = vadd.f32 %v572, %v907
  %v912 = vadd.f32 %v573, %v908
  %v913 = vadd.f32 %v574, %v909
  %v914 = vadd.f32 %v575, %v910
  %s915 = scalar_lea.vmem %s4, 16
  %v916 = vld [vmem:[%s915] sm:$0xff]
  %s917 = scalar_lea.vmem %s5, 16
  %v918 = vld [vmem:[%s917] sm:$0xff]
  %v920 = vsel %vm223, %v918, 0
  %922 = vmatprep.subr.mxu0 %v232
  %923 = vmatpush1.msra.mxu0 %v229
  %924 = vmatprep.subr.mxu0 0.0
  %925 = vmatpush1.msra.mxu0 0.0
  %926 = vmatprep.subr.mxu0 0.0
  %927 = vmatpush1.msra.mxu0 0.0
  %928 = vmatprep.subr.mxu0 0.0
  %929 = vmatpush1.msra.mxu0 0.0
  %930 = vmatprep.subr.mxu0 0.0
  %931 = vmatpush1.msra.mxu0 0.0
  %932 = vmatprep.subr.mxu0 0.0
  %933 = vmatpush1.msra.mxu0 0.0
  %934 = vmatprep.subr.mxu0 0.0
  %935 = vmatpush1.msra.mxu0 0.0
  %936 = vmatprep.subr.mxu0 0.0
  %937 = vmatpush1.msra.mxu0 0.0
  %938 = vmatprep.subr.mxu0 0.0
  %939 = vmatpush1.msra.mxu0 0.0
  %940 = vmatprep.subr.mxu0 0.0
  %941 = vmatpush1.msra.mxu0 0.0
  %942 = vmatprep.subr.mxu0 0.0
  %943 = vmatpush1.msra.mxu0 0.0
  %944 = vmatprep.subr.mxu0 0.0
  %945 = vmatpush1.msra.mxu0 0.0
  %946 = vmatprep.subr.mxu0 0.0
  %947 = vmatpush1.msra.mxu0 0.0
  %948 = vmatprep.subr.mxu0 0.0
  %949 = vmatpush1.msra.mxu0 0.0
  %950 = vmatprep.subr.mxu0 0.0
  %951 = vmatpush1.msra.mxu0 0.0
  %952 = vmatprep.subr.mxu0 0.0
  %953 = vmatpush1.msra.mxu0 0.0
  %954 = vmatprep.subr.mxu0 0.0
  %955 = vmatpush1.msra.mxu0 0.0
  %956 = vmatprep.subr.mxu0 0.0
  %957 = vmatpush1.msra.mxu0 0.0
  %958 = vmatprep.subr.mxu0 0.0
  %959 = vmatpush1.msra.mxu0 0.0
  %960 = vmatprep.subr.mxu0 0.0
  %961 = vmatpush1.msra.mxu0 0.0
  %962 = vmatprep.subr.mxu0 0.0
  %963 = vmatpush1.msra.mxu0 0.0
  %964 = vmatprep.subr.mxu0 0.0
  %965 = vmatpush1.msra.mxu0 0.0
  %966 = vmatprep.subr.mxu0 0.0
  %967 = vmatpush1.msra.mxu0 0.0
  %968 = vmatprep.subr.mxu0 0.0
  %969 = vmatpush1.msra.mxu0 0.0
  %970 = vmatprep.subr.mxu0 0.0
  %971 = vmatpush1.msra.mxu0 0.0
  %972 = vmatprep.subr.mxu0 0.0
  %973 = vmatpush1.msra.mxu0 0.0
  %974 = vmatprep.subr.mxu0 0.0
  %975 = vmatpush1.msra.mxu0 0.0
  %976 = vmatprep.subr.mxu0 0.0
  %977 = vmatpush1.msra.mxu0 0.0
  %978 = vmatprep.subr.mxu0 0.0
  %979 = vmatpush1.msra.mxu0 0.0
  %980 = vmatprep.subr.mxu0 0.0
  %981 = vmatpush1.msra.mxu0 0.0
  %982 = vmatprep.subr.mxu0 0.0
  %983 = vmatpush1.msra.mxu0 0.0
  %984 = vmatprep.subr.mxu0 0.0
  %985 = vmatpush1.msra.mxu0 0.0
  %986 = vmatprep.mubr.f32.mxu0 0.0
  %987 = vmatmul.mubr.f32.gmra.mrb[0].mxu0 %v920
  %v988 = vpop.f32.mrb[0].mxu0
  %v989 = vadd.f32 0.0, %v988
  %v990 = vpop.f32.mrb[0].mxu0
  %v991 = vadd.f32 0.0, %v990
  %992 = vdwg.mxu0
  %993 = vmatprep.subr.mxu0 %v238
  %994 = vmatpush1.msra.mxu0 %v235
  %995 = vmatprep.subr.mxu0 0.0
  %996 = vmatpush1.msra.mxu0 0.0
  %997 = vmatprep.subr.mxu0 0.0
  %998 = vmatpush1.msra.mxu0 0.0
  %999 = vmatprep.subr.mxu0 0.0
  %1000 = vmatpush1.msra.mxu0 0.0
  %1001 = vmatprep.subr.mxu0 0.0
  %1002 = vmatpush1.msra.mxu0 0.0
  %1003 = vmatprep.subr.mxu0 0.0
  %1004 = vmatpush1.msra.mxu0 0.0
  %1005 = vmatprep.subr.mxu0 0.0
  %1006 = vmatpush1.msra.mxu0 0.0
  %1007 = vmatprep.subr.mxu0 0.0
  %1008 = vmatpush1.msra.mxu0 0.0
  %1009 = vmatprep.subr.mxu0 0.0
  %1010 = vmatpush1.msra.mxu0 0.0
  %1011 = vmatprep.subr.mxu0 0.0
  %1012 = vmatpush1.msra.mxu0 0.0
  %1013 = vmatprep.subr.mxu0 0.0
  %1014 = vmatpush1.msra.mxu0 0.0
  %1015 = vmatprep.subr.mxu0 0.0
  %1016 = vmatpush1.msra.mxu0 0.0
  %1017 = vmatprep.subr.mxu0 0.0
  %1018 = vmatpush1.msra.mxu0 0.0
  %1019 = vmatprep.subr.mxu0 0.0
  %1020 = vmatpush1.msra.mxu0 0.0
  %1021 = vmatprep.subr.mxu0 0.0
  %1022 = vmatpush1.msra.mxu0 0.0
  %1023 = vmatprep.subr.mxu0 0.0
  %1024 = vmatpush1.msra.mxu0 0.0
  %1025 = vmatprep.subr.mxu0 0.0
  %1026 = vmatpush1.msra.mxu0 0.0
  %1027 = vmatprep.subr.mxu0 0.0
  %1028 = vmatpush1.msra.mxu0 0.0
  %1029 = vmatprep.subr.mxu0 0.0
  %1030 = vmatpush1.msra.mxu0 0.0
  %1031 = vmatprep.subr.mxu0 0.0
  %1032 = vmatpush1.msra.mxu0 0.0
  %1033 = vmatprep.subr.mxu0 0.0
  %1034 = vmatpush1.msra.mxu0 0.0
  %1035 = vmatprep.subr.mxu0 0.0
  %1036 = vmatpush1.msra.mxu0 0.0
  %1037 = vmatprep.subr.mxu0 0.0
  %1038 = vmatpush1.msra.mxu0 0.0
  %1039 = vmatprep.subr.mxu0 0.0
  %1040 = vmatpush1.msra.mxu0 0.0
  %1041 = vmatprep.subr.mxu0 0.0
  %1042 = vmatpush1.msra.mxu0 0.0
  %1043 = vmatprep.subr.mxu0 0.0
  %1044 = vmatpush1.msra.mxu0 0.0
  %1045 = vmatprep.subr.mxu0 0.0
  %1046 = vmatpush1.msra.mxu0 0.0
  %1047 = vmatprep.subr.mxu0 0.0
  %1048 = vmatpush1.msra.mxu0 0.0
  %1049 = vmatprep.subr.mxu0 0.0
  %1050 = vmatpush1.msra.mxu0 0.0
  %1051 = vmatprep.subr.mxu0 0.0
  %1052 = vmatpush1.msra.mxu0 0.0
  %1053 = vmatprep.subr.mxu0 0.0
  %1054 = vmatpush1.msra.mxu0 0.0
  %1055 = vmatprep.subr.mxu0 0.0
  %1056 = vmatpush1.msra.mxu0 0.0
  %1057 = vmatprep.mubr.f32.mxu0 0.0
  %1058 = vmatmul.mubr.f32.gmra.mrb[0].mxu0 %v920
  %v1059 = vpop.f32.mrb[0].mxu0
  %v1060 = vadd.f32 0.0, %v1059
  %v1061 = vpop.f32.mrb[0].mxu0
  %v1062 = vadd.f32 0.0, %v1061
  %1063 = vdwg.mxu0
  %v1065 = vsel %vm223, %v916, 0
  %1067 = vmatprep.subr.mxu0 %v387
  %1068 = vmatpush1.msra.mxu0 %v385
  %1069 = vmatprep.subr.mxu0 0.0
  %1070 = vmatpush1.msra.mxu0 0.0
  %1071 = vmatprep.subr.mxu0 0.0
  %1072 = vmatpush1.msra.mxu0 0.0
  %1073 = vmatprep.subr.mxu0 0.0
  %1074 = vmatpush1.msra.mxu0 0.0
  %1075 = vmatprep.subr.mxu0 0.0
  %1076 = vmatpush1.msra.mxu0 0.0
  %1077 = vmatprep.subr.mxu0 0.0
  %1078 = vmatpush1.msra.mxu0 0.0
  %1079 = vmatprep.subr.mxu0 0.0
  %1080 = vmatpush1.msra.mxu0 0.0
  %1081 = vmatprep.subr.mxu0 0.0
  %1082 = vmatpush1.msra.mxu0 0.0
  %1083 = vmatprep.subr.mxu0 0.0
  %1084 = vmatpush1.msra.mxu0 0.0
  %1085 = vmatprep.subr.mxu0 0.0
  %1086 = vmatpush1.msra.mxu0 0.0
  %1087 = vmatprep.subr.mxu0 0.0
  %1088 = vmatpush1.msra.mxu0 0.0
  %1089 = vmatprep.subr.mxu0 0.0
  %1090 = vmatpush1.msra.mxu0 0.0
  %1091 = vmatprep.subr.mxu0 0.0
  %1092 = vmatpush1.msra.mxu0 0.0
  %1093 = vmatprep.subr.mxu0 0.0
  %1094 = vmatpush1.msra.mxu0 0.0
  %1095 = vmatprep.subr.mxu0 0.0
  %1096 = vmatpush1.msra.mxu0 0.0
  %1097 = vmatprep.subr.mxu0 0.0
  %1098 = vmatpush1.msra.mxu0 0.0
  %1099 = vmatprep.subr.mxu0 0.0
  %1100 = vmatpush1.msra.mxu0 0.0
  %1101 = vmatprep.subr.mxu0 0.0
  %1102 = vmatpush1.msra.mxu0 0.0
  %1103 = vmatprep.subr.mxu0 0.0
  %1104 = vmatpush1.msra.mxu0 0.0
  %1105 = vmatprep.subr.mxu0 0.0
  %1106 = vmatpush1.msra.mxu0 0.0
  %1107 = vmatprep.subr.mxu0 0.0
  %1108 = vmatpush1.msra.mxu0 0.0
  %1109 = vmatprep.subr.mxu0 0.0
  %1110 = vmatpush1.msra.mxu0 0.0
  %1111 = vmatprep.subr.mxu0 0.0
  %1112 = vmatpush1.msra.mxu0 0.0
  %1113 = vmatprep.subr.mxu0 0.0
  %1114 = vmatpush1.msra.mxu0 0.0
  %1115 = vmatprep.subr.mxu0 0.0
  %1116 = vmatpush1.msra.mxu0 0.0
  %1117 = vmatprep.subr.mxu0 0.0
  %1118 = vmatpush1.msra.mxu0 0.0
  %1119 = vmatprep.subr.mxu0 0.0
  %1120 = vmatpush1.msra.mxu0 0.0
  %1121 = vmatprep.subr.mxu0 0.0
  %1122 = vmatpush1.msra.mxu0 0.0
  %1123 = vmatprep.subr.mxu0 0.0
  %1124 = vmatpush1.msra.mxu0 0.0
  %1125 = vmatprep.subr.mxu0 0.0
  %1126 = vmatpush1.msra.mxu0 0.0
  %1127 = vmatprep.subr.mxu0 0.0
  %1128 = vmatpush1.msra.mxu0 0.0
  %1129 = vmatprep.subr.mxu0 0.0
  %1130 = vmatpush1.msra.mxu0 0.0
  %1131 = vmatprep.mubr.f32.mxu0 0.0
  %1132 = vmatmul.mubr.f32.gmra.mrb[0].mxu0 %v1065
  %v1133 = vpop.f32.mrb[0].mxu0
  %v1134 = vadd.f32 %v989, %v1133
  %v1135 = vpop.f32.mrb[0].mxu0
  %v1136 = vadd.f32 %v991, %v1135
  %1137 = vdwg.mxu0
  %1138 = vmatprep.subr.mxu0 %v391
  %1139 = vmatpush1.msra.mxu0 %v389
  %1140 = vmatprep.subr.mxu0 0.0
  %1141 = vmatpush1.msra.mxu0 0.0
  %1142 = vmatprep.subr.mxu0 0.0
  %1143 = vmatpush1.msra.mxu0 0.0
  %1144 = vmatprep.subr.mxu0 0.0
  %1145 = vmatpush1.msra.mxu0 0.0
  %1146 = vmatprep.subr.mxu0 0.0
  %1147 = vmatpush1.msra.mxu0 0.0
  %1148 = vmatprep.subr.mxu0 0.0
  %1149 = vmatpush1.msra.mxu0 0.0
  %1150 = vmatprep.subr.mxu0 0.0
  %1151 = vmatpush1.msra.mxu0 0.0
  %1152 = vmatprep.subr.mxu0 0.0
  %1153 = vmatpush1.msra.mxu0 0.0
  %1154 = vmatprep.subr.mxu0 0.0
  %1155 = vmatpush1.msra.mxu0 0.0
  %1156 = vmatprep.subr.mxu0 0.0
  %1157 = vmatpush1.msra.mxu0 0.0
  %1158 = vmatprep.subr.mxu0 0.0
  %1159 = vmatpush1.msra.mxu0 0.0
  %1160 = vmatprep.subr.mxu0 0.0
  %1161 = vmatpush1.msra.mxu0 0.0
  %1162 = vmatprep.subr.mxu0 0.0
  %1163 = vmatpush1.msra.mxu0 0.0
  %1164 = vmatprep.subr.mxu0 0.0
  %1165 = vmatpush1.msra.mxu0 0.0
  %1166 = vmatprep.subr.mxu0 0.0
  %1167 = vmatpush1.msra.mxu0 0.0
  %1168 = vmatprep.subr.mxu0 0.0
  %1169 = vmatpush1.msra.mxu0 0.0
  %1170 = vmatprep.subr.mxu0 0.0
  %1171 = vmatpush1.msra.mxu0 0.0
  %1172 = vmatprep.subr.mxu0 0.0
  %1173 = vmatpush1.msra.mxu0 0.0
  %1174 = vmatprep.subr.mxu0 0.0
  %1175 = vmatpush1.msra.mxu0 0.0
  %1176 = vmatprep.subr.mxu0 0.0
  %1177 = vmatpush1.msra.mxu0 0.0
  %1178 = vmatprep.subr.mxu0 0.0
  %1179 = vmatpush1.msra.mxu0 0.0
  %1180 = vmatprep.subr.mxu0 0.0
  %1181 = vmatpush1.msra.mxu0 0.0
  %1182 = vmatprep.subr.mxu0 0.0
  %1183 = vmatpush1.msra.mxu0 0.0
  %1184 = vmatprep.subr.mxu0 0.0
  %1185 = vmatpush1.msra.mxu0 0.0
  %1186 = vmatprep.subr.mxu0 0.0
  %1187 = vmatpush1.msra.mxu0 0.0
  %1188 = vmatprep.subr.mxu0 0.0
  %1189 = vmatpush1.msra.mxu0 0.0
  %1190 = vmatprep.subr.mxu0 0.0
  %1191 = vmatpush1.msra.mxu0 0.0
  %1192 = vmatprep.subr.mxu0 0.0
  %1193 = vmatpush1.msra.mxu0 0.0
  %1194 = vmatprep.subr.mxu0 0.0
  %1195 = vmatpush1.msra.mxu0 0.0
  %1196 = vmatprep.subr.mxu0 0.0
  %1197 = vmatpush1.msra.mxu0 0.0
  %1198 = vmatprep.subr.mxu0 0.0
  %1199 = vmatpush1.msra.mxu0 0.0
  %1200 = vmatprep.subr.mxu0 0.0
  %1201 = vmatpush1.msra.mxu0 0.0
  %1202 = vmatprep.mubr.f32.mxu0 0.0
  %1203 = vmatmul.mubr.f32.gmra.mrb[0].mxu0 %v1065
  %v1204 = vpop.f32.mrb[0].mxu0
  %v1205 = vadd.f32 %v1060, %v1204
  %v1206 = vpop.f32.mrb[0].mxu0
  %v1207 = vadd.f32 %v1062, %v1206
  %1208 = vdwg.mxu0
  %1213 = vrot.lane.b32.xlu0 %v1134, 15
  %v1214 = vpop.permute.xlu0 %1213
  %1215 = vrot.lane.b32.xlu0 %v1136, 15
  %v1216 = vpop.permute.xlu0 %1215
  %1217 = vrot.lane.b32.xlu0 %v1205, 15
  %v1218 = vpop.permute.xlu0 %1217
  %1219 = vrot.lane.b32.xlu0 %v1207, 15
  %v1220 = vpop.permute.xlu0 %1219
  %vm1221 = vcmask 121856
  %v1222 = vsel %vm1221, %v1214, %v1216
  %v1223 = vsel %vm1221, %v1216, %v1218
  %v1224 = vsel %vm1221, %v1218, %v1220
  %v1229 = vsel %vm1221, 0.0, %v1214
  %v1230 = vlaneseq
  %v1231 = vshrl.u32 %v1230, 7
  %v1232 = vsub.s32 2, %v1231
  %v1233 = vrot.slane %v38, %v1232
  %v1234 = vlaneseq
  %v1235 = vshrl.u32 %v1234, 7
  %v1236 = vsub.s32 2, %v1235
  %v1237 = vrot.slane %v39, %v1236
  %v1238 = vlaneseq
  %v1239 = vshrl.u32 %v1238, 7
  %v1240 = vsub.s32 2, %v1239
  %v1241 = vrot.slane %v40, %v1240
  %v1242 = vlaneseq
  %v1243 = vshrl.u32 %v1242, 7
  %v1244 = vsub.s32 2, %v1243
  %v1245 = vrot.slane %v41, %v1244
  %v1246 = vmul.f32 %v1229, %v1233
  %v1247 = vmul.f32 %v1222, %v1237
  %v1248 = vmul.f32 %v1223, %v1241
  %v1249 = vmul.f32 %v1224, %v1245
  %v1250 = vadd.f32 %v911, %v1246
  %v1251 = vadd.f32 %v912, %v1247
  %v1252 = vadd.f32 %v913, %v1248
  %v1253 = vadd.f32 %v914, %v1249
  %s1254 = scalar_lea.vmem %s4, 24
  %v1255 = vld [vmem:[%s1254] sm:$0xff]
  %s1256 = scalar_lea.vmem %s5, 24
  %v1257 = vld [vmem:[%s1256] sm:$0xff]
  %v1259 = vsel %vm223, %v1257, 0
  %1261 = vmatprep.subr.mxu0 %v232
  %1262 = vmatpush1.msra.mxu0 %v229
  %1263 = vmatprep.subr.mxu0 0.0
  %1264 = vmatpush1.msra.mxu0 0.0
  %1265 = vmatprep.subr.mxu0 0.0
  %1266 = vmatpush1.msra.mxu0 0.0
  %1267 = vmatprep.subr.mxu0 0.0
  %1268 = vmatpush1.msra.mxu0 0.0
  %1269 = vmatprep.subr.mxu0 0.0
  %1270 = vmatpush1.msra.mxu0 0.0
  %1271 = vmatprep.subr.mxu0 0.0
  %1272 = vmatpush1.msra.mxu0 0.0
  %1273 = vmatprep.subr.mxu0 0.0
  %1274 = vmatpush1.msra.mxu0 0.0
  %1275 = vmatprep.subr.mxu0 0.0
  %1276 = vmatpush1.msra.mxu0 0.0
  %1277 = vmatprep.subr.mxu0 0.0
  %1278 = vmatpush1.msra.mxu0 0.0
  %1279 = vmatprep.subr.mxu0 0.0
  %1280 = vmatpush1.msra.mxu0 0.0
  %1281 = vmatprep.subr.mxu0 0.0
  %1282 = vmatpush1.msra.mxu0 0.0
  %1283 = vmatprep.subr.mxu0 0.0
  %1284 = vmatpush1.msra.mxu0 0.0
  %1285 = vmatprep.subr.mxu0 0.0
  %1286 = vmatpush1.msra.mxu0 0.0
  %1287 = vmatprep.subr.mxu0 0.0
  %1288 = vmatpush1.msra.mxu0 0.0
  %1289 = vmatprep.subr.mxu0 0.0
  %1290 = vmatpush1.msra.mxu0 0.0
  %1291 = vmatprep.subr.mxu0 0.0
  %1292 = vmatpush1.msra.mxu0 0.0
  %1293 = vmatprep.subr.mxu0 0.0
  %1294 = vmatpush1.msra.mxu0 0.0
  %1295 = vmatprep.subr.mxu0 0.0
  %1296 = vmatpush1.msra.mxu0 0.0
  %1297 = vmatprep.subr.mxu0 0.0
  %1298 = vmatpush1.msra.mxu0 0.0
  %1299 = vmatprep.subr.mxu0 0.0
  %1300 = vmatpush1.msra.mxu0 0.0
  %1301 = vmatprep.subr.mxu0 0.0
  %1302 = vmatpush1.msra.mxu0 0.0
  %1303 = vmatprep.subr.mxu0 0.0
  %1304 = vmatpush1.msra.mxu0 0.0
  %1305 = vmatprep.subr.mxu0 0.0
  %1306 = vmatpush1.msra.mxu0 0.0
  %1307 = vmatprep.subr.mxu0 0.0
  %1308 = vmatpush1.msra.mxu0 0.0
  %1309 = vmatprep.subr.mxu0 0.0
  %1310 = vmatpush1.msra.mxu0 0.0
  %1311 = vmatprep.subr.mxu0 0.0
  %1312 = vmatpush1.msra.mxu0 0.0
  %1313 = vmatprep.subr.mxu0 0.0
  %1314 = vmatpush1.msra.mxu0 0.0
  %1315 = vmatprep.subr.mxu0 0.0
  %1316 = vmatpush1.msra.mxu0 0.0
  %1317 = vmatprep.subr.mxu0 0.0
  %1318 = vmatpush1.msra.mxu0 0.0
  %1319 = vmatprep.subr.mxu0 0.0
  %1320 = vmatpush1.msra.mxu0 0.0
  %1321 = vmatprep.subr.mxu0 0.0
  %1322 = vmatpush1.msra.mxu0 0.0
  %1323 = vmatprep.subr.mxu0 0.0
  %1324 = vmatpush1.msra.mxu0 0.0
  %1325 = vmatprep.mubr.f32.mxu0 0.0
  %1326 = vmatmul.mubr.f32.gmra.mrb[0].mxu0 %v1259
  %v1327 = vpop.f32.mrb[0].mxu0
  %v1328 = vadd.f32 0.0, %v1327
  %v1329 = vpop.f32.mrb[0].mxu0
  %v1330 = vadd.f32 0.0, %v1329
  %1331 = vdwg.mxu0
  %1332 = vmatprep.subr.mxu0 %v238
  %1333 = vmatpush1.msra.mxu0 %v235
  %1334 = vmatprep.subr.mxu0 0.0
  %1335 = vmatpush1.msra.mxu0 0.0
  %1336 = vmatprep.subr.mxu0 0.0
  %1337 = vmatpush1.msra.mxu0 0.0
  %1338 = vmatprep.subr.mxu0 0.0
  %1339 = vmatpush1.msra.mxu0 0.0
  %1340 = vmatprep.subr.mxu0 0.0
  %1341 = vmatpush1.msra.mxu0 0.0
  %1342 = vmatprep.subr.mxu0 0.0
  %1343 = vmatpush1.msra.mxu0 0.0
  %1344 = vmatprep.subr.mxu0 0.0
  %1345 = vmatpush1.msra.mxu0 0.0
  %1346 = vmatprep.subr.mxu0 0.0
  %1347 = vmatpush1.msra.mxu0 0.0
  %1348 = vmatprep.subr.mxu0 0.0
  %1349 = vmatpush1.msra.mxu0 0.0
  %1350 = vmatprep.subr.mxu0 0.0
  %1351 = vmatpush1.msra.mxu0 0.0
  %1352 = vmatprep.subr.mxu0 0.0
  %1353 = vmatpush1.msra.mxu0 0.0
  %1354 = vmatprep.subr.mxu0 0.0
  %1355 = vmatpush1.msra.mxu0 0.0
  %1356 = vmatprep.subr.mxu0 0.0
  %1357 = vmatpush1.msra.mxu0 0.0
  %1358 = vmatprep.subr.mxu0 0.0
  %1359 = vmatpush1.msra.mxu0 0.0
  %1360 = vmatprep.subr.mxu0 0.0
  %1361 = vmatpush1.msra.mxu0 0.0
  %1362 = vmatprep.subr.mxu0 0.0
  %1363 = vmatpush1.msra.mxu0 0.0
  %1364 = vmatprep.subr.mxu0 0.0
  %1365 = vmatpush1.msra.mxu0 0.0
  %1366 = vmatprep.subr.mxu0 0.0
  %1367 = vmatpush1.msra.mxu0 0.0
  %1368 = vmatprep.subr.mxu0 0.0
  %1369 = vmatpush1.msra.mxu0 0.0
  %1370 = vmatprep.subr.mxu0 0.0
  %1371 = vmatpush1.msra.mxu0 0.0
  %1372 = vmatprep.subr.mxu0 0.0
  %1373 = vmatpush1.msra.mxu0 0.0
  %1374 = vmatprep.subr.mxu0 0.0
  %1375 = vmatpush1.msra.mxu0 0.0
  %1376 = vmatprep.subr.mxu0 0.0
  %1377 = vmatpush1.msra.mxu0 0.0
  %1378 = vmatprep.subr.mxu0 0.0
  %1379 = vmatpush1.msra.mxu0 0.0
  %1380 = vmatprep.subr.mxu0 0.0
  %1381 = vmatpush1.msra.mxu0 0.0
  %1382 = vmatprep.subr.mxu0 0.0
  %1383 = vmatpush1.msra.mxu0 0.0
  %1384 = vmatprep.subr.mxu0 0.0
  %1385 = vmatpush1.msra.mxu0 0.0
  %1386 = vmatprep.subr.mxu0 0.0
  %1387 = vmatpush1.msra.mxu0 0.0
  %1388 = vmatprep.subr.mxu0 0.0
  %1389 = vmatpush1.msra.mxu0 0.0
  %1390 = vmatprep.subr.mxu0 0.0
  %1391 = vmatpush1.msra.mxu0 0.0
  %1392 = vmatprep.subr.mxu0 0.0
  %1393 = vmatpush1.msra.mxu0 0.0
  %1394 = vmatprep.subr.mxu0 0.0
  %1395 = vmatpush1.msra.mxu0 0.0
  %1396 = vmatprep.mubr.f32.mxu0 0.0
  %1397 = vmatmul.mubr.f32.gmra.mrb[0].mxu0 %v1259
  %v1398 = vpop.f32.mrb[0].mxu0
  %v1399 = vadd.f32 0.0, %v1398
  %v1400 = vpop.f32.mrb[0].mxu0
  %v1401 = vadd.f32 0.0, %v1400
  %1402 = vdwg.mxu0
  %v1404 = vsel %vm223, %v1255, 0
  %1406 = vmatprep.subr.mxu0 %v387
  %1407 = vmatpush1.msra.mxu0 %v385
  %1408 = vmatprep.subr.mxu0 0.0
  %1409 = vmatpush1.msra.mxu0 0.0
  %1410 = vmatprep.subr.mxu0 0.0
  %1411 = vmatpush1.msra.mxu0 0.0
  %1412 = vmatprep.subr.mxu0 0.0
  %1413 = vmatpush1.msra.mxu0 0.0
  %1414 = vmatprep.subr.mxu0 0.0
  %1415 = vmatpush1.msra.mxu0 0.0
  %1416 = vmatprep.subr.mxu0 0.0
  %1417 = vmatpush1.msra.mxu0 0.0
  %1418 = vmatprep.subr.mxu0 0.0
  %1419 = vmatpush1.msra.mxu0 0.0
  %1420 = vmatprep.subr.mxu0 0.0
  %1421 = vmatpush1.msra.mxu0 0.0
  %1422 = vmatprep.subr.mxu0 0.0
  %1423 = vmatpush1.msra.mxu0 0.0
  %1424 = vmatprep.subr.mxu0 0.0
  %1425 = vmatpush1.msra.mxu0 0.0
  %1426 = vmatprep.subr.mxu0 0.0
  %1427 = vmatpush1.msra.mxu0 0.0
  %1428 = vmatprep.subr.mxu0 0.0
  %1429 = vmatpush1.msra.mxu0 0.0
  %1430 = vmatprep.subr.mxu0 0.0
  %1431 = vmatpush1.msra.mxu0 0.0
  %1432 = vmatprep.subr.mxu0 0.0
  %1433 = vmatpush1.msra.mxu0 0.0
  %1434 = vmatprep.subr.mxu0 0.0
  %1435 = vmatpush1.msra.mxu0 0.0
  %1436 = vmatprep.subr.mxu0 0.0
  %1437 = vmatpush1.msra.mxu0 0.0
  %1438 = vmatprep.subr.mxu0 0.0
  %1439 = vmatpush1.msra.mxu0 0.0
  %1440 = vmatprep.subr.mxu0 0.0
  %1441 = vmatpush1.msra.mxu0 0.0
  %1442 = vmatprep.subr.mxu0 0.0
  %1443 = vmatpush1.msra.mxu0 0.0
  %1444 = vmatprep.subr.mxu0 0.0
  %1445 = vmatpush1.msra.mxu0 0.0
  %1446 = vmatprep.subr.mxu0 0.0
  %1447 = vmatpush1.msra.mxu0 0.0
  %1448 = vmatprep.subr.mxu0 0.0
  %1449 = vmatpush1.msra.mxu0 0.0
  %1450 = vmatprep.subr.mxu0 0.0
  %1451 = vmatpush1.msra.mxu0 0.0
  %1452 = vmatprep.subr.mxu0 0.0
  %1453 = vmatpush1.msra.mxu0 0.0
  %1454 = vmatprep.subr.mxu0 0.0
  %1455 = vmatpush1.msra.mxu0 0.0
  %1456 = vmatprep.subr.mxu0 0.0
  %1457 = vmatpush1.msra.mxu0 0.0
  %1458 = vmatprep.subr.mxu0 0.0
  %1459 = vmatpush1.msra.mxu0 0.0
  %1460 = vmatprep.subr.mxu0 0.0
  %1461 = vmatpush1.msra.mxu0 0.0
  %1462 = vmatprep.subr.mxu0 0.0
  %1463 = vmatpush1.msra.mxu0 0.0
  %1464 = vmatprep.subr.mxu0 0.0
  %1465 = vmatpush1.msra.mxu0 0.0
  %1466 = vmatprep.subr.mxu0 0.0
  %1467 = vmatpush1.msra.mxu0 0.0
  %1468 = vmatprep.subr.mxu0 0.0
  %1469 = vmatpush1.msra.mxu0 0.0
  %1470 = vmatprep.mubr.f32.mxu0 0.0
  %1471 = vmatmul.mubr.f32.gmra.mrb[0].mxu0 %v1404
  %v1472 = vpop.f32.mrb[0].mxu0
  %v1473 = vadd.f32 %v1328, %v1472
  %v1474 = vpop.f32.mrb[0].mxu0
  %v1475 = vadd.f32 %v1330, %v1474
  %1476 = vdwg.mxu0
  %1477 = vmatprep.subr.mxu0 %v391
  %1478 = vmatpush1.msra.mxu0 %v389
  %1479 = vmatprep.subr.mxu0 0.0
  %1480 = vmatpush1.msra.mxu0 0.0
  %1481 = vmatprep.subr.mxu0 0.0
  %1482 = vmatpush1.msra.mxu0 0.0
  %1483 = vmatprep.subr.mxu0 0.0
  %1484 = vmatpush1.msra.mxu0 0.0
  %1485 = vmatprep.subr.mxu0 0.0
  %1486 = vmatpush1.msra.mxu0 0.0
  %1487 = vmatprep.subr.mxu0 0.0
  %1488 = vmatpush1.msra.mxu0 0.0
  %1489 = vmatprep.subr.mxu0 0.0
  %1490 = vmatpush1.msra.mxu0 0.0
  %1491 = vmatprep.subr.mxu0 0.0
  %1492 = vmatpush1.msra.mxu0 0.0
  %1493 = vmatprep.subr.mxu0 0.0
  %1494 = vmatpush1.msra.mxu0 0.0
  %1495 = vmatprep.subr.mxu0 0.0
  %1496 = vmatpush1.msra.mxu0 0.0
  %1497 = vmatprep.subr.mxu0 0.0
  %1498 = vmatpush1.msra.mxu0 0.0
  %1499 = vmatprep.subr.mxu0 0.0
  %1500 = vmatpush1.msra.mxu0 0.0
  %1501 = vmatprep.subr.mxu0 0.0
  %1502 = vmatpush1.msra.mxu0 0.0
  %1503 = vmatprep.subr.mxu0 0.0
  %1504 = vmatpush1.msra.mxu0 0.0
  %1505 = vmatprep.subr.mxu0 0.0
  %1506 = vmatpush1.msra.mxu0 0.0
  %1507 = vmatprep.subr.mxu0 0.0
  %1508 = vmatpush1.msra.mxu0 0.0
  %1509 = vmatprep.subr.mxu0 0.0
  %1510 = vmatpush1.msra.mxu0 0.0
  %1511 = vmatprep.subr.mxu0 0.0
  %1512 = vmatpush1.msra.mxu0 0.0
  %1513 = vmatprep.subr.mxu0 0.0
  %1514 = vmatpush1.msra.mxu0 0.0
  %1515 = vmatprep.subr.mxu0 0.0
  %1516 = vmatpush1.msra.mxu0 0.0
  %1517 = vmatprep.subr.mxu0 0.0
  %1518 = vmatpush1.msra.mxu0 0.0
  %1519 = vmatprep.subr.mxu0 0.0
  %1520 = vmatpush1.msra.mxu0 0.0
  %1521 = vmatprep.subr.mxu0 0.0
  %1522 = vmatpush1.msra.mxu0 0.0
  %1523 = vmatprep.subr.mxu0 0.0
  %1524 = vmatpush1.msra.mxu0 0.0
  %1525 = vmatprep.subr.mxu0 0.0
  %1526 = vmatpush1.msra.mxu0 0.0
  %1527 = vmatprep.subr.mxu0 0.0
  %1528 = vmatpush1.msra.mxu0 0.0
  %1529 = vmatprep.subr.mxu0 0.0
  %1530 = vmatpush1.msra.mxu0 0.0
  %1531 = vmatprep.subr.mxu0 0.0
  %1532 = vmatpush1.msra.mxu0 0.0
  %1533 = vmatprep.subr.mxu0 0.0
  %1534 = vmatpush1.msra.mxu0 0.0
  %1535 = vmatprep.subr.mxu0 0.0
  %1536 = vmatpush1.msra.mxu0 0.0
  %1537 = vmatprep.subr.mxu0 0.0
  %1538 = vmatpush1.msra.mxu0 0.0
  %1539 = vmatprep.subr.mxu0 0.0
  %1540 = vmatpush1.msra.mxu0 0.0
  %1541 = vmatprep.mubr.f32.mxu0 0.0
  %1542 = vmatmul.mubr.f32.gmra.mrb[0].mxu0 %v1404
  %v1543 = vpop.f32.mrb[0].mxu0
  %v1544 = vadd.f32 %v1399, %v1543
  %v1545 = vpop.f32.mrb[0].mxu0
  %v1546 = vadd.f32 %v1401, %v1545
  %1547 = vdwg.mxu0
  %1552 = vrot.lane.b32.xlu0 %v1473, 1
  %v1553 = vpop.permute.xlu0 %1552
  %1554 = vrot.lane.b32.xlu0 %v1475, 1
  %v1555 = vpop.permute.xlu0 %1554
  %1556 = vrot.lane.b32.xlu0 %v1544, 1
  %v1557 = vpop.permute.xlu0 %1556
  %1558 = vrot.lane.b32.xlu0 %v1546, 1
  %v1559 = vpop.permute.xlu0 %1558
  %vm1560 = vcmask 7168
  %v1561 = vsel %vm1560, %v1553, %v1555
  %v1562 = vsel %vm1560, %v1555, %v1557
  %v1563 = vsel %vm1560, %v1557, %v1559
  %v1568 = vsel %vm1560, 0.0, %v1553
  %v1569 = vlaneseq
  %v1570 = vshrl.u32 %v1569, 7
  %v1571 = vsub.s32 3, %v1570
  %v1572 = vrot.slane %v38, %v1571
  %v1573 = vlaneseq
  %v1574 = vshrl.u32 %v1573, 7
  %v1575 = vsub.s32 3, %v1574
  %v1576 = vrot.slane %v39, %v1575
  %v1577 = vlaneseq
  %v1578 = vshrl.u32 %v1577, 7
  %v1579 = vsub.s32 3, %v1578
  %v1580 = vrot.slane %v40, %v1579
  %v1581 = vlaneseq
  %v1582 = vshrl.u32 %v1581, 7
  %v1583 = vsub.s32 3, %v1582
  %v1584 = vrot.slane %v41, %v1583
  %v1585 = vmul.f32 %v1568, %v1572
  %v1586 = vmul.f32 %v1561, %v1576
  %v1587 = vmul.f32 %v1562, %v1580
  %v1588 = vmul.f32 %v1563, %v1584
  %v1589 = vadd.f32 %v1250, %v1585
  %v1590 = vadd.f32 %v1251, %v1586
  %v1591 = vadd.f32 %v1252, %v1587
  %v1592 = vadd.f32 %v1253, %v1588
  %s1593 = scalar_lea.vmem %s4, 32
  %v1594 = vld [vmem:[%s1593] sm:$0xff]
  %s1595 = scalar_lea.vmem %s5, 32
  %v1596 = vld [vmem:[%s1595] sm:$0xff]
  %v1598 = vsel %vm223, %v1596, 0
  %1600 = vmatprep.subr.mxu0 %v232
  %1601 = vmatpush1.msra.mxu0 %v229
  %1602 = vmatprep.subr.mxu0 0.0
  %1603 = vmatpush1.msra.mxu0 0.0
  %1604 = vmatprep.subr.mxu0 0.0
  %1605 = vmatpush1.msra.mxu0 0.0
  %1606 = vmatprep.subr.mxu0 0.0
  %1607 = vmatpush1.msra.mxu0 0.0
  %1608 = vmatprep.subr.mxu0 0.0
  %1609 = vmatpush1.msra.mxu0 0.0
  %1610 = vmatprep.subr.mxu0 0.0
  %1611 = vmatpush1.msra.mxu0 0.0
  %1612 = vmatprep.subr.mxu0 0.0
  %1613 = vmatpush1.msra.mxu0 0.0
  %1614 = vmatprep.subr.mxu0 0.0
  %1615 = vmatpush1.msra.mxu0 0.0
  %1616 = vmatprep.subr.mxu0 0.0
  %1617 = vmatpush1.msra.mxu0 0.0
  %1618 = vmatprep.subr.mxu0 0.0
  %1619 = vmatpush1.msra.mxu0 0.0
  %1620 = vmatprep.subr.mxu0 0.0
  %1621 = vmatpush1.msra.mxu0 0.0
  %1622 = vmatprep.subr.mxu0 0.0
  %1623 = vmatpush1.msra.mxu0 0.0
  %1624 = vmatprep.subr.mxu0 0.0
  %1625 = vmatpush1.msra.mxu0 0.0
  %1626 = vmatprep.subr.mxu0 0.0
  %1627 = vmatpush1.msra.mxu0 0.0
  %1628 = vmatprep.subr.mxu0 0.0
  %1629 = vmatpush1.msra.mxu0 0.0
  %1630 = vmatprep.subr.mxu0 0.0
  %1631 = vmatpush1.msra.mxu0 0.0
  %1632 = vmatprep.subr.mxu0 0.0
  %1633 = vmatpush1.msra.mxu0 0.0
  %1634 = vmatprep.subr.mxu0 0.0
  %1635 = vmatpush1.msra.mxu0 0.0
  %1636 = vmatprep.subr.mxu0 0.0
  %1637 = vmatpush1.msra.mxu0 0.0
  %1638 = vmatprep.subr.mxu0 0.0
  %1639 = vmatpush1.msra.mxu0 0.0
  %1640 = vmatprep.subr.mxu0 0.0
  %1641 = vmatpush1.msra.mxu0 0.0
  %1642 = vmatprep.subr.mxu0 0.0
  %1643 = vmatpush1.msra.mxu0 0.0
  %1644 = vmatprep.subr.mxu0 0.0
  %1645 = vmatpush1.msra.mxu0 0.0
  %1646 = vmatprep.subr.mxu0 0.0
  %1647 = vmatpush1.msra.mxu0 0.0
  %1648 = vmatprep.subr.mxu0 0.0
  %1649 = vmatpush1.msra.mxu0 0.0
  %1650 = vmatprep.subr.mxu0 0.0
  %1651 = vmatpush1.msra.mxu0 0.0
  %1652 = vmatprep.subr.mxu0 0.0
  %1653 = vmatpush1.msra.mxu0 0.0
  %1654 = vmatprep.subr.mxu0 0.0
  %1655 = vmatpush1.msra.mxu0 0.0
  %1656 = vmatprep.subr.mxu0 0.0
  %1657 = vmatpush1.msra.mxu0 0.0
  %1658 = vmatprep.subr.mxu0 0.0
  %1659 = vmatpush1.msra.mxu0 0.0
  %1660 = vmatprep.subr.mxu0 0.0
  %1661 = vmatpush1.msra.mxu0 0.0
  %1662 = vmatprep.subr.mxu0 0.0
  %1663 = vmatpush1.msra.mxu0 0.0
  %1664 = vmatprep.mubr.f32.mxu0 0.0
  %1665 = vmatmul.mubr.f32.gmra.mrb[0].mxu0 %v1598
  %v1666 = vpop.f32.mrb[0].mxu0
  %v1667 = vadd.f32 0.0, %v1666
  %v1668 = vpop.f32.mrb[0].mxu0
  %v1669 = vadd.f32 0.0, %v1668
  %1670 = vdwg.mxu0
  %1671 = vmatprep.subr.mxu0 %v238
  %1672 = vmatpush1.msra.mxu0 %v235
  %1673 = vmatprep.subr.mxu0 0.0
  %1674 = vmatpush1.msra.mxu0 0.0
  %1675 = vmatprep.subr.mxu0 0.0
  %1676 = vmatpush1.msra.mxu0 0.0
  %1677 = vmatprep.subr.mxu0 0.0
  %1678 = vmatpush1.msra.mxu0 0.0
  %1679 = vmatprep.subr.mxu0 0.0
  %1680 = vmatpush1.msra.mxu0 0.0
  %1681 = vmatprep.subr.mxu0 0.0
  %1682 = vmatpush1.msra.mxu0 0.0
  %1683 = vmatprep.subr.mxu0 0.0
  %1684 = vmatpush1.msra.mxu0 0.0
  %1685 = vmatprep.subr.mxu0 0.0
  %1686 = vmatpush1.msra.mxu0 0.0
  %1687 = vmatprep.subr.mxu0 0.0
  %1688 = vmatpush1.msra.mxu0 0.0
  %1689 = vmatprep.subr.mxu0 0.0
  %1690 = vmatpush1.msra.mxu0 0.0
  %1691 = vmatprep.subr.mxu0 0.0
  %1692 = vmatpush1.msra.mxu0 0.0
  %1693 = vmatprep.subr.mxu0 0.0
  %1694 = vmatpush1.msra.mxu0 0.0
  %1695 = vmatprep.subr.mxu0 0.0
  %1696 = vmatpush1.msra.mxu0 0.0
  %1697 = vmatprep.subr.mxu0 0.0
  %1698 = vmatpush1.msra.mxu0 0.0
  %1699 = vmatprep.subr.mxu0 0.0
  %1700 = vmatpush1.msra.mxu0 0.0
  %1701 = vmatprep.subr.mxu0 0.0
  %1702 = vmatpush1.msra.mxu0 0.0
  %1703 = vmatprep.subr.mxu0 0.0
  %1704 = vmatpush1.msra.mxu0 0.0
  %1705 = vmatprep.subr.mxu0 0.0
  %1706 = vmatpush1.msra.mxu0 0.0
  %1707 = vmatprep.subr.mxu0 0.0
  %1708 = vmatpush1.msra.mxu0 0.0
  %1709 = vmatprep.subr.mxu0 0.0
  %1710 = vmatpush1.msra.mxu0 0.0
  %1711 = vmatprep.subr.mxu0 0.0
  %1712 = vmatpush1.msra.mxu0 0.0
  %1713 = vmatprep.subr.mxu0 0.0
  %1714 = vmatpush1.msra.mxu0 0.0
  %1715 = vmatprep.subr.mxu0 0.0
  %1716 = vmatpush1.msra.mxu0 0.0
  %1717 = vmatprep.subr.mxu0 0.0
  %1718 = vmatpush1.msra.mxu0 0.0
  %1719 = vmatprep.subr.mxu0 0.0
  %1720 = vmatpush1.msra.mxu0 0.0
  %1721 = vmatprep.subr.mxu0 0.0
  %1722 = vmatpush1.msra.mxu0 0.0
  %1723 = vmatprep.subr.mxu0 0.0
  %1724 = vmatpush1.msra.mxu0 0.0
  %1725 = vmatprep.subr.mxu0 0.0
  %1726 = vmatpush1.msra.mxu0 0.0
  %1727 = vmatprep.subr.mxu0 0.0
  %1728 = vmatpush1.msra.mxu0 0.0
  %1729 = vmatprep.subr.mxu0 0.0
  %1730 = vmatpush1.msra.mxu0 0.0
  %1731 = vmatprep.subr.mxu0 0.0
  %1732 = vmatpush1.msra.mxu0 0.0
  %1733 = vmatprep.subr.mxu0 0.0
  %1734 = vmatpush1.msra.mxu0 0.0
  %1735 = vmatprep.mubr.f32.mxu0 0.0
  %1736 = vmatmul.mubr.f32.gmra.mrb[0].mxu0 %v1598
  %v1737 = vpop.f32.mrb[0].mxu0
  %v1738 = vadd.f32 0.0, %v1737
  %v1739 = vpop.f32.mrb[0].mxu0
  %v1740 = vadd.f32 0.0, %v1739
  %1741 = vdwg.mxu0
  %v1743 = vsel %vm223, %v1594, 0
  %1745 = vmatprep.subr.mxu0 %v387
  %1746 = vmatpush1.msra.mxu0 %v385
  %1747 = vmatprep.subr.mxu0 0.0
  %1748 = vmatpush1.msra.mxu0 0.0
  %1749 = vmatprep.subr.mxu0 0.0
  %1750 = vmatpush1.msra.mxu0 0.0
  %1751 = vmatprep.subr.mxu0 0.0
  %1752 = vmatpush1.msra.mxu0 0.0
  %1753 = vmatprep.subr.mxu0 0.0
  %1754 = vmatpush1.msra.mxu0 0.0
  %1755 = vmatprep.subr.mxu0 0.0
  %1756 = vmatpush1.msra.mxu0 0.0
  %1757 = vmatprep.subr.mxu0 0.0
  %1758 = vmatpush1.msra.mxu0 0.0
  %1759 = vmatprep.subr.mxu0 0.0
  %1760 = vmatpush1.msra.mxu0 0.0
  %1761 = vmatprep.subr.mxu0 0.0
  %1762 = vmatpush1.msra.mxu0 0.0
  %1763 = vmatprep.subr.mxu0 0.0
  %1764 = vmatpush1.msra.mxu0 0.0
  %1765 = vmatprep.subr.mxu0 0.0
  %1766 = vmatpush1.msra.mxu0 0.0
  %1767 = vmatprep.subr.mxu0 0.0
  %1768 = vmatpush1.msra.mxu0 0.0
  %1769 = vmatprep.subr.mxu0 0.0
  %1770 = vmatpush1.msra.mxu0 0.0
  %1771 = vmatprep.subr.mxu0 0.0
  %1772 = vmatpush1.msra.mxu0 0.0
  %1773 = vmatprep.subr.mxu0 0.0
  %1774 = vmatpush1.msra.mxu0 0.0
  %1775 = vmatprep.subr.mxu0 0.0
  %1776 = vmatpush1.msra.mxu0 0.0
  %1777 = vmatprep.subr.mxu0 0.0
  %1778 = vmatpush1.msra.mxu0 0.0
  %1779 = vmatprep.subr.mxu0 0.0
  %1780 = vmatpush1.msra.mxu0 0.0
  %1781 = vmatprep.subr.mxu0 0.0
  %1782 = vmatpush1.msra.mxu0 0.0
  %1783 = vmatprep.subr.mxu0 0.0
  %1784 = vmatpush1.msra.mxu0 0.0
  %1785 = vmatprep.subr.mxu0 0.0
  %1786 = vmatpush1.msra.mxu0 0.0
  %1787 = vmatprep.subr.mxu0 0.0
  %1788 = vmatpush1.msra.mxu0 0.0
  %1789 = vmatprep.subr.mxu0 0.0
  %1790 = vmatpush1.msra.mxu0 0.0
  %1791 = vmatprep.subr.mxu0 0.0
  %1792 = vmatpush1.msra.mxu0 0.0
  %1793 = vmatprep.subr.mxu0 0.0
  %1794 = vmatpush1.msra.mxu0 0.0
  %1795 = vmatprep.subr.mxu0 0.0
  %1796 = vmatpush1.msra.mxu0 0.0
  %1797 = vmatprep.subr.mxu0 0.0
  %1798 = vmatpush1.msra.mxu0 0.0
  %1799 = vmatprep.subr.mxu0 0.0
  %1800 = vmatpush1.msra.mxu0 0.0
  %1801 = vmatprep.subr.mxu0 0.0
  %1802 = vmatpush1.msra.mxu0 0.0
  %1803 = vmatprep.subr.mxu0 0.0
  %1804 = vmatpush1.msra.mxu0 0.0
  %1805 = vmatprep.subr.mxu0 0.0
  %1806 = vmatpush1.msra.mxu0 0.0
  %1807 = vmatprep.subr.mxu0 0.0
  %1808 = vmatpush1.msra.mxu0 0.0
  %1809 = vmatprep.mubr.f32.mxu0 0.0
  %1810 = vmatmul.mubr.f32.gmra.mrb[0].mxu0 %v1743
  %v1811 = vpop.f32.mrb[0].mxu0
  %v1812 = vadd.f32 %v1667, %v1811
  %v1813 = vpop.f32.mrb[0].mxu0
  %v1814 = vadd.f32 %v1669, %v1813
  %1815 = vdwg.mxu0
  %1816 = vmatprep.subr.mxu0 %v391
  %1817 = vmatpush1.msra.mxu0 %v389
  %1818 = vmatprep.subr.mxu0 0.0
  %1819 = vmatpush1.msra.mxu0 0.0
  %1820 = vmatprep.subr.mxu0 0.0
  %1821 = vmatpush1.msra.mxu0 0.0
  %1822 = vmatprep.subr.mxu0 0.0
  %1823 = vmatpush1.msra.mxu0 0.0
  %1824 = vmatprep.subr.mxu0 0.0
  %1825 = vmatpush1.msra.mxu0 0.0
  %1826 = vmatprep.subr.mxu0 0.0
  %1827 = vmatpush1.msra.mxu0 0.0
  %1828 = vmatprep.subr.mxu0 0.0
  %1829 = vmatpush1.msra.mxu0 0.0
  %1830 = vmatprep.subr.mxu0 0.0
  %1831 = vmatpush1.msra.mxu0 0.0
  %1832 = vmatprep.subr.mxu0 0.0
  %1833 = vmatpush1.msra.mxu0 0.0
  %1834 = vmatprep.subr.mxu0 0.0
  %1835 = vmatpush1.msra.mxu0 0.0
  %1836 = vmatprep.subr.mxu0 0.0
  %1837 = vmatpush1.msra.mxu0 0.0
  %1838 = vmatprep.subr.mxu0 0.0
  %1839 = vmatpush1.msra.mxu0 0.0
  %1840 = vmatprep.subr.mxu0 0.0
  %1841 = vmatpush1.msra.mxu0 0.0
  %1842 = vmatprep.subr.mxu0 0.0
  %1843 = vmatpush1.msra.mxu0 0.0
  %1844 = vmatprep.subr.mxu0 0.0
  %1845 = vmatpush1.msra.mxu0 0.0
  %1846 = vmatprep.subr.mxu0 0.0
  %1847 = vmatpush1.msra.mxu0 0.0
  %1848 = vmatprep.subr.mxu0 0.0
  %1849 = vmatpush1.msra.mxu0 0.0
  %1850 = vmatprep.subr.mxu0 0.0
  %1851 = vmatpush1.msra.mxu0 0.0
  %1852 = vmatprep.subr.mxu0 0.0
  %1853 = vmatpush1.msra.mxu0 0.0
  %1854 = vmatprep.subr.mxu0 0.0
  %1855 = vmatpush1.msra.mxu0 0.0
  %1856 = vmatprep.subr.mxu0 0.0
  %1857 = vmatpush1.msra.mxu0 0.0
  %1858 = vmatprep.subr.mxu0 0.0
  %1859 = vmatpush1.msra.mxu0 0.0
  %1860 = vmatprep.subr.mxu0 0.0
  %1861 = vmatpush1.msra.mxu0 0.0
  %1862 = vmatprep.subr.mxu0 0.0
  %1863 = vmatpush1.msra.mxu0 0.0
  %1864 = vmatprep.subr.mxu0 0.0
  %1865 = vmatpush1.msra.mxu0 0.0
  %1866 = vmatprep.subr.mxu0 0.0
  %1867 = vmatpush1.msra.mxu0 0.0
  %1868 = vmatprep.subr.mxu0 0.0
  %1869 = vmatpush1.msra.mxu0 0.0
  %1870 = vmatprep.subr.mxu0 0.0
  %1871 = vmatpush1.msra.mxu0 0.0
  %1872 = vmatprep.subr.mxu0 0.0
  %1873 = vmatpush1.msra.mxu0 0.0
  %1874 = vmatprep.subr.mxu0 0.0
  %1875 = vmatpush1.msra.mxu0 0.0
  %1876 = vmatprep.subr.mxu0 0.0
  %1877 = vmatpush1.msra.mxu0 0.0
  %1878 = vmatprep.subr.mxu0 0.0
  %1879 = vmatpush1.msra.mxu0 0.0
  %1880 = vmatprep.mubr.f32.mxu0 0.0
  %1881 = vmatmul.mubr.f32.gmra.mrb[0].mxu0 %v1743
  %v1882 = vpop.f32.mrb[0].mxu0
  %v1883 = vadd.f32 %v1738, %v1882
  %v1884 = vpop.f32.mrb[0].mxu0
  %v1885 = vadd.f32 %v1740, %v1884
  %1886 = vdwg.mxu0
  %v1887 = vadd.f32 %v1589, %v1812
  %v1888 = vadd.f32 %v1590, %v1814
  %v1889 = vadd.f32 %v1591, %v1883
  %v1890 = vadd.f32 %v1592, %v1885
  %s1891 = scalar_lea.vmem %s4, 40
  %v1892 = vld [vmem:[%s1891] sm:$0xff]
  %s1893 = scalar_lea.vmem %s5, 40
  %v1894 = vld [vmem:[%s1893] sm:$0xff]
  %v1896 = vsel %vm223, %v1894, 0
  %1898 = vmatprep.subr.mxu0 %v232
  %1899 = vmatpush1.msra.mxu0 %v229
  %1900 = vmatprep.subr.mxu0 0.0
  %1901 = vmatpush1.msra.mxu0 0.0
  %1902 = vmatprep.subr.mxu0 0.0
  %1903 = vmatpush1.msra.mxu0 0.0
  %1904 = vmatprep.subr.mxu0 0.0
  %1905 = vmatpush1.msra.mxu0 0.0
  %1906 = vmatprep.subr.mxu0 0.0
  %1907 = vmatpush1.msra.mxu0 0.0
  %1908 = vmatprep.subr.mxu0 0.0
  %1909 = vmatpush1.msra.mxu0 0.0
  %1910 = vmatprep.subr.mxu0 0.0
  %1911 = vmatpush1.msra.mxu0 0.0
  %1912 = vmatprep.subr.mxu0 0.0
  %1913 = vmatpush1.msra.mxu0 0.0
  %1914 = vmatprep.subr.mxu0 0.0
  %1915 = vmatpush1.msra.mxu0 0.0
  %1916 = vmatprep.subr.mxu0 0.0
  %1917 = vmatpush1.msra.mxu0 0.0
  %1918 = vmatprep.subr.mxu0 0.0
  %1919 = vmatpush1.msra.mxu0 0.0
  %1920 = vmatprep.subr.mxu0 0.0
  %1921 = vmatpush1.msra.mxu0 0.0
  %1922 = vmatprep.subr.mxu0 0.0
  %1923 = vmatpush1.msra.mxu0 0.0
  %1924 = vmatprep.subr.mxu0 0.0
  %1925 = vmatpush1.msra.mxu0 0.0
  %1926 = vmatprep.subr.mxu0 0.0
  %1927 = vmatpush1.msra.mxu0 0.0
  %1928 = vmatprep.subr.mxu0 0.0
  %1929 = vmatpush1.msra.mxu0 0.0
  %1930 = vmatprep.subr.mxu0 0.0
  %1931 = vmatpush1.msra.mxu0 0.0
  %1932 = vmatprep.subr.mxu0 0.0
  %1933 = vmatpush1.msra.mxu0 0.0
  %1934 = vmatprep.subr.mxu0 0.0
  %1935 = vmatpush1.msra.mxu0 0.0
  %1936 = vmatprep.subr.mxu0 0.0
  %1937 = vmatpush1.msra.mxu0 0.0
  %1938 = vmatprep.subr.mxu0 0.0
  %1939 = vmatpush1.msra.mxu0 0.0
  %1940 = vmatprep.subr.mxu0 0.0
  %1941 = vmatpush1.msra.mxu0 0.0
  %1942 = vmatprep.subr.mxu0 0.0
  %1943 = vmatpush1.msra.mxu0 0.0
  %1944 = vmatprep.subr.mxu0 0.0
  %1945 = vmatpush1.msra.mxu0 0.0
  %1946 = vmatprep.subr.mxu0 0.0
  %1947 = vmatpush1.msra.mxu0 0.0
  %1948 = vmatprep.subr.mxu0 0.0
  %1949 = vmatpush1.msra.mxu0 0.0
  %1950 = vmatprep.subr.mxu0 0.0
  %1951 = vmatpush1.msra.mxu0 0.0
  %1952 = vmatprep.subr.mxu0 0.0
  %1953 = vmatpush1.msra.mxu0 0.0
  %1954 = vmatprep.subr.mxu0 0.0
  %1955 = vmatpush1.msra.mxu0 0.0
  %1956 = vmatprep.subr.mxu0 0.0
  %1957 = vmatpush1.msra.mxu0 0.0
  %1958 = vmatprep.subr.mxu0 0.0
  %1959 = vmatpush1.msra.mxu0 0.0
  %1960 = vmatprep.subr.mxu0 0.0
  %1961 = vmatpush1.msra.mxu0 0.0
  %1962 = vmatprep.mubr.f32.mxu0 0.0
  %1963 = vmatmul.mubr.f32.gmra.mrb[0].mxu0 %v1896
  %v1964 = vpop.f32.mrb[0].mxu0
  %v1965 = vadd.f32 0.0, %v1964
  %v1966 = vpop.f32.mrb[0].mxu0
  %v1967 = vadd.f32 0.0, %v1966
  %1968 = vdwg.mxu0
  %1969 = vmatprep.subr.mxu0 %v238
  %1970 = vmatpush1.msra.mxu0 %v235
  %1971 = vmatprep.subr.mxu0 0.0
  %1972 = vmatpush1.msra.mxu0 0.0
  %1973 = vmatprep.subr.mxu0 0.0
  %1974 = vmatpush1.msra.mxu0 0.0
  %1975 = vmatprep.subr.mxu0 0.0
  %1976 = vmatpush1.msra.mxu0 0.0
  %1977 = vmatprep.subr.mxu0 0.0
  %1978 = vmatpush1.msra.mxu0 0.0
  %1979 = vmatprep.subr.mxu0 0.0
  %1980 = vmatpush1.msra.mxu0 0.0
  %1981 = vmatprep.subr.mxu0 0.0
  %1982 = vmatpush1.msra.mxu0 0.0
  %1983 = vmatprep.subr.mxu0 0.0
  %1984 = vmatpush1.msra.mxu0 0.0
  %1985 = vmatprep.subr.mxu0 0.0
  %1986 = vmatpush1.msra.mxu0 0.0
  %1987 = vmatprep.subr.mxu0 0.0
  %1988 = vmatpush1.msra.mxu0 0.0
  %1989 = vmatprep.subr.mxu0 0.0
  %1990 = vmatpush1.msra.mxu0 0.0
  %1991 = vmatprep.subr.mxu0 0.0
  %1992 = vmatpush1.msra.mxu0 0.0
  %1993 = vmatprep.subr.mxu0 0.0
  %1994 = vmatpush1.msra.mxu0 0.0
  %1995 = vmatprep.subr.mxu0 0.0
  %1996 = vmatpush1.msra.mxu0 0.0
  %1997 = vmatprep.subr.mxu0 0.0
  %1998 = vmatpush1.msra.mxu0 0.0
  %1999 = vmatprep.subr.mxu0 0.0
  %2000 = vmatpush1.msra.mxu0 0.0
  %2001 = vmatprep.subr.mxu0 0.0
  %2002 = vmatpush1.msra.mxu0 0.0
  %2003 = vmatprep.subr.mxu0 0.0
  %2004 = vmatpush1.msra.mxu0 0.0
  %2005 = vmatprep.subr.mxu0 0.0
  %2006 = vmatpush1.msra.mxu0 0.0
  %2007 = vmatprep.subr.mxu0 0.0
  %2008 = vmatpush1.msra.mxu0 0.0
  %2009 = vmatprep.subr.mxu0 0.0
  %2010 = vmatpush1.msra.mxu0 0.0
  %2011 = vmatprep.subr.mxu0 0.0
  %2012 = vmatpush1.msra.mxu0 0.0
  %2013 = vmatprep.subr.mxu0 0.0
  %2014 = vmatpush1.msra.mxu0 0.0
  %2015 = vmatprep.subr.mxu0 0.0
  %2016 = vmatpush1.msra.mxu0 0.0
  %2017 = vmatprep.subr.mxu0 0.0
  %2018 = vmatpush1.msra.mxu0 0.0
  %2019 = vmatprep.subr.mxu0 0.0
  %2020 = vmatpush1.msra.mxu0 0.0
  %2021 = vmatprep.subr.mxu0 0.0
  %2022 = vmatpush1.msra.mxu0 0.0
  %2023 = vmatprep.subr.mxu0 0.0
  %2024 = vmatpush1.msra.mxu0 0.0
  %2025 = vmatprep.subr.mxu0 0.0
  %2026 = vmatpush1.msra.mxu0 0.0
  %2027 = vmatprep.subr.mxu0 0.0
  %2028 = vmatpush1.msra.mxu0 0.0
  %2029 = vmatprep.subr.mxu0 0.0
  %2030 = vmatpush1.msra.mxu0 0.0
  %2031 = vmatprep.subr.mxu0 0.0
  %2032 = vmatpush1.msra.mxu0 0.0
  %2033 = vmatprep.mubr.f32.mxu0 0.0
  %2034 = vmatmul.mubr.f32.gmra.mrb[0].mxu0 %v1896
  %v2035 = vpop.f32.mrb[0].mxu0
  %v2036 = vadd.f32 0.0, %v2035
  %v2037 = vpop.f32.mrb[0].mxu0
  %v2038 = vadd.f32 0.0, %v2037
  %2039 = vdwg.mxu0
  %v2041 = vsel %vm223, %v1892, 0
  %2043 = vmatprep.subr.mxu0 %v387
  %2044 = vmatpush1.msra.mxu0 %v385
  %2045 = vmatprep.subr.mxu0 0.0
  %2046 = vmatpush1.msra.mxu0 0.0
  %2047 = vmatprep.subr.mxu0 0.0
  %2048 = vmatpush1.msra.mxu0 0.0
  %2049 = vmatprep.subr.mxu0 0.0
  %2050 = vmatpush1.msra.mxu0 0.0
  %2051 = vmatprep.subr.mxu0 0.0
  %2052 = vmatpush1.msra.mxu0 0.0
  %2053 = vmatprep.subr.mxu0 0.0
  %2054 = vmatpush1.msra.mxu0 0.0
  %2055 = vmatprep.subr.mxu0 0.0
  %2056 = vmatpush1.msra.mxu0 0.0
  %2057 = vmatprep.subr.mxu0 0.0
  %2058 = vmatpush1.msra.mxu0 0.0
  %2059 = vmatprep.subr.mxu0 0.0
  %2060 = vmatpush1.msra.mxu0 0.0
  %2061 = vmatprep.subr.mxu0 0.0
  %2062 = vmatpush1.msra.mxu0 0.0
  %2063 = vmatprep.subr.mxu0 0.0
  %2064 = vmatpush1.msra.mxu0 0.0
  %2065 = vmatprep.subr.mxu0 0.0
  %2066 = vmatpush1.msra.mxu0 0.0
  %2067 = vmatprep.subr.mxu0 0.0
  %2068 = vmatpush1.msra.mxu0 0.0
  %2069 = vmatprep.subr.mxu0 0.0
  %2070 = vmatpush1.msra.mxu0 0.0
  %2071 = vmatprep.subr.mxu0 0.0
  %2072 = vmatpush1.msra.mxu0 0.0
  %2073 = vmatprep.subr.mxu0 0.0
  %2074 = vmatpush1.msra.mxu0 0.0
  %2075 = vmatprep.subr.mxu0 0.0
  %2076 = vmatpush1.msra.mxu0 0.0
  %2077 = vmatprep.subr.mxu0 0.0
  %2078 = vmatpush1.msra.mxu0 0.0
  %2079 = vmatprep.subr.mxu0 0.0
  %2080 = vmatpush1.msra.mxu0 0.0
  %2081 = vmatprep.subr.mxu0 0.0
  %2082 = vmatpush1.msra.mxu0 0.0
  %2083 = vmatprep.subr.mxu0 0.0
  %2084 = vmatpush1.msra.mxu0 0.0
  %2085 = vmatprep.subr.mxu0 0.0
  %2086 = vmatpush1.msra.mxu0 0.0
  %2087 = vmatprep.subr.mxu0 0.0
  %2088 = vmatpush1.msra.mxu0 0.0
  %2089 = vmatprep.subr.mxu0 0.0
  %2090 = vmatpush1.msra.mxu0 0.0
  %2091 = vmatprep.subr.mxu0 0.0
  %2092 = vmatpush1.msra.mxu0 0.0
  %2093 = vmatprep.subr.mxu0 0.0
  %2094 = vmatpush1.msra.mxu0 0.0
  %2095 = vmatprep.subr.mxu0 0.0
  %2096 = vmatpush1.msra.mxu0 0.0
  %2097 = vmatprep.subr.mxu0 0.0
  %2098 = vmatpush1.msra.mxu0 0.0
  %2099 = vmatprep.subr.mxu0 0.0
  %2100 = vmatpush1.msra.mxu0 0.0
  %2101 = vmatprep.subr.mxu0 0.0
  %2102 = vmatpush1.msra.mxu0 0.0
  %2103 = vmatprep.subr.mxu0 0.0
  %2104 = vmatpush1.msra.mxu0 0.0
  %2105 = vmatprep.subr.mxu0 0.0
  %2106 = vmatpush1.msra.mxu0 0.0
  %2107 = vmatprep.mubr.f32.mxu0 0.0
  %2108 = vmatmul.mubr.f32.gmra.mrb[0].mxu0 %v2041
  %v2109 = vpop.f32.mrb[0].mxu0
  %v2110 = vadd.f32 %v1965, %v2109
  %v2111 = vpop.f32.mrb[0].mxu0
  %v2112 = vadd.f32 %v1967, %v2111
  %2113 = vdwg.mxu0
  %2114 = vmatprep.subr.mxu0 %v391
  %2115 = vmatpush1.msra.mxu0 %v389
  %2116 = vmatprep.subr.mxu0 0.0
  %2117 = vmatpush1.msra.mxu0 0.0
  %2118 = vmatprep.subr.mxu0 0.0
  %2119 = vmatpush1.msra.mxu0 0.0
  %2120 = vmatprep.subr.mxu0 0.0
  %2121 = vmatpush1.msra.mxu0 0.0
  %2122 = vmatprep.subr.mxu0 0.0
  %2123 = vmatpush1.msra.mxu0 0.0
  %2124 = vmatprep.subr.mxu0 0.0
  %2125 = vmatpush1.msra.mxu0 0.0
  %2126 = vmatprep.subr.mxu0 0.0
  %2127 = vmatpush1.msra.mxu0 0.0
  %2128 = vmatprep.subr.mxu0 0.0
  %2129 = vmatpush1.msra.mxu0 0.0
  %2130 = vmatprep.subr.mxu0 0.0
  %2131 = vmatpush1.msra.mxu0 0.0
  %2132 = vmatprep.subr.mxu0 0.0
  %2133 = vmatpush1.msra.mxu0 0.0
  %2134 = vmatprep.subr.mxu0 0.0
  %2135 = vmatpush1.msra.mxu0 0.0
  %2136 = vmatprep.subr.mxu0 0.0
  %2137 = vmatpush1.msra.mxu0 0.0
  %2138 = vmatprep.subr.mxu0 0.0
  %2139 = vmatpush1.msra.mxu0 0.0
  %2140 = vmatprep.subr.mxu0 0.0
  %2141 = vmatpush1.msra.mxu0 0.0
  %2142 = vmatprep.subr.mxu0 0.0
  %2143 = vmatpush1.msra.mxu0 0.0
  %2144 = vmatprep.subr.mxu0 0.0
  %2145 = vmatpush1.msra.mxu0 0.0
  %2146 = vmatprep.subr.mxu0 0.0
  %2147 = vmatpush1.msra.mxu0 0.0
  %2148 = vmatprep.subr.mxu0 0.0
  %2149 = vmatpush1.msra.mxu0 0.0
  %2150 = vmatprep.subr.mxu0 0.0
  %2151 = vmatpush1.msra.mxu0 0.0
  %2152 = vmatprep.subr.mxu0 0.0
  %2153 = vmatpush1.msra.mxu0 0.0
  %2154 = vmatprep.subr.mxu0 0.0
  %2155 = vmatpush1.msra.mxu0 0.0
  %2156 = vmatprep.subr.mxu0 0.0
  %2157 = vmatpush1.msra.mxu0 0.0
  %2158 = vmatprep.subr.mxu0 0.0
  %2159 = vmatpush1.msra.mxu0 0.0
  %2160 = vmatprep.subr.mxu0 0.0
  %2161 = vmatpush1.msra.mxu0 0.0
  %2162 = vmatprep.subr.mxu0 0.0
  %2163 = vmatpush1.msra.mxu0 0.0
  %2164 = vmatprep.subr.mxu0 0.0
  %2165 = vmatpush1.msra.mxu0 0.0
  %2166 = vmatprep.subr.mxu0 0.0
  %2167 = vmatpush1.msra.mxu0 0.0
  %2168 = vmatprep.subr.mxu0 0.0
  %2169 = vmatpush1.msra.mxu0 0.0
  %2170 = vmatprep.subr.mxu0 0.0
  %2171 = vmatpush1.msra.mxu0 0.0
  %2172 = vmatprep.subr.mxu0 0.0
  %2173 = vmatpush1.msra.mxu0 0.0
  %2174 = vmatprep.subr.mxu0 0.0
  %2175 = vmatpush1.msra.mxu0 0.0
  %2176 = vmatprep.subr.mxu0 0.0
  %2177 = vmatpush1.msra.mxu0 0.0
  %2178 = vmatprep.mubr.f32.mxu0 0.0
  %2179 = vmatmul.mubr.f32.gmra.mrb[0].mxu0 %v2041
  %v2180 = vpop.f32.mrb[0].mxu0
  %v2181 = vadd.f32 %v2036, %v2180
  %v2182 = vpop.f32.mrb[0].mxu0
  %v2183 = vadd.f32 %v2038, %v2182
  %2184 = vdwg.mxu0
  %2189 = vrot.lane.b32.xlu0 %v2110, 127
  %v2190 = vpop.permute.xlu0 %2189
  %2191 = vrot.lane.b32.xlu0 %v2112, 127
  %v2192 = vpop.permute.xlu0 %2191
  %2193 = vrot.lane.b32.xlu0 %v2181, 127
  %v2194 = vpop.permute.xlu0 %2193
  %2195 = vrot.lane.b32.xlu0 %v2183, 127
  %v2196 = vpop.permute.xlu0 %2195
  %vm2197 = vcmask 1039360
  %v2198 = vsel %vm2197, %v2190, %v2192
  %v2199 = vsel %vm2197, %v2192, %v2194
  %v2200 = vsel %vm2197, %v2194, %v2196
  %v2205 = vsel %vm2197, %v2196, 0.0
  %v2206 = vlaneseq
  %v2207 = vshrl.u32 %v2206, 7
  %v2208 = vsub.s32 5, %v2207
  %v2209 = vrot.slane %v38, %v2208
  %v2210 = vlaneseq
  %v2211 = vshrl.u32 %v2210, 7
  %v2212 = vsub.s32 5, %v2211
  %v2213 = vrot.slane %v39, %v2212
  %v2214 = vlaneseq
  %v2215 = vshrl.u32 %v2214, 7
  %v2216 = vsub.s32 5, %v2215
  %v2217 = vrot.slane %v40, %v2216
  %v2218 = vlaneseq
  %v2219 = vshrl.u32 %v2218, 7
  %v2220 = vsub.s32 5, %v2219
  %v2221 = vrot.slane %v41, %v2220
  %v2222 = vmul.f32 %v2198, %v2209
  %v2223 = vmul.f32 %v2199, %v2213
  %v2224 = vmul.f32 %v2200, %v2217
  %v2225 = vmul.f32 %v2205, %v2221
  %v2226 = vadd.f32 %v1887, %v2222
  %v2227 = vadd.f32 %v1888, %v2223
  %v2228 = vadd.f32 %v1889, %v2224
  %v2229 = vadd.f32 %v1890, %v2225
  %s2230 = scalar_lea.vmem %s4, 48
  %v2231 = vld [vmem:[%s2230] sm:$0xff]
  %s2232 = scalar_lea.vmem %s5, 48
  %v2233 = vld [vmem:[%s2232] sm:$0xff]
  %v2235 = vsel %vm223, %v2233, 0
  %2237 = vmatprep.subr.mxu0 %v232
  %2238 = vmatpush1.msra.mxu0 %v229
  %2239 = vmatprep.subr.mxu0 0.0
  %2240 = vmatpush1.msra.mxu0 0.0
  %2241 = vmatprep.subr.mxu0 0.0
  %2242 = vmatpush1.msra.mxu0 0.0
  %2243 = vmatprep.subr.mxu0 0.0
  %2244 = vmatpush1.msra.mxu0 0.0
  %2245 = vmatprep.subr.mxu0 0.0
  %2246 = vmatpush1.msra.mxu0 0.0
  %2247 = vmatprep.subr.mxu0 0.0
  %2248 = vmatpush1.msra.mxu0 0.0
  %2249 = vmatprep.subr.mxu0 0.0
  %2250 = vmatpush1.msra.mxu0 0.0
  %2251 = vmatprep.subr.mxu0 0.0
  %2252 = vmatpush1.msra.mxu0 0.0
  %2253 = vmatprep.subr.mxu0 0.0
  %2254 = vmatpush1.msra.mxu0 0.0
  %2255 = vmatprep.subr.mxu0 0.0
  %2256 = vmatpush1.msra.mxu0 0.0
  %2257 = vmatprep.subr.mxu0 0.0
  %2258 = vmatpush1.msra.mxu0 0.0
  %2259 = vmatprep.subr.mxu0 0.0
  %2260 = vmatpush1.msra.mxu0 0.0
  %2261 = vmatprep.subr.mxu0 0.0
  %2262 = vmatpush1.msra.mxu0 0.0
  %2263 = vmatprep.subr.mxu0 0.0
  %2264 = vmatpush1.msra.mxu0 0.0
  %2265 = vmatprep.subr.mxu0 0.0
  %2266 = vmatpush1.msra.mxu0 0.0
  %2267 = vmatprep.subr.mxu0 0.0
  %2268 = vmatpush1.msra.mxu0 0.0
  %2269 = vmatprep.subr.mxu0 0.0
  %2270 = vmatpush1.msra.mxu0 0.0
  %2271 = vmatprep.subr.mxu0 0.0
  %2272 = vmatpush1.msra.mxu0 0.0
  %2273 = vmatprep.subr.mxu0 0.0
  %2274 = vmatpush1.msra.mxu0 0.0
  %2275 = vmatprep.subr.mxu0 0.0
  %2276 = vmatpush1.msra.mxu0 0.0
  %2277 = vmatprep.subr.mxu0 0.0
  %2278 = vmatpush1.msra.mxu0 0.0
  %2279 = vmatprep.subr.mxu0 0.0
  %2280 = vmatpush1.msra.mxu0 0.0
  %2281 = vmatprep.subr.mxu0 0.0
  %2282 = vmatpush1.msra.mxu0 0.0
  %2283 = vmatprep.subr.mxu0 0.0
  %2284 = vmatpush1.msra.mxu0 0.0
  %2285 = vmatprep.subr.mxu0 0.0
  %2286 = vmatpush1.msra.mxu0 0.0
  %2287 = vmatprep.subr.mxu0 0.0
  %2288 = vmatpush1.msra.mxu0 0.0
  %2289 = vmatprep.subr.mxu0 0.0
  %2290 = vmatpush1.msra.mxu0 0.0
  %2291 = vmatprep.subr.mxu0 0.0
  %2292 = vmatpush1.msra.mxu0 0.0
  %2293 = vmatprep.subr.mxu0 0.0
  %2294 = vmatpush1.msra.mxu0 0.0
  %2295 = vmatprep.subr.mxu0 0.0
  %2296 = vmatpush1.msra.mxu0 0.0
  %2297 = vmatprep.subr.mxu0 0.0
  %2298 = vmatpush1.msra.mxu0 0.0
  %2299 = vmatprep.subr.mxu0 0.0
  %2300 = vmatpush1.msra.mxu0 0.0
  %2301 = vmatprep.mubr.f32.mxu0 0.0
  %2302 = vmatmul.mubr.f32.gmra.mrb[0].mxu0 %v2235
  %v2303 = vpop.f32.mrb[0].mxu0
  %v2304 = vadd.f32 0.0, %v2303
  %v2305 = vpop.f32.mrb[0].mxu0
  %v2306 = vadd.f32 0.0, %v2305
  %2307 = vdwg.mxu0
  %2308 = vmatprep.subr.mxu0 %v238
  %2309 = vmatpush1.msra.mxu0 %v235
  %2310 = vmatprep.subr.mxu0 0.0
  %2311 = vmatpush1.msra.mxu0 0.0
  %2312 = vmatprep.subr.mxu0 0.0
  %2313 = vmatpush1.msra.mxu0 0.0
  %2314 = vmatprep.subr.mxu0 0.0
  %2315 = vmatpush1.msra.mxu0 0.0
  %2316 = vmatprep.subr.mxu0 0.0
  %2317 = vmatpush1.msra.mxu0 0.0
  %2318 = vmatprep.subr.mxu0 0.0
  %2319 = vmatpush1.msra.mxu0 0.0
  %2320 = vmatprep.subr.mxu0 0.0
  %2321 = vmatpush1.msra.mxu0 0.0
  %2322 = vmatprep.subr.mxu0 0.0
  %2323 = vmatpush1.msra.mxu0 0.0
  %2324 = vmatprep.subr.mxu0 0.0
  %2325 = vmatpush1.msra.mxu0 0.0
  %2326 = vmatprep.subr.mxu0 0.0
  %2327 = vmatpush1.msra.mxu0 0.0
  %2328 = vmatprep.subr.mxu0 0.0
  %2329 = vmatpush1.msra.mxu0 0.0
  %2330 = vmatprep.subr.mxu0 0.0
  %2331 = vmatpush1.msra.mxu0 0.0
  %2332 = vmatprep.subr.mxu0 0.0
  %2333 = vmatpush1.msra.mxu0 0.0
  %2334 = vmatprep.subr.mxu0 0.0
  %2335 = vmatpush1.msra.mxu0 0.0
  %2336 = vmatprep.subr.mxu0 0.0
  %2337 = vmatpush1.msra.mxu0 0.0
  %2338 = vmatprep.subr.mxu0 0.0
  %2339 = vmatpush1.msra.mxu0 0.0
  %2340 = vmatprep.subr.mxu0 0.0
  %2341 = vmatpush1.msra.mxu0 0.0
  %2342 = vmatprep.subr.mxu0 0.0
  %2343 = vmatpush1.msra.mxu0 0.0
  %2344 = vmatprep.subr.mxu0 0.0
  %2345 = vmatpush1.msra.mxu0 0.0
  %2346 = vmatprep.subr.mxu0 0.0
  %2347 = vmatpush1.msra.mxu0 0.0
  %2348 = vmatprep.subr.mxu0 0.0
  %2349 = vmatpush1.msra.mxu0 0.0
  %2350 = vmatprep.subr.mxu0 0.0
  %2351 = vmatpush1.msra.mxu0 0.0
  %2352 = vmatprep.subr.mxu0 0.0
  %2353 = vmatpush1.msra.mxu0 0.0
  %2354 = vmatprep.subr.mxu0 0.0
  %2355 = vmatpush1.msra.mxu0 0.0
  %2356 = vmatprep.subr.mxu0 0.0
  %2357 = vmatpush1.msra.mxu0 0.0
  %2358 = vmatprep.subr.mxu0 0.0
  %2359 = vmatpush1.msra.mxu0 0.0
  %2360 = vmatprep.subr.mxu0 0.0
  %2361 = vmatpush1.msra.mxu0 0.0
  %2362 = vmatprep.subr.mxu0 0.0
  %2363 = vmatpush1.msra.mxu0 0.0
  %2364 = vmatprep.subr.mxu0 0.0
  %2365 = vmatpush1.msra.mxu0 0.0
  %2366 = vmatprep.subr.mxu0 0.0
  %2367 = vmatpush1.msra.mxu0 0.0
  %2368 = vmatprep.subr.mxu0 0.0
  %2369 = vmatpush1.msra.mxu0 0.0
  %2370 = vmatprep.subr.mxu0 0.0
  %2371 = vmatpush1.msra.mxu0 0.0
  %2372 = vmatprep.mubr.f32.mxu0 0.0
  %2373 = vmatmul.mubr.f32.gmra.mrb[0].mxu0 %v2235
  %v2374 = vpop.f32.mrb[0].mxu0
  %v2375 = vadd.f32 0.0, %v2374
  %v2376 = vpop.f32.mrb[0].mxu0
  %v2377 = vadd.f32 0.0, %v2376
  %2378 = vdwg.mxu0
  %v2380 = vsel %vm223, %v2231, 0
  %2382 = vmatprep.subr.mxu0 %v387
  %2383 = vmatpush1.msra.mxu0 %v385
  %2384 = vmatprep.subr.mxu0 0.0
  %2385 = vmatpush1.msra.mxu0 0.0
  %2386 = vmatprep.subr.mxu0 0.0
  %2387 = vmatpush1.msra.mxu0 0.0
  %2388 = vmatprep.subr.mxu0 0.0
  %2389 = vmatpush1.msra.mxu0 0.0
  %2390 = vmatprep.subr.mxu0 0.0
  %2391 = vmatpush1.msra.mxu0 0.0
  %2392 = vmatprep.subr.mxu0 0.0
  %2393 = vmatpush1.msra.mxu0 0.0
  %2394 = vmatprep.subr.mxu0 0.0
  %2395 = vmatpush1.msra.mxu0 0.0
  %2396 = vmatprep.subr.mxu0 0.0
  %2397 = vmatpush1.msra.mxu0 0.0
  %2398 = vmatprep.subr.mxu0 0.0
  %2399 = vmatpush1.msra.mxu0 0.0
  %2400 = vmatprep.subr.mxu0 0.0
  %2401 = vmatpush1.msra.mxu0 0.0
  %2402 = vmatprep.subr.mxu0 0.0
  %2403 = vmatpush1.msra.mxu0 0.0
  %2404 = vmatprep.subr.mxu0 0.0
  %2405 = vmatpush1.msra.mxu0 0.0
  %2406 = vmatprep.subr.mxu0 0.0
  %2407 = vmatpush1.msra.mxu0 0.0
  %2408 = vmatprep.subr.mxu0 0.0
  %2409 = vmatpush1.msra.mxu0 0.0
  %2410 = vmatprep.subr.mxu0 0.0
  %2411 = vmatpush1.msra.mxu0 0.0
  %2412 = vmatprep.subr.mxu0 0.0
  %2413 = vmatpush1.msra.mxu0 0.0
  %2414 = vmatprep.subr.mxu0 0.0
  %2415 = vmatpush1.msra.mxu0 0.0
  %2416 = vmatprep.subr.mxu0 0.0
  %2417 = vmatpush1.msra.mxu0 0.0
  %2418 = vmatprep.subr.mxu0 0.0
  %2419 = vmatpush1.msra.mxu0 0.0
  %2420 = vmatprep.subr.mxu0 0.0
  %2421 = vmatpush1.msra.mxu0 0.0
  %2422 = vmatprep.subr.mxu0 0.0
  %2423 = vmatpush1.msra.mxu0 0.0
  %2424 = vmatprep.subr.mxu0 0.0
  %2425 = vmatpush1.msra.mxu0 0.0
  %2426 = vmatprep.subr.mxu0 0.0
  %2427 = vmatpush1.msra.mxu0 0.0
  %2428 = vmatprep.subr.mxu0 0.0
  %2429 = vmatpush1.msra.mxu0 0.0
  %2430 = vmatprep.subr.mxu0 0.0
  %2431 = vmatpush1.msra.mxu0 0.0
  %2432 = vmatprep.subr.mxu0 0.0
  %2433 = vmatpush1.msra.mxu0 0.0
  %2434 = vmatprep.subr.mxu0 0.0
  %2435 = vmatpush1.msra.mxu0 0.0
  %2436 = vmatprep.subr.mxu0 0.0
  %2437 = vmatpush1.msra.mxu0 0.0
  %2438 = vmatprep.subr.mxu0 0.0
  %2439 = vmatpush1.msra.mxu0 0.0
  %2440 = vmatprep.subr.mxu0 0.0
  %2441 = vmatpush1.msra.mxu0 0.0
  %2442 = vmatprep.subr.mxu0 0.0
  %2443 = vmatpush1.msra.mxu0 0.0
  %2444 = vmatprep.subr.mxu0 0.0
  %2445 = vmatpush1.msra.mxu0 0.0
  %2446 = vmatprep.mubr.f32.mxu0 0.0
  %2447 = vmatmul.mubr.f32.gmra.mrb[0].mxu0 %v2380
  %v2448 = vpop.f32.mrb[0].mxu0
  %v2449 = vadd.f32 %v2304, %v2448
  %v2450 = vpop.f32.mrb[0].mxu0
  %v2451 = vadd.f32 %v2306, %v2450
  %2452 = vdwg.mxu0
  %2453 = vmatprep.subr.mxu0 %v391
  %2454 = vmatpush1.msra.mxu0 %v389
  %2455 = vmatprep.subr.mxu0 0.0
  %2456 = vmatpush1.msra.mxu0 0.0
  %2457 = vmatprep.subr.mxu0 0.0
  %2458 = vmatpush1.msra.mxu0 0.0
  %2459 = vmatprep.subr.mxu0 0.0
  %2460 = vmatpush1.msra.mxu0 0.0
  %2461 = vmatprep.subr.mxu0 0.0
  %2462 = vmatpush1.msra.mxu0 0.0
  %2463 = vmatprep.subr.mxu0 0.0
  %2464 = vmatpush1.msra.mxu0 0.0
  %2465 = vmatprep.subr.mxu0 0.0
  %2466 = vmatpush1.msra.mxu0 0.0
  %2467 = vmatprep.subr.mxu0 0.0
  %2468 = vmatpush1.msra.mxu0 0.0
  %2469 = vmatprep.subr.mxu0 0.0
  %2470 = vmatpush1.msra.mxu0 0.0
  %2471 = vmatprep.subr.mxu0 0.0
  %2472 = vmatpush1.msra.mxu0 0.0
  %2473 = vmatprep.subr.mxu0 0.0
  %2474 = vmatpush1.msra.mxu0 0.0
  %2475 = vmatprep.subr.mxu0 0.0
  %2476 = vmatpush1.msra.mxu0 0.0
  %2477 = vmatprep.subr.mxu0 0.0
  %2478 = vmatpush1.msra.mxu0 0.0
  %2479 = vmatprep.subr.mxu0 0.0
  %2480 = vmatpush1.msra.mxu0 0.0
  %2481 = vmatprep.subr.mxu0 0.0
  %2482 = vmatpush1.msra.mxu0 0.0
  %2483 = vmatprep.subr.mxu0 0.0
  %2484 = vmatpush1.msra.mxu0 0.0
  %2485 = vmatprep.subr.mxu0 0.0
  %2486 = vmatpush1.msra.mxu0 0.0
  %2487 = vmatprep.subr.mxu0 0.0
  %2488 = vmatpush1.msra.mxu0 0.0
  %2489 = vmatprep.subr.mxu0 0.0
  %2490 = vmatpush1.msra.mxu0 0.0
  %2491 = vmatprep.subr.mxu0 0.0
  %2492 = vmatpush1.msra.mxu0 0.0
  %2493 = vmatprep.subr.mxu0 0.0
  %2494 = vmatpush1.msra.mxu0 0.0
  %2495 = vmatprep.subr.mxu0 0.0
  %2496 = vmatpush1.msra.mxu0 0.0
  %2497 = vmatprep.subr.mxu0 0.0
  %2498 = vmatpush1.msra.mxu0 0.0
  %2499 = vmatprep.subr.mxu0 0.0
  %2500 = vmatpush1.msra.mxu0 0.0
  %2501 = vmatprep.subr.mxu0 0.0
  %2502 = vmatpush1.msra.mxu0 0.0
  %2503 = vmatprep.subr.mxu0 0.0
  %2504 = vmatpush1.msra.mxu0 0.0
  %2505 = vmatprep.subr.mxu0 0.0
  %2506 = vmatpush1.msra.mxu0 0.0
  %2507 = vmatprep.subr.mxu0 0.0
  %2508 = vmatpush1.msra.mxu0 0.0
  %2509 = vmatprep.subr.mxu0 0.0
  %2510 = vmatpush1.msra.mxu0 0.0
  %2511 = vmatprep.subr.mxu0 0.0
  %2512 = vmatpush1.msra.mxu0 0.0
  %2513 = vmatprep.subr.mxu0 0.0
  %2514 = vmatpush1.msra.mxu0 0.0
  %2515 = vmatprep.subr.mxu0 0.0
  %2516 = vmatpush1.msra.mxu0 0.0
  %2517 = vmatprep.mubr.f32.mxu0 0.0
  %2518 = vmatmul.mubr.f32.gmra.mrb[0].mxu0 %v2380
  %v2519 = vpop.f32.mrb[0].mxu0
  %v2520 = vadd.f32 %v2375, %v2519
  %v2521 = vpop.f32.mrb[0].mxu0
  %v2522 = vadd.f32 %v2377, %v2521
  %2523 = vdwg.mxu0
  %2528 = vrot.lane.b32.xlu0 %v2449, 113
  %v2529 = vpop.permute.xlu0 %2528
  %2530 = vrot.lane.b32.xlu0 %v2451, 113
  %v2531 = vpop.permute.xlu0 %2530
  %2532 = vrot.lane.b32.xlu0 %v2520, 113
  %v2533 = vpop.permute.xlu0 %2532
  %2534 = vrot.lane.b32.xlu0 %v2522, 113
  %v2535 = vpop.permute.xlu0 %2534
  %vm2536 = vcmask 924672
  %v2537 = vsel %vm2536, %v2529, %v2531
  %v2538 = vsel %vm2536, %v2531, %v2533
  %v2539 = vsel %vm2536, %v2533, %v2535
  %v2544 = vsel %vm2536, %v2535, 0.0
  %v2545 = vlaneseq
  %v2546 = vshrl.u32 %v2545, 7
  %v2547 = vsub.s32 6, %v2546
  %v2548 = vrot.slane %v38, %v2547
  %v2549 = vlaneseq
  %v2550 = vshrl.u32 %v2549, 7
  %v2551 = vsub.s32 6, %v2550
  %v2552 = vrot.slane %v39, %v2551
  %v2553 = vlaneseq
  %v2554 = vshrl.u32 %v2553, 7
  %v2555 = vsub.s32 6, %v2554
  %v2556 = vrot.slane %v40, %v2555
  %v2557 = vlaneseq
  %v2558 = vshrl.u32 %v2557, 7
  %v2559 = vsub.s32 6, %v2558
  %v2560 = vrot.slane %v41, %v2559
  %v2561 = vmul.f32 %v2537, %v2548
  %v2562 = vmul.f32 %v2538, %v2552
  %v2563 = vmul.f32 %v2539, %v2556
  %v2564 = vmul.f32 %v2544, %v2560
  %v2565 = vadd.f32 %v2226, %v2561
  %v2566 = vadd.f32 %v2227, %v2562
  %v2567 = vadd.f32 %v2228, %v2563
  %v2568 = vadd.f32 %v2229, %v2564
  %s2569 = scalar_lea.vmem %s4, 56
  %v2570 = vld [vmem:[%s2569] sm:$0xff]
  %s2571 = scalar_lea.vmem %s5, 56
  %v2572 = vld [vmem:[%s2571] sm:$0xff]
  %v2574 = vsel %vm223, %v2572, 0
  %2576 = vmatprep.subr.mxu0 %v232
  %2577 = vmatpush1.msra.mxu0 %v229
  %2578 = vmatprep.subr.mxu0 0.0
  %2579 = vmatpush1.msra.mxu0 0.0
  %2580 = vmatprep.subr.mxu0 0.0
  %2581 = vmatpush1.msra.mxu0 0.0
  %2582 = vmatprep.subr.mxu0 0.0
  %2583 = vmatpush1.msra.mxu0 0.0
  %2584 = vmatprep.subr.mxu0 0.0
  %2585 = vmatpush1.msra.mxu0 0.0
  %2586 = vmatprep.subr.mxu0 0.0
  %2587 = vmatpush1.msra.mxu0 0.0
  %2588 = vmatprep.subr.mxu0 0.0
  %2589 = vmatpush1.msra.mxu0 0.0
  %2590 = vmatprep.subr.mxu0 0.0
  %2591 = vmatpush1.msra.mxu0 0.0
  %2592 = vmatprep.subr.mxu0 0.0
  %2593 = vmatpush1.msra.mxu0 0.0
  %2594 = vmatprep.subr.mxu0 0.0
  %2595 = vmatpush1.msra.mxu0 0.0
  %2596 = vmatprep.subr.mxu0 0.0
  %2597 = vmatpush1.msra.mxu0 0.0
  %2598 = vmatprep.subr.mxu0 0.0
  %2599 = vmatpush1.msra.mxu0 0.0
  %2600 = vmatprep.subr.mxu0 0.0
  %2601 = vmatpush1.msra.mxu0 0.0
  %2602 = vmatprep.subr.mxu0 0.0
  %2603 = vmatpush1.msra.mxu0 0.0
  %2604 = vmatprep.subr.mxu0 0.0
  %2605 = vmatpush1.msra.mxu0 0.0
  %2606 = vmatprep.subr.mxu0 0.0
  %2607 = vmatpush1.msra.mxu0 0.0
  %2608 = vmatprep.subr.mxu0 0.0
  %2609 = vmatpush1.msra.mxu0 0.0
  %2610 = vmatprep.subr.mxu0 0.0
  %2611 = vmatpush1.msra.mxu0 0.0
  %2612 = vmatprep.subr.mxu0 0.0
  %2613 = vmatpush1.msra.mxu0 0.0
  %2614 = vmatprep.subr.mxu0 0.0
  %2615 = vmatpush1.msra.mxu0 0.0
  %2616 = vmatprep.subr.mxu0 0.0
  %2617 = vmatpush1.msra.mxu0 0.0
  %2618 = vmatprep.subr.mxu0 0.0
  %2619 = vmatpush1.msra.mxu0 0.0
  %2620 = vmatprep.subr.mxu0 0.0
  %2621 = vmatpush1.msra.mxu0 0.0
  %2622 = vmatprep.subr.mxu0 0.0
  %2623 = vmatpush1.msra.mxu0 0.0
  %2624 = vmatprep.subr.mxu0 0.0
  %2625 = vmatpush1.msra.mxu0 0.0
  %2626 = vmatprep.subr.mxu0 0.0
  %2627 = vmatpush1.msra.mxu0 0.0
  %2628 = vmatprep.subr.mxu0 0.0
  %2629 = vmatpush1.msra.mxu0 0.0
  %2630 = vmatprep.subr.mxu0 0.0
  %2631 = vmatpush1.msra.mxu0 0.0
  %2632 = vmatprep.subr.mxu0 0.0
  %2633 = vmatpush1.msra.mxu0 0.0
  %2634 = vmatprep.subr.mxu0 0.0
  %2635 = vmatpush1.msra.mxu0 0.0
  %2636 = vmatprep.subr.mxu0 0.0
  %2637 = vmatpush1.msra.mxu0 0.0
  %2638 = vmatprep.subr.mxu0 0.0
  %2639 = vmatpush1.msra.mxu0 0.0
  %2640 = vmatprep.mubr.f32.mxu0 0.0
  %2641 = vmatmul.mubr.f32.gmra.mrb[0].mxu0 %v2574
  %v2642 = vpop.f32.mrb[0].mxu0
  %v2643 = vadd.f32 0.0, %v2642
  %v2644 = vpop.f32.mrb[0].mxu0
  %v2645 = vadd.f32 0.0, %v2644
  %2646 = vdwg.mxu0
  %2647 = vmatprep.subr.mxu0 %v238
  %2648 = vmatpush1.msra.mxu0 %v235
  %2649 = vmatprep.subr.mxu0 0.0
  %2650 = vmatpush1.msra.mxu0 0.0
  %2651 = vmatprep.subr.mxu0 0.0
  %2652 = vmatpush1.msra.mxu0 0.0
  %2653 = vmatprep.subr.mxu0 0.0
  %2654 = vmatpush1.msra.mxu0 0.0
  %2655 = vmatprep.subr.mxu0 0.0
  %2656 = vmatpush1.msra.mxu0 0.0
  %2657 = vmatprep.subr.mxu0 0.0
  %2658 = vmatpush1.msra.mxu0 0.0
  %2659 = vmatprep.subr.mxu0 0.0
  %2660 = vmatpush1.msra.mxu0 0.0
  %2661 = vmatprep.subr.mxu0 0.0
  %2662 = vmatpush1.msra.mxu0 0.0
  %2663 = vmatprep.subr.mxu0 0.0
  %2664 = vmatpush1.msra.mxu0 0.0
  %2665 = vmatprep.subr.mxu0 0.0
  %2666 = vmatpush1.msra.mxu0 0.0
  %2667 = vmatprep.subr.mxu0 0.0
  %2668 = vmatpush1.msra.mxu0 0.0
  %2669 = vmatprep.subr.mxu0 0.0
  %2670 = vmatpush1.msra.mxu0 0.0
  %2671 = vmatprep.subr.mxu0 0.0
  %2672 = vmatpush1.msra.mxu0 0.0
  %2673 = vmatprep.subr.mxu0 0.0
  %2674 = vmatpush1.msra.mxu0 0.0
  %2675 = vmatprep.subr.mxu0 0.0
  %2676 = vmatpush1.msra.mxu0 0.0
  %2677 = vmatprep.subr.mxu0 0.0
  %2678 = vmatpush1.msra.mxu0 0.0
  %2679 = vmatprep.subr.mxu0 0.0
  %2680 = vmatpush1.msra.mxu0 0.0
  %2681 = vmatprep.subr.mxu0 0.0
  %2682 = vmatpush1.msra.mxu0 0.0
  %2683 = vmatprep.subr.mxu0 0.0
  %2684 = vmatpush1.msra.mxu0 0.0
  %2685 = vmatprep.subr.mxu0 0.0
  %2686 = vmatpush1.msra.mxu0 0.0
  %2687 = vmatprep.subr.mxu0 0.0
  %2688 = vmatpush1.msra.mxu0 0.0
  %2689 = vmatprep.subr.mxu0 0.0
  %2690 = vmatpush1.msra.mxu0 0.0
  %2691 = vmatprep.subr.mxu0 0.0
  %2692 = vmatpush1.msra.mxu0 0.0
  %2693 = vmatprep.subr.mxu0 0.0
  %2694 = vmatpush1.msra.mxu0 0.0
  %2695 = vmatprep.subr.mxu0 0.0
  %2696 = vmatpush1.msra.mxu0 0.0
  %2697 = vmatprep.subr.mxu0 0.0
  %2698 = vmatpush1.msra.mxu0 0.0
  %2699 = vmatprep.subr.mxu0 0.0
  %2700 = vmatpush1.msra.mxu0 0.0
  %2701 = vmatprep.subr.mxu0 0.0
  %2702 = vmatpush1.msra.mxu0 0.0
  %2703 = vmatprep.subr.mxu0 0.0
  %2704 = vmatpush1.msra.mxu0 0.0
  %2705 = vmatprep.subr.mxu0 0.0
  %2706 = vmatpush1.msra.mxu0 0.0
  %2707 = vmatprep.subr.mxu0 0.0
  %2708 = vmatpush1.msra.mxu0 0.0
  %2709 = vmatprep.subr.mxu0 0.0
  %2710 = vmatpush1.msra.mxu0 0.0
  %2711 = vmatprep.mubr.f32.mxu0 0.0
  %2712 = vmatmul.mubr.f32.gmra.mrb[0].mxu0 %v2574
  %v2713 = vpop.f32.mrb[0].mxu0
  %v2714 = vadd.f32 0.0, %v2713
  %v2715 = vpop.f32.mrb[0].mxu0
  %v2716 = vadd.f32 0.0, %v2715
  %2717 = vdwg.mxu0
  %v2719 = vsel %vm223, %v2570, 0
  %2721 = vmatprep.subr.mxu0 %v387
  %2722 = vmatpush1.msra.mxu0 %v385
  %2723 = vmatprep.subr.mxu0 0.0
  %2724 = vmatpush1.msra.mxu0 0.0
  %2725 = vmatprep.subr.mxu0 0.0
  %2726 = vmatpush1.msra.mxu0 0.0
  %2727 = vmatprep.subr.mxu0 0.0
  %2728 = vmatpush1.msra.mxu0 0.0
  %2729 = vmatprep.subr.mxu0 0.0
  %2730 = vmatpush1.msra.mxu0 0.0
  %2731 = vmatprep.subr.mxu0 0.0
  %2732 = vmatpush1.msra.mxu0 0.0
  %2733 = vmatprep.subr.mxu0 0.0
  %2734 = vmatpush1.msra.mxu0 0.0
  %2735 = vmatprep.subr.mxu0 0.0
  %2736 = vmatpush1.msra.mxu0 0.0
  %2737 = vmatprep.subr.mxu0 0.0
  %2738 = vmatpush1.msra.mxu0 0.0
  %2739 = vmatprep.subr.mxu0 0.0
  %2740 = vmatpush1.msra.mxu0 0.0
  %2741 = vmatprep.subr.mxu0 0.0
  %2742 = vmatpush1.msra.mxu0 0.0
  %2743 = vmatprep.subr.mxu0 0.0
  %2744 = vmatpush1.msra.mxu0 0.0
  %2745 = vmatprep.subr.mxu0 0.0
  %2746 = vmatpush1.msra.mxu0 0.0
  %2747 = vmatprep.subr.mxu0 0.0
  %2748 = vmatpush1.msra.mxu0 0.0
  %2749 = vmatprep.subr.mxu0 0.0
  %2750 = vmatpush1.msra.mxu0 0.0
  %2751 = vmatprep.subr.mxu0 0.0
  %2752 = vmatpush1.msra.mxu0 0.0
  %2753 = vmatprep.subr.mxu0 0.0
  %2754 = vmatpush1.msra.mxu0 0.0
  %2755 = vmatprep.subr.mxu0 0.0
  %2756 = vmatpush1.msra.mxu0 0.0
  %2757 = vmatprep.subr.mxu0 0.0
  %2758 = vmatpush1.msra.mxu0 0.0
  %2759 = vmatprep.subr.mxu0 0.0
  %2760 = vmatpush1.msra.mxu0 0.0
  %2761 = vmatprep.subr.mxu0 0.0
  %2762 = vmatpush1.msra.mxu0 0.0
  %2763 = vmatprep.subr.mxu0 0.0
  %2764 = vmatpush1.msra.mxu0 0.0
  %2765 = vmatprep.subr.mxu0 0.0
  %2766 = vmatpush1.msra.mxu0 0.0
  %2767 = vmatprep.subr.mxu0 0.0
  %2768 = vmatpush1.msra.mxu0 0.0
  %2769 = vmatprep.subr.mxu0 0.0
  %2770 = vmatpush1.msra.mxu0 0.0
  %2771 = vmatprep.subr.mxu0 0.0
  %2772 = vmatpush1.msra.mxu0 0.0
  %2773 = vmatprep.subr.mxu0 0.0
  %2774 = vmatpush1.msra.mxu0 0.0
  %2775 = vmatprep.subr.mxu0 0.0
  %2776 = vmatpush1.msra.mxu0 0.0
  %2777 = vmatprep.subr.mxu0 0.0
  %2778 = vmatpush1.msra.mxu0 0.0
  %2779 = vmatprep.subr.mxu0 0.0
  %2780 = vmatpush1.msra.mxu0 0.0
  %2781 = vmatprep.subr.mxu0 0.0
  %2782 = vmatpush1.msra.mxu0 0.0
  %2783 = vmatprep.subr.mxu0 0.0
  %2784 = vmatpush1.msra.mxu0 0.0
  %2785 = vmatprep.mubr.f32.mxu0 0.0
  %2786 = vmatmul.mubr.f32.gmra.mrb[0].mxu0 %v2719
  %v2787 = vpop.f32.mrb[0].mxu0
  %v2788 = vadd.f32 %v2643, %v2787
  %v2789 = vpop.f32.mrb[0].mxu0
  %v2790 = vadd.f32 %v2645, %v2789
  %2791 = vdwg.mxu0
  %2792 = vmatprep.subr.mxu0 %v391
  %2793 = vmatpush1.msra.mxu0 %v389
  %2794 = vmatprep.subr.mxu0 0.0
  %2795 = vmatpush1.msra.mxu0 0.0
  %2796 = vmatprep.subr.mxu0 0.0
  %2797 = vmatpush1.msra.mxu0 0.0
  %2798 = vmatprep.subr.mxu0 0.0
  %2799 = vmatpush1.msra.mxu0 0.0
  %2800 = vmatprep.subr.mxu0 0.0
  %2801 = vmatpush1.msra.mxu0 0.0
  %2802 = vmatprep.subr.mxu0 0.0
  %2803 = vmatpush1.msra.mxu0 0.0
  %2804 = vmatprep.subr.mxu0 0.0
  %2805 = vmatpush1.msra.mxu0 0.0
  %2806 = vmatprep.subr.mxu0 0.0
  %2807 = vmatpush1.msra.mxu0 0.0
  %2808 = vmatprep.subr.mxu0 0.0
  %2809 = vmatpush1.msra.mxu0 0.0
  %2810 = vmatprep.subr.mxu0 0.0
  %2811 = vmatpush1.msra.mxu0 0.0
  %2812 = vmatprep.subr.mxu0 0.0
  %2813 = vmatpush1.msra.mxu0 0.0
  %2814 = vmatprep.subr.mxu0 0.0
  %2815 = vmatpush1.msra.mxu0 0.0
  %2816 = vmatprep.subr.mxu0 0.0
  %2817 = vmatpush1.msra.mxu0 0.0
  %2818 = vmatprep.subr.mxu0 0.0
  %2819 = vmatpush1.msra.mxu0 0.0
  %2820 = vmatprep.subr.mxu0 0.0
  %2821 = vmatpush1.msra.mxu0 0.0
  %2822 = vmatprep.subr.mxu0 0.0
  %2823 = vmatpush1.msra.mxu0 0.0
  %2824 = vmatprep.subr.mxu0 0.0
  %2825 = vmatpush1.msra.mxu0 0.0
  %2826 = vmatprep.subr.mxu0 0.0
  %2827 = vmatpush1.msra.mxu0 0.0
  %2828 = vmatprep.subr.mxu0 0.0
  %2829 = vmatpush1.msra.mxu0 0.0
  %2830 = vmatprep.subr.mxu0 0.0
  %2831 = vmatpush1.msra.mxu0 0.0
  %2832 = vmatprep.subr.mxu0 0.0
  %2833 = vmatpush1.msra.mxu0 0.0
  %2834 = vmatprep.subr.mxu0 0.0
  %2835 = vmatpush1.msra.mxu0 0.0
  %2836 = vmatprep.subr.mxu0 0.0
  %2837 = vmatpush1.msra.mxu0 0.0
  %2838 = vmatprep.subr.mxu0 0.0
  %2839 = vmatpush1.msra.mxu0 0.0
  %2840 = vmatprep.subr.mxu0 0.0
  %2841 = vmatpush1.msra.mxu0 0.0
  %2842 = vmatprep.subr.mxu0 0.0
  %2843 = vmatpush1.msra.mxu0 0.0
  %2844 = vmatprep.subr.mxu0 0.0
  %2845 = vmatpush1.msra.mxu0 0.0
  %2846 = vmatprep.subr.mxu0 0.0
  %2847 = vmatpush1.msra.mxu0 0.0
  %2848 = vmatprep.subr.mxu0 0.0
  %2849 = vmatpush1.msra.mxu0 0.0
  %2850 = vmatprep.subr.mxu0 0.0
  %2851 = vmatpush1.msra.mxu0 0.0
  %2852 = vmatprep.subr.mxu0 0.0
  %2853 = vmatpush1.msra.mxu0 0.0
  %2854 = vmatprep.subr.mxu0 0.0
  %2855 = vmatpush1.msra.mxu0 0.0
  %2856 = vmatprep.mubr.f32.mxu0 0.0
  %2857 = vmatmul.mubr.f32.gmra.mrb[0].mxu0 %v2719
  %v2858 = vpop.f32.mrb[0].mxu0
  %v2859 = vadd.f32 %v2714, %v2858
  %v2860 = vpop.f32.mrb[0].mxu0
  %v2861 = vadd.f32 %v2716, %v2860
  %2862 = vdwg.mxu0
  %2867 = vrot.lane.b32.xlu0 %v2788, 112
  %v2868 = vpop.permute.xlu0 %2867
  %2869 = vrot.lane.b32.xlu0 %v2790, 112
  %v2870 = vpop.permute.xlu0 %2869
  %2871 = vrot.lane.b32.xlu0 %v2859, 112
  %v2872 = vpop.permute.xlu0 %2871
  %2873 = vrot.lane.b32.xlu0 %v2861, 112
  %v2874 = vpop.permute.xlu0 %2873
  %vm2875 = vcmask 916480
  %v2876 = vsel %vm2875, %v2868, %v2870
  %v2877 = vsel %vm2875, %v2870, %v2872
  %v2878 = vsel %vm2875, %v2872, %v2874
  %v2883 = vsel %vm2875, %v2874, 0.0
  %v2884 = vlaneseq
  %v2885 = vshrl.u32 %v2884, 7
  %v2886 = vsub.s32 7, %v2885
  %v2887 = vrot.slane %v38, %v2886
  %v2888 = vlaneseq
  %v2889 = vshrl.u32 %v2888, 7
  %v2890 = vsub.s32 7, %v2889
  %v2891 = vrot.slane %v39, %v2890
  %v2892 = vlaneseq
  %v2893 = vshrl.u32 %v2892, 7
  %v2894 = vsub.s32 7, %v2893
  %v2895 = vrot.slane %v40, %v2894
  %v2896 = vlaneseq
  %v2897 = vshrl.u32 %v2896, 7
  %v2898 = vsub.s32 7, %v2897
  %v2899 = vrot.slane %v41, %v2898
  %v2900 = vmul.f32 %v2876, %v2887
  %v2901 = vmul.f32 %v2877, %v2891
  %v2902 = vmul.f32 %v2878, %v2895
  %v2903 = vmul.f32 %v2883, %v2899
  %v2904 = vadd.f32 %v2565, %v2900
  %v2905 = vadd.f32 %v2566, %v2901
  %v2906 = vadd.f32 %v2567, %v2902
  %v2907 = vadd.f32 %v2568, %v2903
  %s2908 = scalar_lea.vmem %s4, 64
  %v2909 = vld [vmem:[%s2908] sm:$0xff]
  %s2910 = scalar_lea.vmem %s5, 64
  %v2911 = vld [vmem:[%s2910] sm:$0xff]
  %v2913 = vsel %vm223, %v2911, 0
  %2915 = vmatprep.subr.mxu0 %v232
  %2916 = vmatpush1.msra.mxu0 %v229
  %2917 = vmatprep.subr.mxu0 0.0
  %2918 = vmatpush1.msra.mxu0 0.0
  %2919 = vmatprep.subr.mxu0 0.0
  %2920 = vmatpush1.msra.mxu0 0.0
  %2921 = vmatprep.subr.mxu0 0.0
  %2922 = vmatpush1.msra.mxu0 0.0
  %2923 = vmatprep.subr.mxu0 0.0
  %2924 = vmatpush1.msra.mxu0 0.0
  %2925 = vmatprep.subr.mxu0 0.0
  %2926 = vmatpush1.msra.mxu0 0.0
  %2927 = vmatprep.subr.mxu0 0.0
  %2928 = vmatpush1.msra.mxu0 0.0
  %2929 = vmatprep.subr.mxu0 0.0
  %2930 = vmatpush1.msra.mxu0 0.0
  %2931 = vmatprep.subr.mxu0 0.0
  %2932 = vmatpush1.msra.mxu0 0.0
  %2933 = vmatprep.subr.mxu0 0.0
  %2934 = vmatpush1.msra.mxu0 0.0
  %2935 = vmatprep.subr.mxu0 0.0
  %2936 = vmatpush1.msra.mxu0 0.0
  %2937 = vmatprep.subr.mxu0 0.0
  %2938 = vmatpush1.msra.mxu0 0.0
  %2939 = vmatprep.subr.mxu0 0.0
  %2940 = vmatpush1.msra.mxu0 0.0
  %2941 = vmatprep.subr.mxu0 0.0
  %2942 = vmatpush1.msra.mxu0 0.0
  %2943 = vmatprep.subr.mxu0 0.0
  %2944 = vmatpush1.msra.mxu0 0.0
  %2945 = vmatprep.subr.mxu0 0.0
  %2946 = vmatpush1.msra.mxu0 0.0
  %2947 = vmatprep.subr.mxu0 0.0
  %2948 = vmatpush1.msra.mxu0 0.0
  %2949 = vmatprep.subr.mxu0 0.0
  %2950 = vmatpush1.msra.mxu0 0.0
  %2951 = vmatprep.subr.mxu0 0.0
  %2952 = vmatpush1.msra.mxu0 0.0
  %2953 = vmatprep.subr.mxu0 0.0
  %2954 = vmatpush1.msra.mxu0 0.0
  %2955 = vmatprep.subr.mxu0 0.0
  %2956 = vmatpush1.msra.mxu0 0.0
  %2957 = vmatprep.subr.mxu0 0.0
  %2958 = vmatpush1.msra.mxu0 0.0
  %2959 = vmatprep.subr.mxu0 0.0
  %2960 = vmatpush1.msra.mxu0 0.0
  %2961 = vmatprep.subr.mxu0 0.0
  %2962 = vmatpush1.msra.mxu0 0.0
  %2963 = vmatprep.subr.mxu0 0.0
  %2964 = vmatpush1.msra.mxu0 0.0
  %2965 = vmatprep.subr.mxu0 0.0
  %2966 = vmatpush1.msra.mxu0 0.0
  %2967 = vmatprep.subr.mxu0 0.0
  %2968 = vmatpush1.msra.mxu0 0.0
  %2969 = vmatprep.subr.mxu0 0.0
  %2970 = vmatpush1.msra.mxu0 0.0
  %2971 = vmatprep.subr.mxu0 0.0
  %2972 = vmatpush1.msra.mxu0 0.0
  %2973 = vmatprep.subr.mxu0 0.0
  %2974 = vmatpush1.msra.mxu0 0.0
  %2975 = vmatprep.subr.mxu0 0.0
  %2976 = vmatpush1.msra.mxu0 0.0
  %2977 = vmatprep.subr.mxu0 0.0
  %2978 = vmatpush1.msra.mxu0 0.0
  %2979 = vmatprep.mubr.f32.mxu0 0.0
  %2980 = vmatmul.mubr.f32.gmra.mrb[0].mxu0 %v2913
  %v2981 = vpop.f32.mrb[0].mxu0
  %v2982 = vadd.f32 0.0, %v2981
  %v2983 = vpop.f32.mrb[0].mxu0
  %v2984 = vadd.f32 0.0, %v2983
  %2985 = vdwg.mxu0
  %2986 = vmatprep.subr.mxu0 %v238
  %2987 = vmatpush1.msra.mxu0 %v235
  %2988 = vmatprep.subr.mxu0 0.0
  %2989 = vmatpush1.msra.mxu0 0.0
  %2990 = vmatprep.subr.mxu0 0.0
  %2991 = vmatpush1.msra.mxu0 0.0
  %2992 = vmatprep.subr.mxu0 0.0
  %2993 = vmatpush1.msra.mxu0 0.0
  %2994 = vmatprep.subr.mxu0 0.0
  %2995 = vmatpush1.msra.mxu0 0.0
  %2996 = vmatprep.subr.mxu0 0.0
  %2997 = vmatpush1.msra.mxu0 0.0
  %2998 = vmatprep.subr.mxu0 0.0
  %2999 = vmatpush1.msra.mxu0 0.0
  %3000 = vmatprep.subr.mxu0 0.0
  %3001 = vmatpush1.msra.mxu0 0.0
  %3002 = vmatprep.subr.mxu0 0.0
  %3003 = vmatpush1.msra.mxu0 0.0
  %3004 = vmatprep.subr.mxu0 0.0
  %3005 = vmatpush1.msra.mxu0 0.0
  %3006 = vmatprep.subr.mxu0 0.0
  %3007 = vmatpush1.msra.mxu0 0.0
  %3008 = vmatprep.subr.mxu0 0.0
  %3009 = vmatpush1.msra.mxu0 0.0
  %3010 = vmatprep.subr.mxu0 0.0
  %3011 = vmatpush1.msra.mxu0 0.0
  %3012 = vmatprep.subr.mxu0 0.0
  %3013 = vmatpush1.msra.mxu0 0.0
  %3014 = vmatprep.subr.mxu0 0.0
  %3015 = vmatpush1.msra.mxu0 0.0
  %3016 = vmatprep.subr.mxu0 0.0
  %3017 = vmatpush1.msra.mxu0 0.0
  %3018 = vmatprep.subr.mxu0 0.0
  %3019 = vmatpush1.msra.mxu0 0.0
  %3020 = vmatprep.subr.mxu0 0.0
  %3021 = vmatpush1.msra.mxu0 0.0
  %3022 = vmatprep.subr.mxu0 0.0
  %3023 = vmatpush1.msra.mxu0 0.0
  %3024 = vmatprep.subr.mxu0 0.0
  %3025 = vmatpush1.msra.mxu0 0.0
  %3026 = vmatprep.subr.mxu0 0.0
  %3027 = vmatpush1.msra.mxu0 0.0
  %3028 = vmatprep.subr.mxu0 0.0
  %3029 = vmatpush1.msra.mxu0 0.0
  %3030 = vmatprep.subr.mxu0 0.0
  %3031 = vmatpush1.msra.mxu0 0.0
  %3032 = vmatprep.subr.mxu0 0.0
  %3033 = vmatpush1.msra.mxu0 0.0
  %3034 = vmatprep.subr.mxu0 0.0
  %3035 = vmatpush1.msra.mxu0 0.0
  %3036 = vmatprep.subr.mxu0 0.0
  %3037 = vmatpush1.msra.mxu0 0.0
  %3038 = vmatprep.subr.mxu0 0.0
  %3039 = vmatpush1.msra.mxu0 0.0
  %3040 = vmatprep.subr.mxu0 0.0
  %3041 = vmatpush1.msra.mxu0 0.0
  %3042 = vmatprep.subr.mxu0 0.0
  %3043 = vmatpush1.msra.mxu0 0.0
  %3044 = vmatprep.subr.mxu0 0.0
  %3045 = vmatpush1.msra.mxu0 0.0
  %3046 = vmatprep.subr.mxu0 0.0
  %3047 = vmatpush1.msra.mxu0 0.0
  %3048 = vmatprep.subr.mxu0 0.0
  %3049 = vmatpush1.msra.mxu0 0.0
  %3050 = vmatprep.mubr.f32.mxu0 0.0
  %3051 = vmatmul.mubr.f32.gmra.mrb[0].mxu0 %v2913
  %v3052 = vpop.f32.mrb[0].mxu0
  %v3053 = vadd.f32 0.0, %v3052
  %v3054 = vpop.f32.mrb[0].mxu0
  %v3055 = vadd.f32 0.0, %v3054
  %3056 = vdwg.mxu0
  %v3058 = vsel %vm223, %v2909, 0
  %3060 = vmatprep.subr.mxu0 %v387
  %3061 = vmatpush1.msra.mxu0 %v385
  %3062 = vmatprep.subr.mxu0 0.0
  %3063 = vmatpush1.msra.mxu0 0.0
  %3064 = vmatprep.subr.mxu0 0.0
  %3065 = vmatpush1.msra.mxu0 0.0
  %3066 = vmatprep.subr.mxu0 0.0
  %3067 = vmatpush1.msra.mxu0 0.0
  %3068 = vmatprep.subr.mxu0 0.0
  %3069 = vmatpush1.msra.mxu0 0.0
  %3070 = vmatprep.subr.mxu0 0.0
  %3071 = vmatpush1.msra.mxu0 0.0
  %3072 = vmatprep.subr.mxu0 0.0
  %3073 = vmatpush1.msra.mxu0 0.0
  %3074 = vmatprep.subr.mxu0 0.0
  %3075 = vmatpush1.msra.mxu0 0.0
  %3076 = vmatprep.subr.mxu0 0.0
  %3077 = vmatpush1.msra.mxu0 0.0
  %3078 = vmatprep.subr.mxu0 0.0
  %3079 = vmatpush1.msra.mxu0 0.0
  %3080 = vmatprep.subr.mxu0 0.0
  %3081 = vmatpush1.msra.mxu0 0.0
  %3082 = vmatprep.subr.mxu0 0.0
  %3083 = vmatpush1.msra.mxu0 0.0
  %3084 = vmatprep.subr.mxu0 0.0
  %3085 = vmatpush1.msra.mxu0 0.0
  %3086 = vmatprep.subr.mxu0 0.0
  %3087 = vmatpush1.msra.mxu0 0.0
  %3088 = vmatprep.subr.mxu0 0.0
  %3089 = vmatpush1.msra.mxu0 0.0
  %3090 = vmatprep.subr.mxu0 0.0
  %3091 = vmatpush1.msra.mxu0 0.0
  %3092 = vmatprep.subr.mxu0 0.0
  %3093 = vmatpush1.msra.mxu0 0.0
  %3094 = vmatprep.subr.mxu0 0.0
  %3095 = vmatpush1.msra.mxu0 0.0
  %3096 = vmatprep.subr.mxu0 0.0
  %3097 = vmatpush1.msra.mxu0 0.0
  %3098 = vmatprep.subr.mxu0 0.0
  %3099 = vmatpush1.msra.mxu0 0.0
  %3100 = vmatprep.subr.mxu0 0.0
  %3101 = vmatpush1.msra.mxu0 0.0
  %3102 = vmatprep.subr.mxu0 0.0
  %3103 = vmatpush1.msra.mxu0 0.0
  %3104 = vmatprep.subr.mxu0 0.0
  %3105 = vmatpush1.msra.mxu0 0.0
  %3106 = vmatprep.subr.mxu0 0.0
  %3107 = vmatpush1.msra.mxu0 0.0
  %3108 = vmatprep.subr.mxu0 0.0
  %3109 = vmatpush1.msra.mxu0 0.0
  %3110 = vmatprep.subr.mxu0 0.0
  %3111 = vmatpush1.msra.mxu0 0.0
  %3112 = vmatprep.subr.mxu0 0.0
  %3113 = vmatpush1.msra.mxu0 0.0
  %3114 = vmatprep.subr.mxu0 0.0
  %3115 = vmatpush1.msra.mxu0 0.0
  %3116 = vmatprep.subr.mxu0 0.0
  %3117 = vmatpush1.msra.mxu0 0.0
  %3118 = vmatprep.subr.mxu0 0.0
  %3119 = vmatpush1.msra.mxu0 0.0
  %3120 = vmatprep.subr.mxu0 0.0
  %3121 = vmatpush1.msra.mxu0 0.0
  %3122 = vmatprep.subr.mxu0 0.0
  %3123 = vmatpush1.msra.mxu0 0.0
  %3124 = vmatprep.mubr.f32.mxu0 0.0
  %3125 = vmatmul.mubr.f32.gmra.mrb[0].mxu0 %v3058
  %v3126 = vpop.f32.mrb[0].mxu0
  %v3127 = vadd.f32 %v2982, %v3126
  %v3128 = vpop.f32.mrb[0].mxu0
  %v3129 = vadd.f32 %v2984, %v3128
  %3130 = vdwg.mxu0
  %3131 = vmatprep.subr.mxu0 %v391
  %3132 = vmatpush1.msra.mxu0 %v389
  %3133 = vmatprep.subr.mxu0 0.0
  %3134 = vmatpush1.msra.mxu0 0.0
  %3135 = vmatprep.subr.mxu0 0.0
  %3136 = vmatpush1.msra.mxu0 0.0
  %3137 = vmatprep.subr.mxu0 0.0
  %3138 = vmatpush1.msra.mxu0 0.0
  %3139 = vmatprep.subr.mxu0 0.0
  %3140 = vmatpush1.msra.mxu0 0.0
  %3141 = vmatprep.subr.mxu0 0.0
  %3142 = vmatpush1.msra.mxu0 0.0
  %3143 = vmatprep.subr.mxu0 0.0
  %3144 = vmatpush1.msra.mxu0 0.0
  %3145 = vmatprep.subr.mxu0 0.0
  %3146 = vmatpush1.msra.mxu0 0.0
  %3147 = vmatprep.subr.mxu0 0.0
  %3148 = vmatpush1.msra.mxu0 0.0
  %3149 = vmatprep.subr.mxu0 0.0
  %3150 = vmatpush1.msra.mxu0 0.0
  %3151 = vmatprep.subr.mxu0 0.0
  %3152 = vmatpush1.msra.mxu0 0.0
  %3153 = vmatprep.subr.mxu0 0.0
  %3154 = vmatpush1.msra.mxu0 0.0
  %3155 = vmatprep.subr.mxu0 0.0
  %3156 = vmatpush1.msra.mxu0 0.0
  %3157 = vmatprep.subr.mxu0 0.0
  %3158 = vmatpush1.msra.mxu0 0.0
  %3159 = vmatprep.subr.mxu0 0.0
  %3160 = vmatpush1.msra.mxu0 0.0
  %3161 = vmatprep.subr.mxu0 0.0
  %3162 = vmatpush1.msra.mxu0 0.0
  %3163 = vmatprep.subr.mxu0 0.0
  %3164 = vmatpush1.msra.mxu0 0.0
  %3165 = vmatprep.subr.mxu0 0.0
  %3166 = vmatpush1.msra.mxu0 0.0
  %3167 = vmatprep.subr.mxu0 0.0
  %3168 = vmatpush1.msra.mxu0 0.0
  %3169 = vmatprep.subr.mxu0 0.0
  %3170 = vmatpush1.msra.mxu0 0.0
  %3171 = vmatprep.subr.mxu0 0.0
  %3172 = vmatpush1.msra.mxu0 0.0
  %3173 = vmatprep.subr.mxu0 0.0
  %3174 = vmatpush1.msra.mxu0 0.0
  %3175 = vmatprep.subr.mxu0 0.0
  %3176 = vmatpush1.msra.mxu0 0.0
  %3177 = vmatprep.subr.mxu0 0.0
  %3178 = vmatpush1.msra.mxu0 0.0
  %3179 = vmatprep.subr.mxu0 0.0
  %3180 = vmatpush1.msra.mxu0 0.0
  %3181 = vmatprep.subr.mxu0 0.0
  %3182 = vmatpush1.msra.mxu0 0.0
  %3183 = vmatprep.subr.mxu0 0.0
  %3184 = vmatpush1.msra.mxu0 0.0
  %3185 = vmatprep.subr.mxu0 0.0
  %3186 = vmatpush1.msra.mxu0 0.0
  %3187 = vmatprep.subr.mxu0 0.0
  %3188 = vmatpush1.msra.mxu0 0.0
  %3189 = vmatprep.subr.mxu0 0.0
  %3190 = vmatpush1.msra.mxu0 0.0
  %3191 = vmatprep.subr.mxu0 0.0
  %3192 = vmatpush1.msra.mxu0 0.0
  %3193 = vmatprep.subr.mxu0 0.0
  %3194 = vmatpush1.msra.mxu0 0.0
  %3195 = vmatprep.mubr.f32.mxu0 0.0
  %3196 = vmatmul.mubr.f32.gmra.mrb[0].mxu0 %v3058
  %v3197 = vpop.f32.mrb[0].mxu0
  %v3198 = vadd.f32 %v3053, %v3197
  %v3199 = vpop.f32.mrb[0].mxu0
  %v3200 = vadd.f32 %v3055, %v3199
  %3201 = vdwg.mxu0
  %3206 = vrot.lane.b32.xlu0 %v3127, 111
  %v3207 = vpop.permute.xlu0 %3206
  %3208 = vrot.lane.b32.xlu0 %v3129, 111
  %v3209 = vpop.permute.xlu0 %3208
  %3210 = vrot.lane.b32.xlu0 %v3198, 111
  %v3211 = vpop.permute.xlu0 %3210
  %3212 = vrot.lane.b32.xlu0 %v3200, 111
  %v3213 = vpop.permute.xlu0 %3212
  %vm3214 = vcmask 908288
  %v3215 = vsel %vm3214, %v3207, %v3209
  %v3216 = vsel %vm3214, %v3209, %v3211
  %v3217 = vsel %vm3214, %v3211, %v3213
  %v3222 = vsel %vm3214, %v3213, 0.0
  %v3223 = vlaneseq
  %v3224 = vshrl.u32 %v3223, 7
  %v3225 = vsub.s32 0, %v3224
  %v3226 = vrot.slane %v42, %v3225
  %v3227 = vlaneseq
  %v3228 = vshrl.u32 %v3227, 7
  %v3229 = vsub.s32 0, %v3228
  %v3230 = vrot.slane %v43, %v3229
  %v3231 = vlaneseq
  %v3232 = vshrl.u32 %v3231, 7
  %v3233 = vsub.s32 0, %v3232
  %v3234 = vrot.slane %v44, %v3233
  %v3235 = vlaneseq
  %v3236 = vshrl.u32 %v3235, 7
  %v3237 = vsub.s32 0, %v3236
  %v3238 = vrot.slane %v45, %v3237
  %v3239 = vmul.f32 %v3215, %v3226
  %v3240 = vmul.f32 %v3216, %v3230
  %v3241 = vmul.f32 %v3217, %v3234
  %v3242 = vmul.f32 %v3222, %v3238
  %v3243 = vadd.f32 %v2904, %v3239
  %v3244 = vadd.f32 %v2905, %v3240
  %v3245 = vadd.f32 %v2906, %v3241
  %v3246 = vadd.f32 %v2907, %v3242
  %v3247 = vadd.f32 %v3243, %v3244
  %v3248 = vadd.f32 %v3247, %v3245
  %v3249 = vadd.f32 %v3248, %v3246
  %3250 = vadd.xlane.f32.xlu0 %v3249
  %v3251 = vpop.xlane.xlu0 %3250
  %v3252 = vmul.f32 %v3251, 0.001953125
  %v3253 = vmul.f32 %v3243, %v3243
  %v3254 = vmul.f32 %v3244, %v3244
  %v3255 = vmul.f32 %v3245, %v3245
  %v3256 = vmul.f32 %v3246, %v3246
  %v3257 = vadd.f32 %v3253, %v3254
  %v3258 = vadd.f32 %v3257, %v3255
  %v3259 = vadd.f32 %v3258, %v3256
  %3260 = vadd.xlane.f32.xlu0 %v3259
  %v3261 = vpop.xlane.xlu0 %3260
  %v3262 = vmul.f32 %v3261, 0.001953125
  %v3263 = vmul.f32 %v3252, %v3252
  %v3264 = vsub.f32 %v3262, %v3263
  %v3265 = vmax.f32 %v3264, 0.0
  %v3266 = vadd.f32 %v3265, 1e-05
  %v3267 = vrsqrt.pop %v3266
  %v3268 = vld [vmem:[%s6] sm:$0xff]
  %v3269 = vmul.f32 %v3267, %v3268
  %v3270 = vld [vmem:[%s7] sm:$0xff]
  %v3271 = vmul.f32 %v3252, %v3269
  %v3272 = vsub.f32 %v3270, %v3271
  %3274 = vset.pattern.permute.xlu0 0
  %3275 = vperm.xlu0 %3274, %v3269
  %v3276 = vpop.permute.xlu0 %3275
  %v3278 = vmul.f32 %v3243, %v3276
  %v3279 = vmul.f32 %v3244, %v3276
  %v3280 = vmul.f32 %v3245, %v3276
  %v3281 = vmul.f32 %v3246, %v3276
  %3283 = vset.pattern.permute.xlu0 0
  %3284 = vperm.xlu0 %3283, %v3272
  %v3285 = vpop.permute.xlu0 %3284
  %v3287 = vadd.f32 %v3278, %v3285
  %v3288 = vadd.f32 %v3279, %v3285
  %v3289 = vadd.f32 %v3280, %v3285
  %v3290 = vadd.f32 %v3281, %v3285
  %v3291 = vmax.f32 %v3287, 0.0
  %v3292 = vmax.f32 %v3288, 0.0
  %v3293 = vmax.f32 %v3289, 0.0
  %v3294 = vmax.f32 %v3290, 0.0
  %v3295 = vld [vmem:[%s8] sm:$0xff]
  %vm3296 = vcmask 64512
  %v3298 = vsel %vm3296, %v3295, 0
  %3300 = vmatprep.subr.mxu0 %v3292
  %3301 = vmatpush1.msra.mxu0 %v3291
  %3302 = vmatprep.subr.mxu0 0.0
  %3303 = vmatpush1.msra.mxu0 0.0
  %3304 = vmatprep.subr.mxu0 0.0
  %3305 = vmatpush1.msra.mxu0 0.0
  %3306 = vmatprep.subr.mxu0 0.0
  %3307 = vmatpush1.msra.mxu0 0.0
  %3308 = vmatprep.subr.mxu0 0.0
  %3309 = vmatpush1.msra.mxu0 0.0
  %3310 = vmatprep.subr.mxu0 0.0
  %3311 = vmatpush1.msra.mxu0 0.0
  %3312 = vmatprep.subr.mxu0 0.0
  %3313 = vmatpush1.msra.mxu0 0.0
  %3314 = vmatprep.subr.mxu0 0.0
  %3315 = vmatpush1.msra.mxu0 0.0
  %3316 = vmatprep.subr.mxu0 0.0
  %3317 = vmatpush1.msra.mxu0 0.0
  %3318 = vmatprep.subr.mxu0 0.0
  %3319 = vmatpush1.msra.mxu0 0.0
  %3320 = vmatprep.subr.mxu0 0.0
  %3321 = vmatpush1.msra.mxu0 0.0
  %3322 = vmatprep.subr.mxu0 0.0
  %3323 = vmatpush1.msra.mxu0 0.0
  %3324 = vmatprep.subr.mxu0 0.0
  %3325 = vmatpush1.msra.mxu0 0.0
  %3326 = vmatprep.subr.mxu0 0.0
  %3327 = vmatpush1.msra.mxu0 0.0
  %3328 = vmatprep.subr.mxu0 0.0
  %3329 = vmatpush1.msra.mxu0 0.0
  %3330 = vmatprep.subr.mxu0 0.0
  %3331 = vmatpush1.msra.mxu0 0.0
  %3332 = vmatprep.subr.mxu0 0.0
  %3333 = vmatpush1.msra.mxu0 0.0
  %3334 = vmatprep.subr.mxu0 0.0
  %3335 = vmatpush1.msra.mxu0 0.0
  %3336 = vmatprep.subr.mxu0 0.0
  %3337 = vmatpush1.msra.mxu0 0.0
  %3338 = vmatprep.subr.mxu0 0.0
  %3339 = vmatpush1.msra.mxu0 0.0
  %3340 = vmatprep.subr.mxu0 0.0
  %3341 = vmatpush1.msra.mxu0 0.0
  %3342 = vmatprep.subr.mxu0 0.0
  %3343 = vmatpush1.msra.mxu0 0.0
  %3344 = vmatprep.subr.mxu0 0.0
  %3345 = vmatpush1.msra.mxu0 0.0
  %3346 = vmatprep.subr.mxu0 0.0
  %3347 = vmatpush1.msra.mxu0 0.0
  %3348 = vmatprep.subr.mxu0 0.0
  %3349 = vmatpush1.msra.mxu0 0.0
  %3350 = vmatprep.subr.mxu0 0.0
  %3351 = vmatpush1.msra.mxu0 0.0
  %3352 = vmatprep.subr.mxu0 0.0
  %3353 = vmatpush1.msra.mxu0 0.0
  %3354 = vmatprep.subr.mxu0 0.0
  %3355 = vmatpush1.msra.mxu0 0.0
  %3356 = vmatprep.subr.mxu0 0.0
  %3357 = vmatpush1.msra.mxu0 0.0
  %3358 = vmatprep.subr.mxu0 0.0
  %3359 = vmatpush1.msra.mxu0 0.0
  %3360 = vmatprep.subr.mxu0 0.0
  %3361 = vmatpush1.msra.mxu0 0.0
  %3362 = vmatprep.subr.mxu0 0.0
  %3363 = vmatpush1.msra.mxu0 0.0
  %3364 = vmatprep.mubr.f32.mxu0 0.0
  %3365 = vmatmul.mubr.f32.gmra.mrb[0].mxu0 %v3298
  %v3366 = vpop.f32.mrb[0].mxu0
  %v3367 = vadd.f32 0.0, %v3366
  %v3368 = vpop.f32.mrb[0].mxu0
  %v3369 = vadd.f32 0.0, %v3368
  %3370 = vdwg.mxu0
  %3371 = vmatprep.subr.mxu0 %v3294
  %3372 = vmatpush1.msra.mxu0 %v3293
  %3373 = vmatprep.subr.mxu0 0.0
  %3374 = vmatpush1.msra.mxu0 0.0
  %3375 = vmatprep.subr.mxu0 0.0
  %3376 = vmatpush1.msra.mxu0 0.0
  %3377 = vmatprep.subr.mxu0 0.0
  %3378 = vmatpush1.msra.mxu0 0.0
  %3379 = vmatprep.subr.mxu0 0.0
  %3380 = vmatpush1.msra.mxu0 0.0
  %3381 = vmatprep.subr.mxu0 0.0
  %3382 = vmatpush1.msra.mxu0 0.0
  %3383 = vmatprep.subr.mxu0 0.0
  %3384 = vmatpush1.msra.mxu0 0.0
  %3385 = vmatprep.subr.mxu0 0.0
  %3386 = vmatpush1.msra.mxu0 0.0
  %3387 = vmatprep.subr.mxu0 0.0
  %3388 = vmatpush1.msra.mxu0 0.0
  %3389 = vmatprep.subr.mxu0 0.0
  %3390 = vmatpush1.msra.mxu0 0.0
  %3391 = vmatprep.subr.mxu0 0.0
  %3392 = vmatpush1.msra.mxu0 0.0
  %3393 = vmatprep.subr.mxu0 0.0
  %3394 = vmatpush1.msra.mxu0 0.0
  %3395 = vmatprep.subr.mxu0 0.0
  %3396 = vmatpush1.msra.mxu0 0.0
  %3397 = vmatprep.subr.mxu0 0.0
  %3398 = vmatpush1.msra.mxu0 0.0
  %3399 = vmatprep.subr.mxu0 0.0
  %3400 = vmatpush1.msra.mxu0 0.0
  %3401 = vmatprep.subr.mxu0 0.0
  %3402 = vmatpush1.msra.mxu0 0.0
  %3403 = vmatprep.subr.mxu0 0.0
  %3404 = vmatpush1.msra.mxu0 0.0
  %3405 = vmatprep.subr.mxu0 0.0
  %3406 = vmatpush1.msra.mxu0 0.0
  %3407 = vmatprep.subr.mxu0 0.0
  %3408 = vmatpush1.msra.mxu0 0.0
  %3409 = vmatprep.subr.mxu0 0.0
  %3410 = vmatpush1.msra.mxu0 0.0
  %3411 = vmatprep.subr.mxu0 0.0
  %3412 = vmatpush1.msra.mxu0 0.0
  %3413 = vmatprep.subr.mxu0 0.0
  %3414 = vmatpush1.msra.mxu0 0.0
  %3415 = vmatprep.subr.mxu0 0.0
  %3416 = vmatpush1.msra.mxu0 0.0
  %3417 = vmatprep.subr.mxu0 0.0
  %3418 = vmatpush1.msra.mxu0 0.0
  %3419 = vmatprep.subr.mxu0 0.0
  %3420 = vmatpush1.msra.mxu0 0.0
  %3421 = vmatprep.subr.mxu0 0.0
  %3422 = vmatpush1.msra.mxu0 0.0
  %3423 = vmatprep.subr.mxu0 0.0
  %3424 = vmatpush1.msra.mxu0 0.0
  %3425 = vmatprep.subr.mxu0 0.0
  %3426 = vmatpush1.msra.mxu0 0.0
  %3427 = vmatprep.subr.mxu0 0.0
  %3428 = vmatpush1.msra.mxu0 0.0
  %3429 = vmatprep.subr.mxu0 0.0
  %3430 = vmatpush1.msra.mxu0 0.0
  %3431 = vmatprep.subr.mxu0 0.0
  %3432 = vmatpush1.msra.mxu0 0.0
  %3433 = vmatprep.subr.mxu0 0.0
  %3434 = vmatpush1.msra.mxu0 0.0
  %3435 = vmatprep.mubr.f32.mxu0 0.0
  %3436 = vmatmul.mubr.f32.gmra.mrb[0].mxu0 %v3298
  %v3437 = vpop.f32.mrb[0].mxu0
  %v3438 = vadd.f32 0.0, %v3437
  %v3439 = vpop.f32.mrb[0].mxu0
  %v3440 = vadd.f32 0.0, %v3439
  %3441 = vdwg.mxu0
  %3446 = vrot.lane.b32.xlu0 %v3367, 17
  %v3447 = vpop.permute.xlu0 %3446
  %3448 = vrot.lane.b32.xlu0 %v3369, 17
  %v3449 = vpop.permute.xlu0 %3448
  %3450 = vrot.lane.b32.xlu0 %v3438, 17
  %v3451 = vpop.permute.xlu0 %3450
  %3452 = vrot.lane.b32.xlu0 %v3440, 17
  %v3453 = vpop.permute.xlu0 %3452
  %v3454 = vsel %vm547, %v3447, %v3449
  %v3455 = vsel %vm547, %v3449, %v3451
  %v3456 = vsel %vm547, %v3451, %v3453
  %v3461 = vsel %vm547, 0.0, %v3447
  %v3462 = vmul.f32 %v3461, %v559
  %v3463 = vmul.f32 %v3454, %v563
  %v3464 = vmul.f32 %v3455, %v567
  %v3465 = vmul.f32 %v3456, %v571
  %s3466 = scalar_lea.vmem %s8, 8
  %v3467 = vld [vmem:[%s3466] sm:$0xff]
  %v3469 = vsel %vm3296, %v3467, 0
  %3471 = vmatprep.subr.mxu0 %v3292
  %3472 = vmatpush1.msra.mxu0 %v3291
  %3473 = vmatprep.subr.mxu0 0.0
  %3474 = vmatpush1.msra.mxu0 0.0
  %3475 = vmatprep.subr.mxu0 0.0
  %3476 = vmatpush1.msra.mxu0 0.0
  %3477 = vmatprep.subr.mxu0 0.0
  %3478 = vmatpush1.msra.mxu0 0.0
  %3479 = vmatprep.subr.mxu0 0.0
  %3480 = vmatpush1.msra.mxu0 0.0
  %3481 = vmatprep.subr.mxu0 0.0
  %3482 = vmatpush1.msra.mxu0 0.0
  %3483 = vmatprep.subr.mxu0 0.0
  %3484 = vmatpush1.msra.mxu0 0.0
  %3485 = vmatprep.subr.mxu0 0.0
  %3486 = vmatpush1.msra.mxu0 0.0
  %3487 = vmatprep.subr.mxu0 0.0
  %3488 = vmatpush1.msra.mxu0 0.0
  %3489 = vmatprep.subr.mxu0 0.0
  %3490 = vmatpush1.msra.mxu0 0.0
  %3491 = vmatprep.subr.mxu0 0.0
  %3492 = vmatpush1.msra.mxu0 0.0
  %3493 = vmatprep.subr.mxu0 0.0
  %3494 = vmatpush1.msra.mxu0 0.0
  %3495 = vmatprep.subr.mxu0 0.0
  %3496 = vmatpush1.msra.mxu0 0.0
  %3497 = vmatprep.subr.mxu0 0.0
  %3498 = vmatpush1.msra.mxu0 0.0
  %3499 = vmatprep.subr.mxu0 0.0
  %3500 = vmatpush1.msra.mxu0 0.0
  %3501 = vmatprep.subr.mxu0 0.0
  %3502 = vmatpush1.msra.mxu0 0.0
  %3503 = vmatprep.subr.mxu0 0.0
  %3504 = vmatpush1.msra.mxu0 0.0
  %3505 = vmatprep.subr.mxu0 0.0
  %3506 = vmatpush1.msra.mxu0 0.0
  %3507 = vmatprep.subr.mxu0 0.0
  %3508 = vmatpush1.msra.mxu0 0.0
  %3509 = vmatprep.subr.mxu0 0.0
  %3510 = vmatpush1.msra.mxu0 0.0
  %3511 = vmatprep.subr.mxu0 0.0
  %3512 = vmatpush1.msra.mxu0 0.0
  %3513 = vmatprep.subr.mxu0 0.0
  %3514 = vmatpush1.msra.mxu0 0.0
  %3515 = vmatprep.subr.mxu0 0.0
  %3516 = vmatpush1.msra.mxu0 0.0
  %3517 = vmatprep.subr.mxu0 0.0
  %3518 = vmatpush1.msra.mxu0 0.0
  %3519 = vmatprep.subr.mxu0 0.0
  %3520 = vmatpush1.msra.mxu0 0.0
  %3521 = vmatprep.subr.mxu0 0.0
  %3522 = vmatpush1.msra.mxu0 0.0
  %3523 = vmatprep.subr.mxu0 0.0
  %3524 = vmatpush1.msra.mxu0 0.0
  %3525 = vmatprep.subr.mxu0 0.0
  %3526 = vmatpush1.msra.mxu0 0.0
  %3527 = vmatprep.subr.mxu0 0.0
  %3528 = vmatpush1.msra.mxu0 0.0
  %3529 = vmatprep.subr.mxu0 0.0
  %3530 = vmatpush1.msra.mxu0 0.0
  %3531 = vmatprep.subr.mxu0 0.0
  %3532 = vmatpush1.msra.mxu0 0.0
  %3533 = vmatprep.subr.mxu0 0.0
  %3534 = vmatpush1.msra.mxu0 0.0
  %3535 = vmatprep.mubr.f32.mxu0 0.0
  %3536 = vmatmul.mubr.f32.gmra.mrb[0].mxu0 %v3469
  %v3537 = vpop.f32.mrb[0].mxu0
  %v3538 = vadd.f32 0.0, %v3537
  %v3539 = vpop.f32.mrb[0].mxu0
  %v3540 = vadd.f32 0.0, %v3539
  %3541 = vdwg.mxu0
  %3542 = vmatprep.subr.mxu0 %v3294
  %3543 = vmatpush1.msra.mxu0 %v3293
  %3544 = vmatprep.subr.mxu0 0.0
  %3545 = vmatpush1.msra.mxu0 0.0
  %3546 = vmatprep.subr.mxu0 0.0
  %3547 = vmatpush1.msra.mxu0 0.0
  %3548 = vmatprep.subr.mxu0 0.0
  %3549 = vmatpush1.msra.mxu0 0.0
  %3550 = vmatprep.subr.mxu0 0.0
  %3551 = vmatpush1.msra.mxu0 0.0
  %3552 = vmatprep.subr.mxu0 0.0
  %3553 = vmatpush1.msra.mxu0 0.0
  %3554 = vmatprep.subr.mxu0 0.0
  %3555 = vmatpush1.msra.mxu0 0.0
  %3556 = vmatprep.subr.mxu0 0.0
  %3557 = vmatpush1.msra.mxu0 0.0
  %3558 = vmatprep.subr.mxu0 0.0
  %3559 = vmatpush1.msra.mxu0 0.0
  %3560 = vmatprep.subr.mxu0 0.0
  %3561 = vmatpush1.msra.mxu0 0.0
  %3562 = vmatprep.subr.mxu0 0.0
  %3563 = vmatpush1.msra.mxu0 0.0
  %3564 = vmatprep.subr.mxu0 0.0
  %3565 = vmatpush1.msra.mxu0 0.0
  %3566 = vmatprep.subr.mxu0 0.0
  %3567 = vmatpush1.msra.mxu0 0.0
  %3568 = vmatprep.subr.mxu0 0.0
  %3569 = vmatpush1.msra.mxu0 0.0
  %3570 = vmatprep.subr.mxu0 0.0
  %3571 = vmatpush1.msra.mxu0 0.0
  %3572 = vmatprep.subr.mxu0 0.0
  %3573 = vmatpush1.msra.mxu0 0.0
  %3574 = vmatprep.subr.mxu0 0.0
  %3575 = vmatpush1.msra.mxu0 0.0
  %3576 = vmatprep.subr.mxu0 0.0
  %3577 = vmatpush1.msra.mxu0 0.0
  %3578 = vmatprep.subr.mxu0 0.0
  %3579 = vmatpush1.msra.mxu0 0.0
  %3580 = vmatprep.subr.mxu0 0.0
  %3581 = vmatpush1.msra.mxu0 0.0
  %3582 = vmatprep.subr.mxu0 0.0
  %3583 = vmatpush1.msra.mxu0 0.0
  %3584 = vmatprep.subr.mxu0 0.0
  %3585 = vmatpush1.msra.mxu0 0.0
  %3586 = vmatprep.subr.mxu0 0.0
  %3587 = vmatpush1.msra.mxu0 0.0
  %3588 = vmatprep.subr.mxu0 0.0
  %3589 = vmatpush1.msra.mxu0 0.0
  %3590 = vmatprep.subr.mxu0 0.0
  %3591 = vmatpush1.msra.mxu0 0.0
  %3592 = vmatprep.subr.mxu0 0.0
  %3593 = vmatpush1.msra.mxu0 0.0
  %3594 = vmatprep.subr.mxu0 0.0
  %3595 = vmatpush1.msra.mxu0 0.0
  %3596 = vmatprep.subr.mxu0 0.0
  %3597 = vmatpush1.msra.mxu0 0.0
  %3598 = vmatprep.subr.mxu0 0.0
  %3599 = vmatpush1.msra.mxu0 0.0
  %3600 = vmatprep.subr.mxu0 0.0
  %3601 = vmatpush1.msra.mxu0 0.0
  %3602 = vmatprep.subr.mxu0 0.0
  %3603 = vmatpush1.msra.mxu0 0.0
  %3604 = vmatprep.subr.mxu0 0.0
  %3605 = vmatpush1.msra.mxu0 0.0
  %3606 = vmatprep.mubr.f32.mxu0 0.0
  %3607 = vmatmul.mubr.f32.gmra.mrb[0].mxu0 %v3469
  %v3608 = vpop.f32.mrb[0].mxu0
  %v3609 = vadd.f32 0.0, %v3608
  %v3610 = vpop.f32.mrb[0].mxu0
  %v3611 = vadd.f32 0.0, %v3610
  %3612 = vdwg.mxu0
  %3617 = vrot.lane.b32.xlu0 %v3538, 16
  %v3618 = vpop.permute.xlu0 %3617
  %3619 = vrot.lane.b32.xlu0 %v3540, 16
  %v3620 = vpop.permute.xlu0 %3619
  %3621 = vrot.lane.b32.xlu0 %v3609, 16
  %v3622 = vpop.permute.xlu0 %3621
  %3623 = vrot.lane.b32.xlu0 %v3611, 16
  %v3624 = vpop.permute.xlu0 %3623
  %v3625 = vsel %vm882, %v3618, %v3620
  %v3626 = vsel %vm882, %v3620, %v3622
  %v3627 = vsel %vm882, %v3622, %v3624
  %v3632 = vsel %vm882, 0.0, %v3618
  %v3633 = vmul.f32 %v3632, %v894
  %v3634 = vmul.f32 %v3625, %v898
  %v3635 = vmul.f32 %v3626, %v902
  %v3636 = vmul.f32 %v3627, %v906
  %v3637 = vadd.f32 %v3462, %v3633
  %v3638 = vadd.f32 %v3463, %v3634
  %v3639 = vadd.f32 %v3464, %v3635
  %v3640 = vadd.f32 %v3465, %v3636
  %s3641 = scalar_lea.vmem %s8, 16
  %v3642 = vld [vmem:[%s3641] sm:$0xff]
  %v3644 = vsel %vm3296, %v3642, 0
  %3646 = vmatprep.subr.mxu0 %v3292
  %3647 = vmatpush1.msra.mxu0 %v3291
  %3648 = vmatprep.subr.mxu0 0.0
  %3649 = vmatpush1.msra.mxu0 0.0
  %3650 = vmatprep.subr.mxu0 0.0
  %3651 = vmatpush1.msra.mxu0 0.0
  %3652 = vmatprep.subr.mxu0 0.0
  %3653 = vmatpush1.msra.mxu0 0.0
  %3654 = vmatprep.subr.mxu0 0.0
  %3655 = vmatpush1.msra.mxu0 0.0
  %3656 = vmatprep.subr.mxu0 0.0
  %3657 = vmatpush1.msra.mxu0 0.0
  %3658 = vmatprep.subr.mxu0 0.0
  %3659 = vmatpush1.msra.mxu0 0.0
  %3660 = vmatprep.subr.mxu0 0.0
  %3661 = vmatpush1.msra.mxu0 0.0
  %3662 = vmatprep.subr.mxu0 0.0
  %3663 = vmatpush1.msra.mxu0 0.0
  %3664 = vmatprep.subr.mxu0 0.0
  %3665 = vmatpush1.msra.mxu0 0.0
  %3666 = vmatprep.subr.mxu0 0.0
  %3667 = vmatpush1.msra.mxu0 0.0
  %3668 = vmatprep.subr.mxu0 0.0
  %3669 = vmatpush1.msra.mxu0 0.0
  %3670 = vmatprep.subr.mxu0 0.0
  %3671 = vmatpush1.msra.mxu0 0.0
  %3672 = vmatprep.subr.mxu0 0.0
  %3673 = vmatpush1.msra.mxu0 0.0
  %3674 = vmatprep.subr.mxu0 0.0
  %3675 = vmatpush1.msra.mxu0 0.0
  %3676 = vmatprep.subr.mxu0 0.0
  %3677 = vmatpush1.msra.mxu0 0.0
  %3678 = vmatprep.subr.mxu0 0.0
  %3679 = vmatpush1.msra.mxu0 0.0
  %3680 = vmatprep.subr.mxu0 0.0
  %3681 = vmatpush1.msra.mxu0 0.0
  %3682 = vmatprep.subr.mxu0 0.0
  %3683 = vmatpush1.msra.mxu0 0.0
  %3684 = vmatprep.subr.mxu0 0.0
  %3685 = vmatpush1.msra.mxu0 0.0
  %3686 = vmatprep.subr.mxu0 0.0
  %3687 = vmatpush1.msra.mxu0 0.0
  %3688 = vmatprep.subr.mxu0 0.0
  %3689 = vmatpush1.msra.mxu0 0.0
  %3690 = vmatprep.subr.mxu0 0.0
  %3691 = vmatpush1.msra.mxu0 0.0
  %3692 = vmatprep.subr.mxu0 0.0
  %3693 = vmatpush1.msra.mxu0 0.0
  %3694 = vmatprep.subr.mxu0 0.0
  %3695 = vmatpush1.msra.mxu0 0.0
  %3696 = vmatprep.subr.mxu0 0.0
  %3697 = vmatpush1.msra.mxu0 0.0
  %3698 = vmatprep.subr.mxu0 0.0
  %3699 = vmatpush1.msra.mxu0 0.0
  %3700 = vmatprep.subr.mxu0 0.0
  %3701 = vmatpush1.msra.mxu0 0.0
  %3702 = vmatprep.subr.mxu0 0.0
  %3703 = vmatpush1.msra.mxu0 0.0
  %3704 = vmatprep.subr.mxu0 0.0
  %3705 = vmatpush1.msra.mxu0 0.0
  %3706 = vmatprep.subr.mxu0 0.0
  %3707 = vmatpush1.msra.mxu0 0.0
  %3708 = vmatprep.subr.mxu0 0.0
  %3709 = vmatpush1.msra.mxu0 0.0
  %3710 = vmatprep.mubr.f32.mxu0 0.0
  %3711 = vmatmul.mubr.f32.gmra.mrb[0].mxu0 %v3644
  %v3712 = vpop.f32.mrb[0].mxu0
  %v3713 = vadd.f32 0.0, %v3712
  %v3714 = vpop.f32.mrb[0].mxu0
  %v3715 = vadd.f32 0.0, %v3714
  %3716 = vdwg.mxu0
  %3717 = vmatprep.subr.mxu0 %v3294
  %3718 = vmatpush1.msra.mxu0 %v3293
  %3719 = vmatprep.subr.mxu0 0.0
  %3720 = vmatpush1.msra.mxu0 0.0
  %3721 = vmatprep.subr.mxu0 0.0
  %3722 = vmatpush1.msra.mxu0 0.0
  %3723 = vmatprep.subr.mxu0 0.0
  %3724 = vmatpush1.msra.mxu0 0.0
  %3725 = vmatprep.subr.mxu0 0.0
  %3726 = vmatpush1.msra.mxu0 0.0
  %3727 = vmatprep.subr.mxu0 0.0
  %3728 = vmatpush1.msra.mxu0 0.0
  %3729 = vmatprep.subr.mxu0 0.0
  %3730 = vmatpush1.msra.mxu0 0.0
  %3731 = vmatprep.subr.mxu0 0.0
  %3732 = vmatpush1.msra.mxu0 0.0
  %3733 = vmatprep.subr.mxu0 0.0
  %3734 = vmatpush1.msra.mxu0 0.0
  %3735 = vmatprep.subr.mxu0 0.0
  %3736 = vmatpush1.msra.mxu0 0.0
  %3737 = vmatprep.subr.mxu0 0.0
  %3738 = vmatpush1.msra.mxu0 0.0
  %3739 = vmatprep.subr.mxu0 0.0
  %3740 = vmatpush1.msra.mxu0 0.0
  %3741 = vmatprep.subr.mxu0 0.0
  %3742 = vmatpush1.msra.mxu0 0.0
  %3743 = vmatprep.subr.mxu0 0.0
  %3744 = vmatpush1.msra.mxu0 0.0
  %3745 = vmatprep.subr.mxu0 0.0
  %3746 = vmatpush1.msra.mxu0 0.0
  %3747 = vmatprep.subr.mxu0 0.0
  %3748 = vmatpush1.msra.mxu0 0.0
  %3749 = vmatprep.subr.mxu0 0.0
  %3750 = vmatpush1.msra.mxu0 0.0
  %3751 = vmatprep.subr.mxu0 0.0
  %3752 = vmatpush1.msra.mxu0 0.0
  %3753 = vmatprep.subr.mxu0 0.0
  %3754 = vmatpush1.msra.mxu0 0.0
  %3755 = vmatprep.subr.mxu0 0.0
  %3756 = vmatpush1.msra.mxu0 0.0
  %3757 = vmatprep.subr.mxu0 0.0
  %3758 = vmatpush1.msra.mxu0 0.0
  %3759 = vmatprep.subr.mxu0 0.0
  %3760 = vmatpush1.msra.mxu0 0.0
  %3761 = vmatprep.subr.mxu0 0.0
  %3762 = vmatpush1.msra.mxu0 0.0
  %3763 = vmatprep.subr.mxu0 0.0
  %3764 = vmatpush1.msra.mxu0 0.0
  %3765 = vmatprep.subr.mxu0 0.0
  %3766 = vmatpush1.msra.mxu0 0.0
  %3767 = vmatprep.subr.mxu0 0.0
  %3768 = vmatpush1.msra.mxu0 0.0
  %3769 = vmatprep.subr.mxu0 0.0
  %3770 = vmatpush1.msra.mxu0 0.0
  %3771 = vmatprep.subr.mxu0 0.0
  %3772 = vmatpush1.msra.mxu0 0.0
  %3773 = vmatprep.subr.mxu0 0.0
  %3774 = vmatpush1.msra.mxu0 0.0
  %3775 = vmatprep.subr.mxu0 0.0
  %3776 = vmatpush1.msra.mxu0 0.0
  %3777 = vmatprep.subr.mxu0 0.0
  %3778 = vmatpush1.msra.mxu0 0.0
  %3779 = vmatprep.subr.mxu0 0.0
  %3780 = vmatpush1.msra.mxu0 0.0
  %3781 = vmatprep.mubr.f32.mxu0 0.0
  %3782 = vmatmul.mubr.f32.gmra.mrb[0].mxu0 %v3644
  %v3783 = vpop.f32.mrb[0].mxu0
  %v3784 = vadd.f32 0.0, %v3783
  %v3785 = vpop.f32.mrb[0].mxu0
  %v3786 = vadd.f32 0.0, %v3785
  %3787 = vdwg.mxu0
  %3792 = vrot.lane.b32.xlu0 %v3713, 15
  %v3793 = vpop.permute.xlu0 %3792
  %3794 = vrot.lane.b32.xlu0 %v3715, 15
  %v3795 = vpop.permute.xlu0 %3794
  %3796 = vrot.lane.b32.xlu0 %v3784, 15
  %v3797 = vpop.permute.xlu0 %3796
  %3798 = vrot.lane.b32.xlu0 %v3786, 15
  %v3799 = vpop.permute.xlu0 %3798
  %v3800 = vsel %vm1221, %v3793, %v3795
  %v3801 = vsel %vm1221, %v3795, %v3797
  %v3802 = vsel %vm1221, %v3797, %v3799
  %v3807 = vsel %vm1221, 0.0, %v3793
  %v3808 = vmul.f32 %v3807, %v1233
  %v3809 = vmul.f32 %v3800, %v1237
  %v3810 = vmul.f32 %v3801, %v1241
  %v3811 = vmul.f32 %v3802, %v1245
  %v3812 = vadd.f32 %v3637, %v3808
  %v3813 = vadd.f32 %v3638, %v3809
  %v3814 = vadd.f32 %v3639, %v3810
  %v3815 = vadd.f32 %v3640, %v3811
  %s3816 = scalar_lea.vmem %s8, 24
  %v3817 = vld [vmem:[%s3816] sm:$0xff]
  %v3819 = vsel %vm3296, %v3817, 0
  %3821 = vmatprep.subr.mxu0 %v3292
  %3822 = vmatpush1.msra.mxu0 %v3291
  %3823 = vmatprep.subr.mxu0 0.0
  %3824 = vmatpush1.msra.mxu0 0.0
  %3825 = vmatprep.subr.mxu0 0.0
  %3826 = vmatpush1.msra.mxu0 0.0
  %3827 = vmatprep.subr.mxu0 0.0
  %3828 = vmatpush1.msra.mxu0 0.0
  %3829 = vmatprep.subr.mxu0 0.0
  %3830 = vmatpush1.msra.mxu0 0.0
  %3831 = vmatprep.subr.mxu0 0.0
  %3832 = vmatpush1.msra.mxu0 0.0
  %3833 = vmatprep.subr.mxu0 0.0
  %3834 = vmatpush1.msra.mxu0 0.0
  %3835 = vmatprep.subr.mxu0 0.0
  %3836 = vmatpush1.msra.mxu0 0.0
  %3837 = vmatprep.subr.mxu0 0.0
  %3838 = vmatpush1.msra.mxu0 0.0
  %3839 = vmatprep.subr.mxu0 0.0
  %3840 = vmatpush1.msra.mxu0 0.0
  %3841 = vmatprep.subr.mxu0 0.0
  %3842 = vmatpush1.msra.mxu0 0.0
  %3843 = vmatprep.subr.mxu0 0.0
  %3844 = vmatpush1.msra.mxu0 0.0
  %3845 = vmatprep.subr.mxu0 0.0
  %3846 = vmatpush1.msra.mxu0 0.0
  %3847 = vmatprep.subr.mxu0 0.0
  %3848 = vmatpush1.msra.mxu0 0.0
  %3849 = vmatprep.subr.mxu0 0.0
  %3850 = vmatpush1.msra.mxu0 0.0
  %3851 = vmatprep.subr.mxu0 0.0
  %3852 = vmatpush1.msra.mxu0 0.0
  %3853 = vmatprep.subr.mxu0 0.0
  %3854 = vmatpush1.msra.mxu0 0.0
  %3855 = vmatprep.subr.mxu0 0.0
  %3856 = vmatpush1.msra.mxu0 0.0
  %3857 = vmatprep.subr.mxu0 0.0
  %3858 = vmatpush1.msra.mxu0 0.0
  %3859 = vmatprep.subr.mxu0 0.0
  %3860 = vmatpush1.msra.mxu0 0.0
  %3861 = vmatprep.subr.mxu0 0.0
  %3862 = vmatpush1.msra.mxu0 0.0
  %3863 = vmatprep.subr.mxu0 0.0
  %3864 = vmatpush1.msra.mxu0 0.0
  %3865 = vmatprep.subr.mxu0 0.0
  %3866 = vmatpush1.msra.mxu0 0.0
  %3867 = vmatprep.subr.mxu0 0.0
  %3868 = vmatpush1.msra.mxu0 0.0
  %3869 = vmatprep.subr.mxu0 0.0
  %3870 = vmatpush1.msra.mxu0 0.0
  %3871 = vmatprep.subr.mxu0 0.0
  %3872 = vmatpush1.msra.mxu0 0.0
  %3873 = vmatprep.subr.mxu0 0.0
  %3874 = vmatpush1.msra.mxu0 0.0
  %3875 = vmatprep.subr.mxu0 0.0
  %3876 = vmatpush1.msra.mxu0 0.0
  %3877 = vmatprep.subr.mxu0 0.0
  %3878 = vmatpush1.msra.mxu0 0.0
  %3879 = vmatprep.subr.mxu0 0.0
  %3880 = vmatpush1.msra.mxu0 0.0
  %3881 = vmatprep.subr.mxu0 0.0
  %3882 = vmatpush1.msra.mxu0 0.0
  %3883 = vmatprep.subr.mxu0 0.0
  %3884 = vmatpush1.msra.mxu0 0.0
  %3885 = vmatprep.mubr.f32.mxu0 0.0
  %3886 = vmatmul.mubr.f32.gmra.mrb[0].mxu0 %v3819
  %v3887 = vpop.f32.mrb[0].mxu0
  %v3888 = vadd.f32 0.0, %v3887
  %v3889 = vpop.f32.mrb[0].mxu0
  %v3890 = vadd.f32 0.0, %v3889
  %3891 = vdwg.mxu0
  %3892 = vmatprep.subr.mxu0 %v3294
  %3893 = vmatpush1.msra.mxu0 %v3293
  %3894 = vmatprep.subr.mxu0 0.0
  %3895 = vmatpush1.msra.mxu0 0.0
  %3896 = vmatprep.subr.mxu0 0.0
  %3897 = vmatpush1.msra.mxu0 0.0
  %3898 = vmatprep.subr.mxu0 0.0
  %3899 = vmatpush1.msra.mxu0 0.0
  %3900 = vmatprep.subr.mxu0 0.0
  %3901 = vmatpush1.msra.mxu0 0.0
  %3902 = vmatprep.subr.mxu0 0.0
  %3903 = vmatpush1.msra.mxu0 0.0
  %3904 = vmatprep.subr.mxu0 0.0
  %3905 = vmatpush1.msra.mxu0 0.0
  %3906 = vmatprep.subr.mxu0 0.0
  %3907 = vmatpush1.msra.mxu0 0.0
  %3908 = vmatprep.subr.mxu0 0.0
  %3909 = vmatpush1.msra.mxu0 0.0
  %3910 = vmatprep.subr.mxu0 0.0
  %3911 = vmatpush1.msra.mxu0 0.0
  %3912 = vmatprep.subr.mxu0 0.0
  %3913 = vmatpush1.msra.mxu0 0.0
  %3914 = vmatprep.subr.mxu0 0.0
  %3915 = vmatpush1.msra.mxu0 0.0
  %3916 = vmatprep.subr.mxu0 0.0
  %3917 = vmatpush1.msra.mxu0 0.0
  %3918 = vmatprep.subr.mxu0 0.0
  %3919 = vmatpush1.msra.mxu0 0.0
  %3920 = vmatprep.subr.mxu0 0.0
  %3921 = vmatpush1.msra.mxu0 0.0
  %3922 = vmatprep.subr.mxu0 0.0
  %3923 = vmatpush1.msra.mxu0 0.0
  %3924 = vmatprep.subr.mxu0 0.0
  %3925 = vmatpush1.msra.mxu0 0.0
  %3926 = vmatprep.subr.mxu0 0.0
  %3927 = vmatpush1.msra.mxu0 0.0
  %3928 = vmatprep.subr.mxu0 0.0
  %3929 = vmatpush1.msra.mxu0 0.0
  %3930 = vmatprep.subr.mxu0 0.0
  %3931 = vmatpush1.msra.mxu0 0.0
  %3932 = vmatprep.subr.mxu0 0.0
  %3933 = vmatpush1.msra.mxu0 0.0
  %3934 = vmatprep.subr.mxu0 0.0
  %3935 = vmatpush1.msra.mxu0 0.0
  %3936 = vmatprep.subr.mxu0 0.0
  %3937 = vmatpush1.msra.mxu0 0.0
  %3938 = vmatprep.subr.mxu0 0.0
  %3939 = vmatpush1.msra.mxu0 0.0
  %3940 = vmatprep.subr.mxu0 0.0
  %3941 = vmatpush1.msra.mxu0 0.0
  %3942 = vmatprep.subr.mxu0 0.0
  %3943 = vmatpush1.msra.mxu0 0.0
  %3944 = vmatprep.subr.mxu0 0.0
  %3945 = vmatpush1.msra.mxu0 0.0
  %3946 = vmatprep.subr.mxu0 0.0
  %3947 = vmatpush1.msra.mxu0 0.0
  %3948 = vmatprep.subr.mxu0 0.0
  %3949 = vmatpush1.msra.mxu0 0.0
  %3950 = vmatprep.subr.mxu0 0.0
  %3951 = vmatpush1.msra.mxu0 0.0
  %3952 = vmatprep.subr.mxu0 0.0
  %3953 = vmatpush1.msra.mxu0 0.0
  %3954 = vmatprep.subr.mxu0 0.0
  %3955 = vmatpush1.msra.mxu0 0.0
  %3956 = vmatprep.mubr.f32.mxu0 0.0
  %3957 = vmatmul.mubr.f32.gmra.mrb[0].mxu0 %v3819
  %v3958 = vpop.f32.mrb[0].mxu0
  %v3959 = vadd.f32 0.0, %v3958
  %v3960 = vpop.f32.mrb[0].mxu0
  %v3961 = vadd.f32 0.0, %v3960
  %3962 = vdwg.mxu0
  %3967 = vrot.lane.b32.xlu0 %v3888, 1
  %v3968 = vpop.permute.xlu0 %3967
  %3969 = vrot.lane.b32.xlu0 %v3890, 1
  %v3970 = vpop.permute.xlu0 %3969
  %3971 = vrot.lane.b32.xlu0 %v3959, 1
  %v3972 = vpop.permute.xlu0 %3971
  %3973 = vrot.lane.b32.xlu0 %v3961, 1
  %v3974 = vpop.permute.xlu0 %3973
  %v3975 = vsel %vm1560, %v3968, %v3970
  %v3976 = vsel %vm1560, %v3970, %v3972
  %v3977 = vsel %vm1560, %v3972, %v3974
  %v3982 = vsel %vm1560, 0.0, %v3968
  %v3983 = vmul.f32 %v3982, %v1572
  %v3984 = vmul.f32 %v3975, %v1576
  %v3985 = vmul.f32 %v3976, %v1580
  %v3986 = vmul.f32 %v3977, %v1584
  %v3987 = vadd.f32 %v3812, %v3983
  %v3988 = vadd.f32 %v3813, %v3984
  %v3989 = vadd.f32 %v3814, %v3985
  %v3990 = vadd.f32 %v3815, %v3986
  %s3991 = scalar_lea.vmem %s8, 32
  %v3992 = vld [vmem:[%s3991] sm:$0xff]
  %v3994 = vsel %vm3296, %v3992, 0
  %3996 = vmatprep.subr.mxu0 %v3292
  %3997 = vmatpush1.msra.mxu0 %v3291
  %3998 = vmatprep.subr.mxu0 0.0
  %3999 = vmatpush1.msra.mxu0 0.0
  %4000 = vmatprep.subr.mxu0 0.0
  %4001 = vmatpush1.msra.mxu0 0.0
  %4002 = vmatprep.subr.mxu0 0.0
  %4003 = vmatpush1.msra.mxu0 0.0
  %4004 = vmatprep.subr.mxu0 0.0
  %4005 = vmatpush1.msra.mxu0 0.0
  %4006 = vmatprep.subr.mxu0 0.0
  %4007 = vmatpush1.msra.mxu0 0.0
  %4008 = vmatprep.subr.mxu0 0.0
  %4009 = vmatpush1.msra.mxu0 0.0
  %4010 = vmatprep.subr.mxu0 0.0
  %4011 = vmatpush1.msra.mxu0 0.0
  %4012 = vmatprep.subr.mxu0 0.0
  %4013 = vmatpush1.msra.mxu0 0.0
  %4014 = vmatprep.subr.mxu0 0.0
  %4015 = vmatpush1.msra.mxu0 0.0
  %4016 = vmatprep.subr.mxu0 0.0
  %4017 = vmatpush1.msra.mxu0 0.0
  %4018 = vmatprep.subr.mxu0 0.0
  %4019 = vmatpush1.msra.mxu0 0.0
  %4020 = vmatprep.subr.mxu0 0.0
  %4021 = vmatpush1.msra.mxu0 0.0
  %4022 = vmatprep.subr.mxu0 0.0
  %4023 = vmatpush1.msra.mxu0 0.0
  %4024 = vmatprep.subr.mxu0 0.0
  %4025 = vmatpush1.msra.mxu0 0.0
  %4026 = vmatprep.subr.mxu0 0.0
  %4027 = vmatpush1.msra.mxu0 0.0
  %4028 = vmatprep.subr.mxu0 0.0
  %4029 = vmatpush1.msra.mxu0 0.0
  %4030 = vmatprep.subr.mxu0 0.0
  %4031 = vmatpush1.msra.mxu0 0.0
  %4032 = vmatprep.subr.mxu0 0.0
  %4033 = vmatpush1.msra.mxu0 0.0
  %4034 = vmatprep.subr.mxu0 0.0
  %4035 = vmatpush1.msra.mxu0 0.0
  %4036 = vmatprep.subr.mxu0 0.0
  %4037 = vmatpush1.msra.mxu0 0.0
  %4038 = vmatprep.subr.mxu0 0.0
  %4039 = vmatpush1.msra.mxu0 0.0
  %4040 = vmatprep.subr.mxu0 0.0
  %4041 = vmatpush1.msra.mxu0 0.0
  %4042 = vmatprep.subr.mxu0 0.0
  %4043 = vmatpush1.msra.mxu0 0.0
  %4044 = vmatprep.subr.mxu0 0.0
  %4045 = vmatpush1.msra.mxu0 0.0
  %4046 = vmatprep.subr.mxu0 0.0
  %4047 = vmatpush1.msra.mxu0 0.0
  %4048 = vmatprep.subr.mxu0 0.0
  %4049 = vmatpush1.msra.mxu0 0.0
  %4050 = vmatprep.subr.mxu0 0.0
  %4051 = vmatpush1.msra.mxu0 0.0
  %4052 = vmatprep.subr.mxu0 0.0
  %4053 = vmatpush1.msra.mxu0 0.0
  %4054 = vmatprep.subr.mxu0 0.0
  %4055 = vmatpush1.msra.mxu0 0.0
  %4056 = vmatprep.subr.mxu0 0.0
  %4057 = vmatpush1.msra.mxu0 0.0
  %4058 = vmatprep.subr.mxu0 0.0
  %4059 = vmatpush1.msra.mxu0 0.0
  %4060 = vmatprep.mubr.f32.mxu0 0.0
  %4061 = vmatmul.mubr.f32.gmra.mrb[0].mxu0 %v3994
  %v4062 = vpop.f32.mrb[0].mxu0
  %v4063 = vadd.f32 0.0, %v4062
  %v4064 = vpop.f32.mrb[0].mxu0
  %v4065 = vadd.f32 0.0, %v4064
  %4066 = vdwg.mxu0
  %4067 = vmatprep.subr.mxu0 %v3294
  %4068 = vmatpush1.msra.mxu0 %v3293
  %4069 = vmatprep.subr.mxu0 0.0
  %4070 = vmatpush1.msra.mxu0 0.0
  %4071 = vmatprep.subr.mxu0 0.0
  %4072 = vmatpush1.msra.mxu0 0.0
  %4073 = vmatprep.subr.mxu0 0.0
  %4074 = vmatpush1.msra.mxu0 0.0
  %4075 = vmatprep.subr.mxu0 0.0
  %4076 = vmatpush1.msra.mxu0 0.0
  %4077 = vmatprep.subr.mxu0 0.0
  %4078 = vmatpush1.msra.mxu0 0.0
  %4079 = vmatprep.subr.mxu0 0.0
  %4080 = vmatpush1.msra.mxu0 0.0
  %4081 = vmatprep.subr.mxu0 0.0
  %4082 = vmatpush1.msra.mxu0 0.0
  %4083 = vmatprep.subr.mxu0 0.0
  %4084 = vmatpush1.msra.mxu0 0.0
  %4085 = vmatprep.subr.mxu0 0.0
  %4086 = vmatpush1.msra.mxu0 0.0
  %4087 = vmatprep.subr.mxu0 0.0
  %4088 = vmatpush1.msra.mxu0 0.0
  %4089 = vmatprep.subr.mxu0 0.0
  %4090 = vmatpush1.msra.mxu0 0.0
  %4091 = vmatprep.subr.mxu0 0.0
  %4092 = vmatpush1.msra.mxu0 0.0
  %4093 = vmatprep.subr.mxu0 0.0
  %4094 = vmatpush1.msra.mxu0 0.0
  %4095 = vmatprep.subr.mxu0 0.0
  %4096 = vmatpush1.msra.mxu0 0.0
  %4097 = vmatprep.subr.mxu0 0.0
  %4098 = vmatpush1.msra.mxu0 0.0
  %4099 = vmatprep.subr.mxu0 0.0
  %4100 = vmatpush1.msra.mxu0 0.0
  %4101 = vmatprep.subr.mxu0 0.0
  %4102 = vmatpush1.msra.mxu0 0.0
  %4103 = vmatprep.subr.mxu0 0.0
  %4104 = vmatpush1.msra.mxu0 0.0
  %4105 = vmatprep.subr.mxu0 0.0
  %4106 = vmatpush1.msra.mxu0 0.0
  %4107 = vmatprep.subr.mxu0 0.0
  %4108 = vmatpush1.msra.mxu0 0.0
  %4109 = vmatprep.subr.mxu0 0.0
  %4110 = vmatpush1.msra.mxu0 0.0
  %4111 = vmatprep.subr.mxu0 0.0
  %4112 = vmatpush1.msra.mxu0 0.0
  %4113 = vmatprep.subr.mxu0 0.0
  %4114 = vmatpush1.msra.mxu0 0.0
  %4115 = vmatprep.subr.mxu0 0.0
  %4116 = vmatpush1.msra.mxu0 0.0
  %4117 = vmatprep.subr.mxu0 0.0
  %4118 = vmatpush1.msra.mxu0 0.0
  %4119 = vmatprep.subr.mxu0 0.0
  %4120 = vmatpush1.msra.mxu0 0.0
  %4121 = vmatprep.subr.mxu0 0.0
  %4122 = vmatpush1.msra.mxu0 0.0
  %4123 = vmatprep.subr.mxu0 0.0
  %4124 = vmatpush1.msra.mxu0 0.0
  %4125 = vmatprep.subr.mxu0 0.0
  %4126 = vmatpush1.msra.mxu0 0.0
  %4127 = vmatprep.subr.mxu0 0.0
  %4128 = vmatpush1.msra.mxu0 0.0
  %4129 = vmatprep.subr.mxu0 0.0
  %4130 = vmatpush1.msra.mxu0 0.0
  %4131 = vmatprep.mubr.f32.mxu0 0.0
  %4132 = vmatmul.mubr.f32.gmra.mrb[0].mxu0 %v3994
  %v4133 = vpop.f32.mrb[0].mxu0
  %v4134 = vadd.f32 0.0, %v4133
  %v4135 = vpop.f32.mrb[0].mxu0
  %v4136 = vadd.f32 0.0, %v4135
  %4137 = vdwg.mxu0
  %v4138 = vadd.f32 %v3987, %v4063
  %v4139 = vadd.f32 %v3988, %v4065
  %v4140 = vadd.f32 %v3989, %v4134
  %v4141 = vadd.f32 %v3990, %v4136
  %s4142 = scalar_lea.vmem %s8, 40
  %v4143 = vld [vmem:[%s4142] sm:$0xff]
  %v4145 = vsel %vm3296, %v4143, 0
  %4147 = vmatprep.subr.mxu0 %v3292
  %4148 = vmatpush1.msra.mxu0 %v3291
  %4149 = vmatprep.subr.mxu0 0.0
  %4150 = vmatpush1.msra.mxu0 0.0
  %4151 = vmatprep.subr.mxu0 0.0
  %4152 = vmatpush1.msra.mxu0 0.0
  %4153 = vmatprep.subr.mxu0 0.0
  %4154 = vmatpush1.msra.mxu0 0.0
  %4155 = vmatprep.subr.mxu0 0.0
  %4156 = vmatpush1.msra.mxu0 0.0
  %4157 = vmatprep.subr.mxu0 0.0
  %4158 = vmatpush1.msra.mxu0 0.0
  %4159 = vmatprep.subr.mxu0 0.0
  %4160 = vmatpush1.msra.mxu0 0.0
  %4161 = vmatprep.subr.mxu0 0.0
  %4162 = vmatpush1.msra.mxu0 0.0
  %4163 = vmatprep.subr.mxu0 0.0
  %4164 = vmatpush1.msra.mxu0 0.0
  %4165 = vmatprep.subr.mxu0 0.0
  %4166 = vmatpush1.msra.mxu0 0.0
  %4167 = vmatprep.subr.mxu0 0.0
  %4168 = vmatpush1.msra.mxu0 0.0
  %4169 = vmatprep.subr.mxu0 0.0
  %4170 = vmatpush1.msra.mxu0 0.0
  %4171 = vmatprep.subr.mxu0 0.0
  %4172 = vmatpush1.msra.mxu0 0.0
  %4173 = vmatprep.subr.mxu0 0.0
  %4174 = vmatpush1.msra.mxu0 0.0
  %4175 = vmatprep.subr.mxu0 0.0
  %4176 = vmatpush1.msra.mxu0 0.0
  %4177 = vmatprep.subr.mxu0 0.0
  %4178 = vmatpush1.msra.mxu0 0.0
  %4179 = vmatprep.subr.mxu0 0.0
  %4180 = vmatpush1.msra.mxu0 0.0
  %4181 = vmatprep.subr.mxu0 0.0
  %4182 = vmatpush1.msra.mxu0 0.0
  %4183 = vmatprep.subr.mxu0 0.0
  %4184 = vmatpush1.msra.mxu0 0.0
  %4185 = vmatprep.subr.mxu0 0.0
  %4186 = vmatpush1.msra.mxu0 0.0
  %4187 = vmatprep.subr.mxu0 0.0
  %4188 = vmatpush1.msra.mxu0 0.0
  %4189 = vmatprep.subr.mxu0 0.0
  %4190 = vmatpush1.msra.mxu0 0.0
  %4191 = vmatprep.subr.mxu0 0.0
  %4192 = vmatpush1.msra.mxu0 0.0
  %4193 = vmatprep.subr.mxu0 0.0
  %4194 = vmatpush1.msra.mxu0 0.0
  %4195 = vmatprep.subr.mxu0 0.0
  %4196 = vmatpush1.msra.mxu0 0.0
  %4197 = vmatprep.subr.mxu0 0.0
  %4198 = vmatpush1.msra.mxu0 0.0
  %4199 = vmatprep.subr.mxu0 0.0
  %4200 = vmatpush1.msra.mxu0 0.0
  %4201 = vmatprep.subr.mxu0 0.0
  %4202 = vmatpush1.msra.mxu0 0.0
  %4203 = vmatprep.subr.mxu0 0.0
  %4204 = vmatpush1.msra.mxu0 0.0
  %4205 = vmatprep.subr.mxu0 0.0
  %4206 = vmatpush1.msra.mxu0 0.0
  %4207 = vmatprep.subr.mxu0 0.0
  %4208 = vmatpush1.msra.mxu0 0.0
  %4209 = vmatprep.subr.mxu0 0.0
  %4210 = vmatpush1.msra.mxu0 0.0
  %4211 = vmatprep.mubr.f32.mxu0 0.0
  %4212 = vmatmul.mubr.f32.gmra.mrb[0].mxu0 %v4145
  %v4213 = vpop.f32.mrb[0].mxu0
  %v4214 = vadd.f32 0.0, %v4213
  %v4215 = vpop.f32.mrb[0].mxu0
  %v4216 = vadd.f32 0.0, %v4215
  %4217 = vdwg.mxu0
  %4218 = vmatprep.subr.mxu0 %v3294
  %4219 = vmatpush1.msra.mxu0 %v3293
  %4220 = vmatprep.subr.mxu0 0.0
  %4221 = vmatpush1.msra.mxu0 0.0
  %4222 = vmatprep.subr.mxu0 0.0
  %4223 = vmatpush1.msra.mxu0 0.0
  %4224 = vmatprep.subr.mxu0 0.0
  %4225 = vmatpush1.msra.mxu0 0.0
  %4226 = vmatprep.subr.mxu0 0.0
  %4227 = vmatpush1.msra.mxu0 0.0
  %4228 = vmatprep.subr.mxu0 0.0
  %4229 = vmatpush1.msra.mxu0 0.0
  %4230 = vmatprep.subr.mxu0 0.0
  %4231 = vmatpush1.msra.mxu0 0.0
  %4232 = vmatprep.subr.mxu0 0.0
  %4233 = vmatpush1.msra.mxu0 0.0
  %4234 = vmatprep.subr.mxu0 0.0
  %4235 = vmatpush1.msra.mxu0 0.0
  %4236 = vmatprep.subr.mxu0 0.0
  %4237 = vmatpush1.msra.mxu0 0.0
  %4238 = vmatprep.subr.mxu0 0.0
  %4239 = vmatpush1.msra.mxu0 0.0
  %4240 = vmatprep.subr.mxu0 0.0
  %4241 = vmatpush1.msra.mxu0 0.0
  %4242 = vmatprep.subr.mxu0 0.0
  %4243 = vmatpush1.msra.mxu0 0.0
  %4244 = vmatprep.subr.mxu0 0.0
  %4245 = vmatpush1.msra.mxu0 0.0
  %4246 = vmatprep.subr.mxu0 0.0
  %4247 = vmatpush1.msra.mxu0 0.0
  %4248 = vmatprep.subr.mxu0 0.0
  %4249 = vmatpush1.msra.mxu0 0.0
  %4250 = vmatprep.subr.mxu0 0.0
  %4251 = vmatpush1.msra.mxu0 0.0
  %4252 = vmatprep.subr.mxu0 0.0
  %4253 = vmatpush1.msra.mxu0 0.0
  %4254 = vmatprep.subr.mxu0 0.0
  %4255 = vmatpush1.msra.mxu0 0.0
  %4256 = vmatprep.subr.mxu0 0.0
  %4257 = vmatpush1.msra.mxu0 0.0
  %4258 = vmatprep.subr.mxu0 0.0
  %4259 = vmatpush1.msra.mxu0 0.0
  %4260 = vmatprep.subr.mxu0 0.0
  %4261 = vmatpush1.msra.mxu0 0.0
  %4262 = vmatprep.subr.mxu0 0.0
  %4263 = vmatpush1.msra.mxu0 0.0
  %4264 = vmatprep.subr.mxu0 0.0
  %4265 = vmatpush1.msra.mxu0 0.0
  %4266 = vmatprep.subr.mxu0 0.0
  %4267 = vmatpush1.msra.mxu0 0.0
  %4268 = vmatprep.subr.mxu0 0.0
  %4269 = vmatpush1.msra.mxu0 0.0
  %4270 = vmatprep.subr.mxu0 0.0
  %4271 = vmatpush1.msra.mxu0 0.0
  %4272 = vmatprep.subr.mxu0 0.0
  %4273 = vmatpush1.msra.mxu0 0.0
  %4274 = vmatprep.subr.mxu0 0.0
  %4275 = vmatpush1.msra.mxu0 0.0
  %4276 = vmatprep.subr.mxu0 0.0
  %4277 = vmatpush1.msra.mxu0 0.0
  %4278 = vmatprep.subr.mxu0 0.0
  %4279 = vmatpush1.msra.mxu0 0.0
  %4280 = vmatprep.subr.mxu0 0.0
  %4281 = vmatpush1.msra.mxu0 0.0
  %4282 = vmatprep.mubr.f32.mxu0 0.0
  %4283 = vmatmul.mubr.f32.gmra.mrb[0].mxu0 %v4145
  %v4284 = vpop.f32.mrb[0].mxu0
  %v4285 = vadd.f32 0.0, %v4284
  %v4286 = vpop.f32.mrb[0].mxu0
  %v4287 = vadd.f32 0.0, %v4286
  %4288 = vdwg.mxu0
  %4293 = vrot.lane.b32.xlu0 %v4214, 127
  %v4294 = vpop.permute.xlu0 %4293
  %4295 = vrot.lane.b32.xlu0 %v4216, 127
  %v4296 = vpop.permute.xlu0 %4295
  %4297 = vrot.lane.b32.xlu0 %v4285, 127
  %v4298 = vpop.permute.xlu0 %4297
  %4299 = vrot.lane.b32.xlu0 %v4287, 127
  %v4300 = vpop.permute.xlu0 %4299
  %v4301 = vsel %vm2197, %v4294, %v4296
  %v4302 = vsel %vm2197, %v4296, %v4298
  %v4303 = vsel %vm2197, %v4298, %v4300
  %v4308 = vsel %vm2197, %v4300, 0.0
  %v4309 = vmul.f32 %v4301, %v2209
  %v4310 = vmul.f32 %v4302, %v2213
  %v4311 = vmul.f32 %v4303, %v2217
  %v4312 = vmul.f32 %v4308, %v2221
  %v4313 = vadd.f32 %v4138, %v4309
  %v4314 = vadd.f32 %v4139, %v4310
  %v4315 = vadd.f32 %v4140, %v4311
  %v4316 = vadd.f32 %v4141, %v4312
  %s4317 = scalar_lea.vmem %s8, 48
  %v4318 = vld [vmem:[%s4317] sm:$0xff]
  %v4320 = vsel %vm3296, %v4318, 0
  %4322 = vmatprep.subr.mxu0 %v3292
  %4323 = vmatpush1.msra.mxu0 %v3291
  %4324 = vmatprep.subr.mxu0 0.0
  %4325 = vmatpush1.msra.mxu0 0.0
  %4326 = vmatprep.subr.mxu0 0.0
  %4327 = vmatpush1.msra.mxu0 0.0
  %4328 = vmatprep.subr.mxu0 0.0
  %4329 = vmatpush1.msra.mxu0 0.0
  %4330 = vmatprep.subr.mxu0 0.0
  %4331 = vmatpush1.msra.mxu0 0.0
  %4332 = vmatprep.subr.mxu0 0.0
  %4333 = vmatpush1.msra.mxu0 0.0
  %4334 = vmatprep.subr.mxu0 0.0
  %4335 = vmatpush1.msra.mxu0 0.0
  %4336 = vmatprep.subr.mxu0 0.0
  %4337 = vmatpush1.msra.mxu0 0.0
  %4338 = vmatprep.subr.mxu0 0.0
  %4339 = vmatpush1.msra.mxu0 0.0
  %4340 = vmatprep.subr.mxu0 0.0
  %4341 = vmatpush1.msra.mxu0 0.0
  %4342 = vmatprep.subr.mxu0 0.0
  %4343 = vmatpush1.msra.mxu0 0.0
  %4344 = vmatprep.subr.mxu0 0.0
  %4345 = vmatpush1.msra.mxu0 0.0
  %4346 = vmatprep.subr.mxu0 0.0
  %4347 = vmatpush1.msra.mxu0 0.0
  %4348 = vmatprep.subr.mxu0 0.0
  %4349 = vmatpush1.msra.mxu0 0.0
  %4350 = vmatprep.subr.mxu0 0.0
  %4351 = vmatpush1.msra.mxu0 0.0
  %4352 = vmatprep.subr.mxu0 0.0
  %4353 = vmatpush1.msra.mxu0 0.0
  %4354 = vmatprep.subr.mxu0 0.0
  %4355 = vmatpush1.msra.mxu0 0.0
  %4356 = vmatprep.subr.mxu0 0.0
  %4357 = vmatpush1.msra.mxu0 0.0
  %4358 = vmatprep.subr.mxu0 0.0
  %4359 = vmatpush1.msra.mxu0 0.0
  %4360 = vmatprep.subr.mxu0 0.0
  %4361 = vmatpush1.msra.mxu0 0.0
  %4362 = vmatprep.subr.mxu0 0.0
  %4363 = vmatpush1.msra.mxu0 0.0
  %4364 = vmatprep.subr.mxu0 0.0
  %4365 = vmatpush1.msra.mxu0 0.0
  %4366 = vmatprep.subr.mxu0 0.0
  %4367 = vmatpush1.msra.mxu0 0.0
  %4368 = vmatprep.subr.mxu0 0.0
  %4369 = vmatpush1.msra.mxu0 0.0
  %4370 = vmatprep.subr.mxu0 0.0
  %4371 = vmatpush1.msra.mxu0 0.0
  %4372 = vmatprep.subr.mxu0 0.0
  %4373 = vmatpush1.msra.mxu0 0.0
  %4374 = vmatprep.subr.mxu0 0.0
  %4375 = vmatpush1.msra.mxu0 0.0
  %4376 = vmatprep.subr.mxu0 0.0
  %4377 = vmatpush1.msra.mxu0 0.0
  %4378 = vmatprep.subr.mxu0 0.0
  %4379 = vmatpush1.msra.mxu0 0.0
  %4380 = vmatprep.subr.mxu0 0.0
  %4381 = vmatpush1.msra.mxu0 0.0
  %4382 = vmatprep.subr.mxu0 0.0
  %4383 = vmatpush1.msra.mxu0 0.0
  %4384 = vmatprep.subr.mxu0 0.0
  %4385 = vmatpush1.msra.mxu0 0.0
  %4386 = vmatprep.mubr.f32.mxu0 0.0
  %4387 = vmatmul.mubr.f32.gmra.mrb[0].mxu0 %v4320
  %v4388 = vpop.f32.mrb[0].mxu0
  %v4389 = vadd.f32 0.0, %v4388
  %v4390 = vpop.f32.mrb[0].mxu0
  %v4391 = vadd.f32 0.0, %v4390
  %4392 = vdwg.mxu0
  %4393 = vmatprep.subr.mxu0 %v3294
  %4394 = vmatpush1.msra.mxu0 %v3293
  %4395 = vmatprep.subr.mxu0 0.0
  %4396 = vmatpush1.msra.mxu0 0.0
  %4397 = vmatprep.subr.mxu0 0.0
  %4398 = vmatpush1.msra.mxu0 0.0
  %4399 = vmatprep.subr.mxu0 0.0
  %4400 = vmatpush1.msra.mxu0 0.0
  %4401 = vmatprep.subr.mxu0 0.0
  %4402 = vmatpush1.msra.mxu0 0.0
  %4403 = vmatprep.subr.mxu0 0.0
  %4404 = vmatpush1.msra.mxu0 0.0
  %4405 = vmatprep.subr.mxu0 0.0
  %4406 = vmatpush1.msra.mxu0 0.0
  %4407 = vmatprep.subr.mxu0 0.0
  %4408 = vmatpush1.msra.mxu0 0.0
  %4409 = vmatprep.subr.mxu0 0.0
  %4410 = vmatpush1.msra.mxu0 0.0
  %4411 = vmatprep.subr.mxu0 0.0
  %4412 = vmatpush1.msra.mxu0 0.0
  %4413 = vmatprep.subr.mxu0 0.0
  %4414 = vmatpush1.msra.mxu0 0.0
  %4415 = vmatprep.subr.mxu0 0.0
  %4416 = vmatpush1.msra.mxu0 0.0
  %4417 = vmatprep.subr.mxu0 0.0
  %4418 = vmatpush1.msra.mxu0 0.0
  %4419 = vmatprep.subr.mxu0 0.0
  %4420 = vmatpush1.msra.mxu0 0.0
  %4421 = vmatprep.subr.mxu0 0.0
  %4422 = vmatpush1.msra.mxu0 0.0
  %4423 = vmatprep.subr.mxu0 0.0
  %4424 = vmatpush1.msra.mxu0 0.0
  %4425 = vmatprep.subr.mxu0 0.0
  %4426 = vmatpush1.msra.mxu0 0.0
  %4427 = vmatprep.subr.mxu0 0.0
  %4428 = vmatpush1.msra.mxu0 0.0
  %4429 = vmatprep.subr.mxu0 0.0
  %4430 = vmatpush1.msra.mxu0 0.0
  %4431 = vmatprep.subr.mxu0 0.0
  %4432 = vmatpush1.msra.mxu0 0.0
  %4433 = vmatprep.subr.mxu0 0.0
  %4434 = vmatpush1.msra.mxu0 0.0
  %4435 = vmatprep.subr.mxu0 0.0
  %4436 = vmatpush1.msra.mxu0 0.0
  %4437 = vmatprep.subr.mxu0 0.0
  %4438 = vmatpush1.msra.mxu0 0.0
  %4439 = vmatprep.subr.mxu0 0.0
  %4440 = vmatpush1.msra.mxu0 0.0
  %4441 = vmatprep.subr.mxu0 0.0
  %4442 = vmatpush1.msra.mxu0 0.0
  %4443 = vmatprep.subr.mxu0 0.0
  %4444 = vmatpush1.msra.mxu0 0.0
  %4445 = vmatprep.subr.mxu0 0.0
  %4446 = vmatpush1.msra.mxu0 0.0
  %4447 = vmatprep.subr.mxu0 0.0
  %4448 = vmatpush1.msra.mxu0 0.0
  %4449 = vmatprep.subr.mxu0 0.0
  %4450 = vmatpush1.msra.mxu0 0.0
  %4451 = vmatprep.subr.mxu0 0.0
  %4452 = vmatpush1.msra.mxu0 0.0
  %4453 = vmatprep.subr.mxu0 0.0
  %4454 = vmatpush1.msra.mxu0 0.0
  %4455 = vmatprep.subr.mxu0 0.0
  %4456 = vmatpush1.msra.mxu0 0.0
  %4457 = vmatprep.mubr.f32.mxu0 0.0
  %4458 = vmatmul.mubr.f32.gmra.mrb[0].mxu0 %v4320
  %v4459 = vpop.f32.mrb[0].mxu0
  %v4460 = vadd.f32 0.0, %v4459
  %v4461 = vpop.f32.mrb[0].mxu0
  %v4462 = vadd.f32 0.0, %v4461
  %4463 = vdwg.mxu0
  %4468 = vrot.lane.b32.xlu0 %v4389, 113
  %v4469 = vpop.permute.xlu0 %4468
  %4470 = vrot.lane.b32.xlu0 %v4391, 113
  %v4471 = vpop.permute.xlu0 %4470
  %4472 = vrot.lane.b32.xlu0 %v4460, 113
  %v4473 = vpop.permute.xlu0 %4472
  %4474 = vrot.lane.b32.xlu0 %v4462, 113
  %v4475 = vpop.permute.xlu0 %4474
  %v4476 = vsel %vm2536, %v4469, %v4471
  %v4477 = vsel %vm2536, %v4471, %v4473
  %v4478 = vsel %vm2536, %v4473, %v4475
  %v4483 = vsel %vm2536, %v4475, 0.0
  %v4484 = vmul.f32 %v4476, %v2548
  %v4485 = vmul.f32 %v4477, %v2552
  %v4486 = vmul.f32 %v4478, %v2556
  %v4487 = vmul.f32 %v4483, %v2560
  %v4488 = vadd.f32 %v4313, %v4484
  %v4489 = vadd.f32 %v4314, %v4485
  %v4490 = vadd.f32 %v4315, %v4486
  %v4491 = vadd.f32 %v4316, %v4487
  %s4492 = scalar_lea.vmem %s8, 56
  %v4493 = vld [vmem:[%s4492] sm:$0xff]
  %v4495 = vsel %vm3296, %v4493, 0
  %4497 = vmatprep.subr.mxu0 %v3292
  %4498 = vmatpush1.msra.mxu0 %v3291
  %4499 = vmatprep.subr.mxu0 0.0
  %4500 = vmatpush1.msra.mxu0 0.0
  %4501 = vmatprep.subr.mxu0 0.0
  %4502 = vmatpush1.msra.mxu0 0.0
  %4503 = vmatprep.subr.mxu0 0.0
  %4504 = vmatpush1.msra.mxu0 0.0
  %4505 = vmatprep.subr.mxu0 0.0
  %4506 = vmatpush1.msra.mxu0 0.0
  %4507 = vmatprep.subr.mxu0 0.0
  %4508 = vmatpush1.msra.mxu0 0.0
  %4509 = vmatprep.subr.mxu0 0.0
  %4510 = vmatpush1.msra.mxu0 0.0
  %4511 = vmatprep.subr.mxu0 0.0
  %4512 = vmatpush1.msra.mxu0 0.0
  %4513 = vmatprep.subr.mxu0 0.0
  %4514 = vmatpush1.msra.mxu0 0.0
  %4515 = vmatprep.subr.mxu0 0.0
  %4516 = vmatpush1.msra.mxu0 0.0
  %4517 = vmatprep.subr.mxu0 0.0
  %4518 = vmatpush1.msra.mxu0 0.0
  %4519 = vmatprep.subr.mxu0 0.0
  %4520 = vmatpush1.msra.mxu0 0.0
  %4521 = vmatprep.subr.mxu0 0.0
  %4522 = vmatpush1.msra.mxu0 0.0
  %4523 = vmatprep.subr.mxu0 0.0
  %4524 = vmatpush1.msra.mxu0 0.0
  %4525 = vmatprep.subr.mxu0 0.0
  %4526 = vmatpush1.msra.mxu0 0.0
  %4527 = vmatprep.subr.mxu0 0.0
  %4528 = vmatpush1.msra.mxu0 0.0
  %4529 = vmatprep.subr.mxu0 0.0
  %4530 = vmatpush1.msra.mxu0 0.0
  %4531 = vmatprep.subr.mxu0 0.0
  %4532 = vmatpush1.msra.mxu0 0.0
  %4533 = vmatprep.subr.mxu0 0.0
  %4534 = vmatpush1.msra.mxu0 0.0
  %4535 = vmatprep.subr.mxu0 0.0
  %4536 = vmatpush1.msra.mxu0 0.0
  %4537 = vmatprep.subr.mxu0 0.0
  %4538 = vmatpush1.msra.mxu0 0.0
  %4539 = vmatprep.subr.mxu0 0.0
  %4540 = vmatpush1.msra.mxu0 0.0
  %4541 = vmatprep.subr.mxu0 0.0
  %4542 = vmatpush1.msra.mxu0 0.0
  %4543 = vmatprep.subr.mxu0 0.0
  %4544 = vmatpush1.msra.mxu0 0.0
  %4545 = vmatprep.subr.mxu0 0.0
  %4546 = vmatpush1.msra.mxu0 0.0
  %4547 = vmatprep.subr.mxu0 0.0
  %4548 = vmatpush1.msra.mxu0 0.0
  %4549 = vmatprep.subr.mxu0 0.0
  %4550 = vmatpush1.msra.mxu0 0.0
  %4551 = vmatprep.subr.mxu0 0.0
  %4552 = vmatpush1.msra.mxu0 0.0
  %4553 = vmatprep.subr.mxu0 0.0
  %4554 = vmatpush1.msra.mxu0 0.0
  %4555 = vmatprep.subr.mxu0 0.0
  %4556 = vmatpush1.msra.mxu0 0.0
  %4557 = vmatprep.subr.mxu0 0.0
  %4558 = vmatpush1.msra.mxu0 0.0
  %4559 = vmatprep.subr.mxu0 0.0
  %4560 = vmatpush1.msra.mxu0 0.0
  %4561 = vmatprep.mubr.f32.mxu0 0.0
  %4562 = vmatmul.mubr.f32.gmra.mrb[0].mxu0 %v4495
  %v4563 = vpop.f32.mrb[0].mxu0
  %v4564 = vadd.f32 0.0, %v4563
  %v4565 = vpop.f32.mrb[0].mxu0
  %v4566 = vadd.f32 0.0, %v4565
  %4567 = vdwg.mxu0
  %4568 = vmatprep.subr.mxu0 %v3294
  %4569 = vmatpush1.msra.mxu0 %v3293
  %4570 = vmatprep.subr.mxu0 0.0
  %4571 = vmatpush1.msra.mxu0 0.0
  %4572 = vmatprep.subr.mxu0 0.0
  %4573 = vmatpush1.msra.mxu0 0.0
  %4574 = vmatprep.subr.mxu0 0.0
  %4575 = vmatpush1.msra.mxu0 0.0
  %4576 = vmatprep.subr.mxu0 0.0
  %4577 = vmatpush1.msra.mxu0 0.0
  %4578 = vmatprep.subr.mxu0 0.0
  %4579 = vmatpush1.msra.mxu0 0.0
  %4580 = vmatprep.subr.mxu0 0.0
  %4581 = vmatpush1.msra.mxu0 0.0
  %4582 = vmatprep.subr.mxu0 0.0
  %4583 = vmatpush1.msra.mxu0 0.0
  %4584 = vmatprep.subr.mxu0 0.0
  %4585 = vmatpush1.msra.mxu0 0.0
  %4586 = vmatprep.subr.mxu0 0.0
  %4587 = vmatpush1.msra.mxu0 0.0
  %4588 = vmatprep.subr.mxu0 0.0
  %4589 = vmatpush1.msra.mxu0 0.0
  %4590 = vmatprep.subr.mxu0 0.0
  %4591 = vmatpush1.msra.mxu0 0.0
  %4592 = vmatprep.subr.mxu0 0.0
  %4593 = vmatpush1.msra.mxu0 0.0
  %4594 = vmatprep.subr.mxu0 0.0
  %4595 = vmatpush1.msra.mxu0 0.0
  %4596 = vmatprep.subr.mxu0 0.0
  %4597 = vmatpush1.msra.mxu0 0.0
  %4598 = vmatprep.subr.mxu0 0.0
  %4599 = vmatpush1.msra.mxu0 0.0
  %4600 = vmatprep.subr.mxu0 0.0
  %4601 = vmatpush1.msra.mxu0 0.0
  %4602 = vmatprep.subr.mxu0 0.0
  %4603 = vmatpush1.msra.mxu0 0.0
  %4604 = vmatprep.subr.mxu0 0.0
  %4605 = vmatpush1.msra.mxu0 0.0
  %4606 = vmatprep.subr.mxu0 0.0
  %4607 = vmatpush1.msra.mxu0 0.0
  %4608 = vmatprep.subr.mxu0 0.0
  %4609 = vmatpush1.msra.mxu0 0.0
  %4610 = vmatprep.subr.mxu0 0.0
  %4611 = vmatpush1.msra.mxu0 0.0
  %4612 = vmatprep.subr.mxu0 0.0
  %4613 = vmatpush1.msra.mxu0 0.0
  %4614 = vmatprep.subr.mxu0 0.0
  %4615 = vmatpush1.msra.mxu0 0.0
  %4616 = vmatprep.subr.mxu0 0.0
  %4617 = vmatpush1.msra.mxu0 0.0
  %4618 = vmatprep.subr.mxu0 0.0
  %4619 = vmatpush1.msra.mxu0 0.0
  %4620 = vmatprep.subr.mxu0 0.0
  %4621 = vmatpush1.msra.mxu0 0.0
  %4622 = vmatprep.subr.mxu0 0.0
  %4623 = vmatpush1.msra.mxu0 0.0
  %4624 = vmatprep.subr.mxu0 0.0
  %4625 = vmatpush1.msra.mxu0 0.0
  %4626 = vmatprep.subr.mxu0 0.0
  %4627 = vmatpush1.msra.mxu0 0.0
  %4628 = vmatprep.subr.mxu0 0.0
  %4629 = vmatpush1.msra.mxu0 0.0
  %4630 = vmatprep.subr.mxu0 0.0
  %4631 = vmatpush1.msra.mxu0 0.0
  %4632 = vmatprep.mubr.f32.mxu0 0.0
  %4633 = vmatmul.mubr.f32.gmra.mrb[0].mxu0 %v4495
  %v4634 = vpop.f32.mrb[0].mxu0
  %v4635 = vadd.f32 0.0, %v4634
  %v4636 = vpop.f32.mrb[0].mxu0
  %v4637 = vadd.f32 0.0, %v4636
  %4638 = vdwg.mxu0
  %4643 = vrot.lane.b32.xlu0 %v4564, 112
  %v4644 = vpop.permute.xlu0 %4643
  %4645 = vrot.lane.b32.xlu0 %v4566, 112
  %v4646 = vpop.permute.xlu0 %4645
  %4647 = vrot.lane.b32.xlu0 %v4635, 112
  %v4648 = vpop.permute.xlu0 %4647
  %4649 = vrot.lane.b32.xlu0 %v4637, 112
  %v4650 = vpop.permute.xlu0 %4649
  %v4651 = vsel %vm2875, %v4644, %v4646
  %v4652 = vsel %vm2875, %v4646, %v4648
  %v4653 = vsel %vm2875, %v4648, %v4650
  %v4658 = vsel %vm2875, %v4650, 0.0
  %v4659 = vmul.f32 %v4651, %v2887
  %v4660 = vmul.f32 %v4652, %v2891
  %v4661 = vmul.f32 %v4653, %v2895
  %v4662 = vmul.f32 %v4658, %v2899
  %v4663 = vadd.f32 %v4488, %v4659
  %v4664 = vadd.f32 %v4489, %v4660
  %v4665 = vadd.f32 %v4490, %v4661
  %v4666 = vadd.f32 %v4491, %v4662
  %s4667 = scalar_lea.vmem %s8, 64
  %v4668 = vld [vmem:[%s4667] sm:$0xff]
  %v4670 = vsel %vm3296, %v4668, 0
  %4672 = vmatprep.subr.mxu0 %v3292
  %4673 = vmatpush1.msra.mxu0 %v3291
  %4674 = vmatprep.subr.mxu0 0.0
  %4675 = vmatpush1.msra.mxu0 0.0
  %4676 = vmatprep.subr.mxu0 0.0
  %4677 = vmatpush1.msra.mxu0 0.0
  %4678 = vmatprep.subr.mxu0 0.0
  %4679 = vmatpush1.msra.mxu0 0.0
  %4680 = vmatprep.subr.mxu0 0.0
  %4681 = vmatpush1.msra.mxu0 0.0
  %4682 = vmatprep.subr.mxu0 0.0
  %4683 = vmatpush1.msra.mxu0 0.0
  %4684 = vmatprep.subr.mxu0 0.0
  %4685 = vmatpush1.msra.mxu0 0.0
  %4686 = vmatprep.subr.mxu0 0.0
  %4687 = vmatpush1.msra.mxu0 0.0
  %4688 = vmatprep.subr.mxu0 0.0
  %4689 = vmatpush1.msra.mxu0 0.0
  %4690 = vmatprep.subr.mxu0 0.0
  %4691 = vmatpush1.msra.mxu0 0.0
  %4692 = vmatprep.subr.mxu0 0.0
  %4693 = vmatpush1.msra.mxu0 0.0
  %4694 = vmatprep.subr.mxu0 0.0
  %4695 = vmatpush1.msra.mxu0 0.0
  %4696 = vmatprep.subr.mxu0 0.0
  %4697 = vmatpush1.msra.mxu0 0.0
  %4698 = vmatprep.subr.mxu0 0.0
  %4699 = vmatpush1.msra.mxu0 0.0
  %4700 = vmatprep.subr.mxu0 0.0
  %4701 = vmatpush1.msra.mxu0 0.0
  %4702 = vmatprep.subr.mxu0 0.0
  %4703 = vmatpush1.msra.mxu0 0.0
  %4704 = vmatprep.subr.mxu0 0.0
  %4705 = vmatpush1.msra.mxu0 0.0
  %4706 = vmatprep.subr.mxu0 0.0
  %4707 = vmatpush1.msra.mxu0 0.0
  %4708 = vmatprep.subr.mxu0 0.0
  %4709 = vmatpush1.msra.mxu0 0.0
  %4710 = vmatprep.subr.mxu0 0.0
  %4711 = vmatpush1.msra.mxu0 0.0
  %4712 = vmatprep.subr.mxu0 0.0
  %4713 = vmatpush1.msra.mxu0 0.0
  %4714 = vmatprep.subr.mxu0 0.0
  %4715 = vmatpush1.msra.mxu0 0.0
  %4716 = vmatprep.subr.mxu0 0.0
  %4717 = vmatpush1.msra.mxu0 0.0
  %4718 = vmatprep.subr.mxu0 0.0
  %4719 = vmatpush1.msra.mxu0 0.0
  %4720 = vmatprep.subr.mxu0 0.0
  %4721 = vmatpush1.msra.mxu0 0.0
  %4722 = vmatprep.subr.mxu0 0.0
  %4723 = vmatpush1.msra.mxu0 0.0
  %4724 = vmatprep.subr.mxu0 0.0
  %4725 = vmatpush1.msra.mxu0 0.0
  %4726 = vmatprep.subr.mxu0 0.0
  %4727 = vmatpush1.msra.mxu0 0.0
  %4728 = vmatprep.subr.mxu0 0.0
  %4729 = vmatpush1.msra.mxu0 0.0
  %4730 = vmatprep.subr.mxu0 0.0
  %4731 = vmatpush1.msra.mxu0 0.0
  %4732 = vmatprep.subr.mxu0 0.0
  %4733 = vmatpush1.msra.mxu0 0.0
  %4734 = vmatprep.subr.mxu0 0.0
  %4735 = vmatpush1.msra.mxu0 0.0
  %4736 = vmatprep.mubr.f32.mxu0 0.0
  %4737 = vmatmul.mubr.f32.gmra.mrb[0].mxu0 %v4670
  %v4738 = vpop.f32.mrb[0].mxu0
  %v4739 = vadd.f32 0.0, %v4738
  %v4740 = vpop.f32.mrb[0].mxu0
  %v4741 = vadd.f32 0.0, %v4740
  %4742 = vdwg.mxu0
  %4743 = vmatprep.subr.mxu0 %v3294
  %4744 = vmatpush1.msra.mxu0 %v3293
  %4745 = vmatprep.subr.mxu0 0.0
  %4746 = vmatpush1.msra.mxu0 0.0
  %4747 = vmatprep.subr.mxu0 0.0
  %4748 = vmatpush1.msra.mxu0 0.0
  %4749 = vmatprep.subr.mxu0 0.0
  %4750 = vmatpush1.msra.mxu0 0.0
  %4751 = vmatprep.subr.mxu0 0.0
  %4752 = vmatpush1.msra.mxu0 0.0
  %4753 = vmatprep.subr.mxu0 0.0
  %4754 = vmatpush1.msra.mxu0 0.0
  %4755 = vmatprep.subr.mxu0 0.0
  %4756 = vmatpush1.msra.mxu0 0.0
  %4757 = vmatprep.subr.mxu0 0.0
  %4758 = vmatpush1.msra.mxu0 0.0
  %4759 = vmatprep.subr.mxu0 0.0
  %4760 = vmatpush1.msra.mxu0 0.0
  %4761 = vmatprep.subr.mxu0 0.0
  %4762 = vmatpush1.msra.mxu0 0.0
  %4763 = vmatprep.subr.mxu0 0.0
  %4764 = vmatpush1.msra.mxu0 0.0
  %4765 = vmatprep.subr.mxu0 0.0
  %4766 = vmatpush1.msra.mxu0 0.0
  %4767 = vmatprep.subr.mxu0 0.0
  %4768 = vmatpush1.msra.mxu0 0.0
  %4769 = vmatprep.subr.mxu0 0.0
  %4770 = vmatpush1.msra.mxu0 0.0
  %4771 = vmatprep.subr.mxu0 0.0
  %4772 = vmatpush1.msra.mxu0 0.0
  %4773 = vmatprep.subr.mxu0 0.0
  %4774 = vmatpush1.msra.mxu0 0.0
  %4775 = vmatprep.subr.mxu0 0.0
  %4776 = vmatpush1.msra.mxu0 0.0
  %4777 = vmatprep.subr.mxu0 0.0
  %4778 = vmatpush1.msra.mxu0 0.0
  %4779 = vmatprep.subr.mxu0 0.0
  %4780 = vmatpush1.msra.mxu0 0.0
  %4781 = vmatprep.subr.mxu0 0.0
  %4782 = vmatpush1.msra.mxu0 0.0
  %4783 = vmatprep.subr.mxu0 0.0
  %4784 = vmatpush1.msra.mxu0 0.0
  %4785 = vmatprep.subr.mxu0 0.0
  %4786 = vmatpush1.msra.mxu0 0.0
  %4787 = vmatprep.subr.mxu0 0.0
  %4788 = vmatpush1.msra.mxu0 0.0
  %4789 = vmatprep.subr.mxu0 0.0
  %4790 = vmatpush1.msra.mxu0 0.0
  %4791 = vmatprep.subr.mxu0 0.0
  %4792 = vmatpush1.msra.mxu0 0.0
  %4793 = vmatprep.subr.mxu0 0.0
  %4794 = vmatpush1.msra.mxu0 0.0
  %4795 = vmatprep.subr.mxu0 0.0
  %4796 = vmatpush1.msra.mxu0 0.0
  %4797 = vmatprep.subr.mxu0 0.0
  %4798 = vmatpush1.msra.mxu0 0.0
  %4799 = vmatprep.subr.mxu0 0.0
  %4800 = vmatpush1.msra.mxu0 0.0
  %4801 = vmatprep.subr.mxu0 0.0
  %4802 = vmatpush1.msra.mxu0 0.0
  %4803 = vmatprep.subr.mxu0 0.0
  %4804 = vmatpush1.msra.mxu0 0.0
  %4805 = vmatprep.subr.mxu0 0.0
  %4806 = vmatpush1.msra.mxu0 0.0
  %4807 = vmatprep.mubr.f32.mxu0 0.0
  %4808 = vmatmul.mubr.f32.gmra.mrb[0].mxu0 %v4670
  %v4809 = vpop.f32.mrb[0].mxu0
  %v4810 = vadd.f32 0.0, %v4809
  %v4811 = vpop.f32.mrb[0].mxu0
  %v4812 = vadd.f32 0.0, %v4811
  %4813 = vdwg.mxu0
  %4818 = vrot.lane.b32.xlu0 %v4739, 111
  %v4819 = vpop.permute.xlu0 %4818
  %4820 = vrot.lane.b32.xlu0 %v4741, 111
  %v4821 = vpop.permute.xlu0 %4820
  %4822 = vrot.lane.b32.xlu0 %v4810, 111
  %v4823 = vpop.permute.xlu0 %4822
  %4824 = vrot.lane.b32.xlu0 %v4812, 111
  %v4825 = vpop.permute.xlu0 %4824
  %v4826 = vsel %vm3214, %v4819, %v4821
  %v4827 = vsel %vm3214, %v4821, %v4823
  %v4828 = vsel %vm3214, %v4823, %v4825
  %v4833 = vsel %vm3214, %v4825, 0.0
  %v4834 = vmul.f32 %v4826, %v3226
  %v4835 = vmul.f32 %v4827, %v3230
  %v4836 = vmul.f32 %v4828, %v3234
  %v4837 = vmul.f32 %v4833, %v3238
  %v4838 = vadd.f32 %v4663, %v4834
  %v4839 = vadd.f32 %v4664, %v4835
  %v4840 = vadd.f32 %v4665, %v4836
  %v4841 = vadd.f32 %v4666, %v4837
  %v4842 = vadd.f32 %v4838, %v4839
  %v4843 = vadd.f32 %v4842, %v4840
  %v4844 = vadd.f32 %v4843, %v4841
  %4845 = vadd.xlane.f32.xlu0 %v4844
  %v4846 = vpop.xlane.xlu0 %4845
  %v4847 = vmul.f32 %v4846, 0.001953125
  %v4848 = vmul.f32 %v4838, %v4838
  %v4849 = vmul.f32 %v4839, %v4839
  %v4850 = vmul.f32 %v4840, %v4840
  %v4851 = vmul.f32 %v4841, %v4841
  %v4852 = vadd.f32 %v4848, %v4849
  %v4853 = vadd.f32 %v4852, %v4850
  %v4854 = vadd.f32 %v4853, %v4851
  %4855 = vadd.xlane.f32.xlu0 %v4854
  %v4856 = vpop.xlane.xlu0 %4855
  %v4857 = vmul.f32 %v4856, 0.001953125
  %v4858 = vmul.f32 %v4847, %v4847
  %v4859 = vsub.f32 %v4857, %v4858
  %v4860 = vmax.f32 %v4859, 0.0
  %v4861 = vadd.f32 %v4860, 1e-05
  %v4862 = vrsqrt.pop %v4861
  %v4863 = vld [vmem:[%s9] sm:$0xff]
  %v4864 = vmul.f32 %v4862, %v4863
  %v4865 = vld [vmem:[%s10] sm:$0xff]
  %v4866 = vmul.f32 %v4847, %v4864
  %v4867 = vsub.f32 %v4865, %v4866
  %4869 = vset.pattern.permute.xlu0 0
  %4870 = vperm.xlu0 %4869, %v4864
  %v4871 = vpop.permute.xlu0 %4870
  %v4873 = vmul.f32 %v4838, %v4871
  %v4874 = vmul.f32 %v4839, %v4871
  %v4875 = vmul.f32 %v4840, %v4871
  %v4876 = vmul.f32 %v4841, %v4871
  %4878 = vset.pattern.permute.xlu0 0
  %4879 = vperm.xlu0 %4878, %v4867
  %v4880 = vpop.permute.xlu0 %4879
  %v4882 = vadd.f32 %v4873, %v4880
  %v4883 = vadd.f32 %v4874, %v4880
  %v4884 = vadd.f32 %v4875, %v4880
  %v4885 = vadd.f32 %v4876, %v4880
  %v4886 = vmax.f32 %v4882, 0.0
  %v4887 = vmax.f32 %v4883, 0.0
  %v4888 = vmax.f32 %v4884, 0.0
  %v4889 = vmax.f32 %v4885, 0.0
  %v4892 = vcombine.low %v4886, %v4887
  %4894 = vst [vmem:[%s11] sm:$0xff] %v4892
  %v4897 = vcombine.low %v4888, %v4889
  %s4899 = scalar_lea.vmem %s11, 8
  %4900 = vst [vmem:[%s4899] sm:$0xff] %v4897
  // Predicated region
  $region46: #{up_forward.1} parent=0 // pred_check
    _
  $region47: #{up_forward.1} parent=0 // pred_check_branch
    %4902 = sbr.rel (0) target = $region49
  $region48: #{up_forward.1} parent=0 // pred_region
    _
  $region49: #{up_forward.1} parent=0 // pred_fallthru
    _
  // Predicated region
  $region50: #{up_forward.1} parent=0 // pred_check
    _
  $region51: #{up_forward.1} parent=0 // pred_check_branch
    %4904 = sbr.rel (0) target = $region53
  $region52: #{up_forward.1} parent=0 // pred_region
    _
  $region53: #{up_forward.1} parent=0 // pred_fallthru
    _

</llo_original>
